<compile_context>
chip_gen: v7x
topology: tpu7x:2x2x1
jax: 0.10.0
libtpu: 0.0.40
codegen_flags: <defaults>
</compile_context>

<pallas_src>
import functools
import math

import jax
import jax.numpy as jnp
from jax.experimental import pallas as pl
from jax.experimental.pallas import tpu as pltpu


def _round_up(x, m):
    return ((x + m - 1) // m) * m


def _apply_act(x, act):
    if act == "relu":
        return jnp.maximum(x, 0.0)
    if act == "silu":
        return x * jax.nn.sigmoid(x)
    raise NotImplementedError(f"act_layer {act!r} not implemented")


# ------------------------------ fused kernel ------------------------------- #

def _resblock_kernel(x_ref, w1_ref, b1_ref, w2_ref, b2_ref, o_ref,
                     xp_ref, hp_ref, *, act):
    H, W, C = x_ref.shape
    Wpad = xp_ref.shape[1]
    n = H * Wpad

    # In-kernel SAME padding: zero the padded scratches, place the data at
    # rows 1..H and columns 0..W-1.  There is no explicit left pad column:
    # the roll-based tap combine wraps into a zero pad column of the previous
    # row, so every store below starts at column 0 (no sublane-offset stores).
    xp_ref[...] = jnp.zeros(xp_ref.shape, xp_ref.dtype)
    hp_ref[...] = jnp.zeros(hp_ref.shape, hp_ref.dtype)
    xp_ref[1:H + 1, 0:W, :] = x_ref[...].astype(xp_ref.dtype)

    def conv3x3(p_ref, w_full):
        # p_ref: (H+2, Wpad, C) zero-padded bf16 feature map.
        # w_full: (3C, 3C) bf16, row blocks = (dy, C_in), col blocks = (dx, C_out).
        # Three contiguous leading-axis row slices (cheap), one fat MXU matmul.
        slab = jnp.concatenate(
            [p_ref[dy:dy + H, :, :].reshape(n, C) for dy in range(3)], axis=-1)
        r = jnp.dot(slab, w_full, preferred_element_type=jnp.float32)  # (n, 3C)
        # out[p] = r0[p-1] + r1[p] + r2[p+1]; wrapped elements always hit a
        # zero pad column, so the rotations are exact.
        acc = pltpu.roll(r[:, 0:C], 1, axis=0)
        acc = acc + r[:, C:2 * C]
        acc = acc + pltpu.roll(r[:, 2 * C:3 * C], n - 1, axis=0)
        return acc  # (n, C) f32; valid outputs live at columns 0..W-1.

    # conv1 + bias + act  -> padded intermediate (stays in VMEM, bf16).
    a1 = conv3x3(xp_ref, w1_ref[...])
    a1 = _apply_act(a1 + b1_ref[...].astype(jnp.float32), act)
    hp_ref[1:H + 1, 0:W, :] = (
        a1.reshape(H, Wpad, C)[:, 0:W, :].astype(hp_ref.dtype))

    # conv2 + bias + residual + act -> output (residual read from resident x).
    a2 = conv3x3(hp_ref, w2_ref[...])
    a2 = a2.reshape(H, Wpad, C)[:, 0:W, :]
    y = a2 + b2_ref[...].astype(jnp.float32) + x_ref[...].astype(jnp.float32)
    o_ref[...] = _apply_act(y, act).astype(o_ref.dtype)


# ----------------------------- pallas_call wrapper ------------------------- #

def _resblock_fused(x, w1, b1, w2, b2, *, act):
    """x: (B, H, W, C) NHWC f32 -> act(x + conv2(act(conv1(x)+b1)) + b2)."""
    B, H, W, C = x.shape
    # >= 1 zero column on the right, multiple of 16 so bf16 reshapes are
    # layout-free (bf16 sublane tile is 16).
    Wpad = _round_up(W + 1, 16)
    flops = 2 * 2 * 9 * B * H * W * C * C
    trans = 2 * B * H * W * C if act == "silu" else 0
    bytes_accessed = (2 * B * H * W * C) * 4 + 2 * (9 * C * C) * 2 + 2 * C * 4
    return pl.pallas_call(
        functools.partial(_resblock_kernel, act=act),
        out_shape=jax.ShapeDtypeStruct((B, H, W, C), x.dtype),
        grid_spec=pltpu.PrefetchScalarGridSpec(
            num_scalar_prefetch=0,
            grid=(B,),
            in_specs=[
                pl.BlockSpec((None, H, W, C), lambda b: (b, 0, 0, 0)),
                pl.BlockSpec((3 * C, 3 * C), lambda b: (0, 0)),
                pl.BlockSpec((1, C), lambda b: (0, 0)),
                pl.BlockSpec((3 * C, 3 * C), lambda b: (0, 0)),
                pl.BlockSpec((1, C), lambda b: (0, 0)),
            ],
            out_specs=pl.BlockSpec((None, H, W, C), lambda b: (b, 0, 0, 0)),
            scratch_shapes=[
                pltpu.VMEM((H + 2, Wpad, C), jnp.bfloat16),   # padded input
                pltpu.VMEM((H + 2, Wpad, C), jnp.bfloat16),   # padded conv1 out
            ],
        ),
        compiler_params=pltpu.CompilerParams(
            dimension_semantics=("parallel",)),
        cost_estimate=pl.CostEstimate(
            flops=flops, transcendentals=trans, bytes_accessed=bytes_accessed),
    )(x, w1, b1, w2, b2)


# --------------------------------- module ---------------------------------- #

class ResBlock:
    """JAX/Pallas equivalent of the PyTorch ResBlock."""

    def __init__(self, num_features, key, *, norm_layer=None, act_layer="relu"):
        # TODO(synk): norm_layer (BatchNorm/GroupNorm/...) is not implemented;
        # this mirrors the PyTorch module instantiated with norm_layer=None.
        assert norm_layer is None, "norm_layer not supported in the Pallas port"
        self.num_features = num_features
        self.act = act_layer
        C = num_features
        bound = 1.0 / math.sqrt(9 * C)        # PyTorch Conv2d default init range
        k1, k2, k3, k4 = jax.random.split(key, 4)
        # HWIO weights stored in bf16 (MXU dtype); biases stay f32.
        self.w1_hwio = jax.random.uniform(k1, (3, 3, C, C), jnp.float32,
                                          -bound, bound).astype(jnp.bfloat16)
        self.w2_hwio = jax.random.uniform(k3, (3, 3, C, C), jnp.float32,
                                          -bound, bound).astype(jnp.bfloat16)
        self.b1 = jax.random.uniform(k2, (1, C), jnp.float32, -bound, bound)
        self.b2 = jax.random.uniform(k4, (1, C), jnp.float32, -bound, bound)
        # Packed kernel weights: (3C, 3C), rows = (dy, C_in), cols = (dx, C_out).
        self.w1 = jnp.transpose(self.w1_hwio, (0, 2, 1, 3)).reshape(3 * C, 3 * C)
        self.w2 = jnp.transpose(self.w2_hwio, (0, 2, 1, 3)).reshape(3 * C, 3 * C)

    def forward_nhwc(self, x):
        """Zero-glue path for NHWC models: x (B, H, W, C)."""
        return _resblock_fused(x, self.w1, self.b1, self.w2, self.b2, act=self.act)

    def __call__(self, x):
        # NCHW interface matching the PyTorch module; the two transposes are
        # pure glue — keep the surrounding model NHWC and call forward_nhwc
        # to avoid them.
        B, C, H, W = x.shape
        assert C == self.num_features
        x_nhwc = jnp.transpose(x, (0, 2, 3, 1))
        y = self.forward_nhwc(x_nhwc)
        return jnp.transpose(y, (0, 3, 1, 2))


# ---------------------------------- demo ----------------------------------- #

if __name__ == "__main__":
    key = jax.random.PRNGKey(0)
    k_params, k_x = jax.random.split(key)

    B, C, H, W = 2, 128, 16, 16   # C=128 keeps the channel (lane) axis dense
    block = ResBlock(C, key=k_params, norm_layer=None, act_layer="relu")
    x = jax.random.normal(k_x, (B, C, H, W), dtype=jnp.float32)

    y = jax.block_until_ready(block(x))

    # Pure-JAX f32 reference using the identical (bf16-rounded) weights.
    x_nhwc = jnp.transpose(x, (0, 2, 3, 1))
    dn = ("NHWC", "HWIO", "NHWC")
    w1 = block.w1_hwio.astype(jnp.float32)
    w2 = block.w2_hwio.astype(jnp.float32)
    h_ref = jax.lax.conv_general_dilated(x_nhwc, w1, (1, 1), "SAME",
                                         dimension_numbers=dn)
    h_ref = jax.nn.relu(h_ref + block.b1.reshape(1, 1, 1, C))
    h_ref = jax.lax.conv_general_dilated(h_ref, w2, (1, 1), "SAME",
                                         dimension_numbers=dn)
    h_ref = h_ref + block.b2.reshape(1, 1, 1, C)
    y_ref = jnp.transpose(jax.nn.relu(x_nhwc + h_ref), (0, 3, 1, 2))

    assert y.shape == x.shape, y.shape
    assert y.dtype == x.dtype
    max_err = float(jnp.max(jnp.abs(y - y_ref)))
    # bf16 matmul operands (activations + weights) with f32 accumulation.
    assert max_err < 3e-2, f"max abs error {max_err}"

    print("KERNEL_OK")
</pallas_src>

<mosaic_0001>
module attributes {stable_mosaic.version = 11 : i64} {
  func.func @_resblock_kernel(%arg0: i32, %arg1: memref<1x16x16x128xf32, #tpu.memory_space<vmem>>, %arg2: memref<384x384xbf16, #tpu.memory_space<vmem>>, %arg3: memref<1x128xf32, #tpu.memory_space<vmem>>, %arg4: memref<384x384xbf16, #tpu.memory_space<vmem>>, %arg5: memref<1x128xf32, #tpu.memory_space<vmem>>, %arg6: memref<1x16x16x128xf32, #tpu.memory_space<vmem>>, %arg7: memref<18x32x128xbf16, #tpu.memory_space<vmem>>, %arg8: memref<18x32x128xbf16, #tpu.memory_space<vmem>>) attributes {dimension_semantics = [#tpu.dimension_semantics<parallel>], iteration_bounds = array<i64: 2>, scalar_prefetch = 0 : i64, scratch_operands = 2 : i64, tpu.core_type = #tpu.core_type<tc>, window_params = [{transform_indices = @transform_0, window_bounds = array<i64: 1, 16, 16, 128>}, {pipeline_mode = #tpu.pipeline_mode<synchronous>, transform_indices = @transform_1, window_bounds = array<i64: 384, 384>}, {pipeline_mode = #tpu.pipeline_mode<synchronous>, transform_indices = @transform_2, window_bounds = array<i64: 1, 128>}, {pipeline_mode = #tpu.pipeline_mode<synchronous>, transform_indices = @transform_3, window_bounds = array<i64: 384, 384>}, {pipeline_mode = #tpu.pipeline_mode<synchronous>, transform_indices = @transform_4, window_bounds = array<i64: 1, 128>}, {transform_indices = @transform_5, window_bounds = array<i64: 1, 16, 16, 128>}]} {
    %cst = arith.constant 0.000000e+00 : bf16
    %0 = vector.broadcast %cst : bf16 to vector<18x32x128xbf16>
    %c0 = arith.constant 0 : index
    %c0_0 = arith.constant 0 : index
    %c0_1 = arith.constant 0 : index
    %1 = vector.load %arg7[%c0, %c0_0, %c0_1] : memref<18x32x128xbf16, #tpu.memory_space<vmem>>, vector<18x32x128xbf16>
    tpu.vector_store %arg7[%c0, %c0_0, %c0_1], %0 {strides = array<i32>} : memref<18x32x128xbf16, #tpu.memory_space<vmem>>, vector<18x32x128xbf16>,
    %cst_2 = arith.constant 0.000000e+00 : bf16
    %2 = vector.broadcast %cst_2 : bf16 to vector<18x32x128xbf16>
    %c0_3 = arith.constant 0 : index
    %c0_4 = arith.constant 0 : index
    %c0_5 = arith.constant 0 : index
    %3 = vector.load %arg8[%c0_3, %c0_4, %c0_5] : memref<18x32x128xbf16, #tpu.memory_space<vmem>>, vector<18x32x128xbf16>
    tpu.vector_store %arg8[%c0_3, %c0_4, %c0_5], %2 {strides = array<i32>} : memref<18x32x128xbf16, #tpu.memory_space<vmem>>, vector<18x32x128xbf16>,
    %c0_6 = arith.constant 0 : index
    %c0_7 = arith.constant 0 : index
    %c0_8 = arith.constant 0 : index
    %c0_9 = arith.constant 0 : index
    %4 = vector.load %arg1[%c0_6, %c0_7, %c0_8, %c0_9] : memref<1x16x16x128xf32, #tpu.memory_space<vmem>>, vector<1x16x16x128xf32>
    %5 = vector.shape_cast %4 : vector<1x16x16x128xf32> to vector<16x16x128xf32>
    %6 = arith.truncf %5 : vector<16x16x128xf32> to vector<16x16x128xbf16>
    %c1 = arith.constant 1 : index
    %c0_10 = arith.constant 0 : index
    %c0_11 = arith.constant 0 : index
    %7 = vector.load %arg7[%c1, %c0_10, %c0_11] : memref<18x32x128xbf16, #tpu.memory_space<vmem>>, vector<16x16x128xbf16>
    tpu.vector_store %arg7[%c1, %c0_10, %c0_11], %6 {strides = array<i32>} : memref<18x32x128xbf16, #tpu.memory_space<vmem>>, vector<16x16x128xbf16>,
    %c0_12 = arith.constant 0 : index
    %c0_13 = arith.constant 0 : index
    %8 = vector.load %arg2[%c0_12, %c0_13] : memref<384x384xbf16, #tpu.memory_space<vmem>>, vector<384x384xbf16>
    %c0_14 = arith.constant 0 : index
    %c0_15 = arith.constant 0 : index
    %c0_16 = arith.constant 0 : index
    %9 = vector.load %arg7[%c0_14, %c0_15, %c0_16] : memref<18x32x128xbf16, #tpu.memory_space<vmem>>, vector<16x32x128xbf16>
    %10 = vector.shape_cast %9 : vector<16x32x128xbf16> to vector<512x128xbf16>
    %c1_17 = arith.constant 1 : index
    %c0_18 = arith.constant 0 : index
    %c0_19 = arith.constant 0 : index
    %11 = vector.load %arg7[%c1_17, %c0_18, %c0_19] : memref<18x32x128xbf16, #tpu.memory_space<vmem>>, vector<16x32x128xbf16>
    %12 = vector.shape_cast %11 : vector<16x32x128xbf16> to vector<512x128xbf16>
    %c2 = arith.constant 2 : index
    %c0_20 = arith.constant 0 : index
    %c0_21 = arith.constant 0 : index
    %13 = vector.load %arg7[%c2, %c0_20, %c0_21] : memref<18x32x128xbf16, #tpu.memory_space<vmem>>, vector<16x32x128xbf16>
    %14 = vector.shape_cast %13 : vector<16x32x128xbf16> to vector<512x128xbf16>
    %15 = tpu.concatenate %10, %12, %14 in 1 : vector<512x128xbf16>, vector<512x128xbf16>, vector<512x128xbf16> -> vector<512x384xbf16>
    %cst_22 = arith.constant dense<0.000000e+00> : vector<512x384xf32>
    %16 = tpu.matmul %15, %8, %cst_22 {dimension_numbers = #tpu.dot_dimension_numbers<[1], [0], [0], [1], [0, 0, 1, 1], [], []>} : vector<512x384xbf16>, vector<384x384xbf16>, vector<512x384xf32> -> vector<512x384xf32>
    %17 = vector.extract_strided_slice %16 {offsets = [0, 0], sizes = [512, 128], strides = [1, 1]} : vector<512x384xf32> to vector<512x128xf32>
    %c1_i32 = arith.constant 1 : i32
    %18 = tpu.dynamic_rotate %17 by %c1_i32 dim 0 : vector<512x128xf32>, i32 -> vector<512x128xf32>
    %19 = vector.extract_strided_slice %16 {offsets = [0, 128], sizes = [512, 128], strides = [1, 1]} : vector<512x384xf32> to vector<512x128xf32>
    %20 = arith.addf %18, %19 : vector<512x128xf32>
    %21 = vector.extract_strided_slice %16 {offsets = [0, 256], sizes = [512, 128], strides = [1, 1]} : vector<512x384xf32> to vector<512x128xf32>
    %c511_i32 = arith.constant 511 : i32
    %22 = tpu.dynamic_rotate %21 by %c511_i32 dim 0 : vector<512x128xf32>, i32 -> vector<512x128xf32>
    %23 = arith.addf %20, %22 : vector<512x128xf32>
    %c0_23 = arith.constant 0 : index
    %c0_24 = arith.constant 0 : index
    %24 = vector.load %arg3[%c0_23, %c0_24] : memref<1x128xf32, #tpu.memory_space<vmem>>, vector<1x128xf32>
    %25 = vector.broadcast %24 : vector<1x128xf32> to vector<512x128xf32>
    %26 = arith.addf %23, %25 : vector<512x128xf32>
    %cst_25 = arith.constant 0.000000e+00 : f32
    %27 = vector.broadcast %cst_25 : f32 to vector<512x128xf32>
    %28 = arith.maximumf %26, %27 : vector<512x128xf32>
    %29 = vector.shape_cast %28 : vector<512x128xf32> to vector<16x32x128xf32>
    %30 = vector.extract_strided_slice %29 {offsets = [0, 0, 0], sizes = [16, 16, 128], strides = [1, 1, 1]} : vector<16x32x128xf32> to vector<16x16x128xf32>
    %31 = arith.truncf %30 : vector<16x16x128xf32> to vector<16x16x128xbf16>
    %c1_26 = arith.constant 1 : index
    %c0_27 = arith.constant 0 : index
    %c0_28 = arith.constant 0 : index
    %32 = vector.load %arg8[%c1_26, %c0_27, %c0_28] : memref<18x32x128xbf16, #tpu.memory_space<vmem>>, vector<16x16x128xbf16>
    tpu.vector_store %arg8[%c1_26, %c0_27, %c0_28], %31 {strides = array<i32>} : memref<18x32x128xbf16, #tpu.memory_space<vmem>>, vector<16x16x128xbf16>,
    %c0_29 = arith.constant 0 : index
    %c0_30 = arith.constant 0 : index
    %33 = vector.load %arg4[%c0_29, %c0_30] : memref<384x384xbf16, #tpu.memory_space<vmem>>, vector<384x384xbf16>
    %c0_31 = arith.constant 0 : index
    %c0_32 = arith.constant 0 : index
    %c0_33 = arith.constant 0 : index
    %34 = vector.load %arg8[%c0_31, %c0_32, %c0_33] : memref<18x32x128xbf16, #tpu.memory_space<vmem>>, vector<16x32x128xbf16>
    %35 = vector.shape_cast %34 : vector<16x32x128xbf16> to vector<512x128xbf16>
    %c1_34 = arith.constant 1 : index
    %c0_35 = arith.constant 0 : index
    %c0_36 = arith.constant 0 : index
    %36 = vector.load %arg8[%c1_34, %c0_35, %c0_36] : memref<18x32x128xbf16, #tpu.memory_space<vmem>>, vector<16x32x128xbf16>
    %37 = vector.shape_cast %36 : vector<16x32x128xbf16> to vector<512x128xbf16>
    %c2_37 = arith.constant 2 : index
    %c0_38 = arith.constant 0 : index
    %c0_39 = arith.constant 0 : index
    %38 = vector.load %arg8[%c2_37, %c0_38, %c0_39] : memref<18x32x128xbf16, #tpu.memory_space<vmem>>, vector<16x32x128xbf16>
    %39 = vector.shape_cast %38 : vector<16x32x128xbf16> to vector<512x128xbf16>
    %40 = tpu.concatenate %35, %37, %39 in 1 : vector<512x128xbf16>, vector<512x128xbf16>, vector<512x128xbf16> -> vector<512x384xbf16>
    %cst_40 = arith.constant dense<0.000000e+00> : vector<512x384xf32>
    %41 = tpu.matmul %40, %33, %cst_40 {dimension_numbers = #tpu.dot_dimension_numbers<[1], [0], [0], [1], [0, 0, 1, 1], [], []>} : vector<512x384xbf16>, vector<384x384xbf16>, vector<512x384xf32> -> vector<512x384xf32>
    %42 = vector.extract_strided_slice %41 {offsets = [0, 0], sizes = [512, 128], strides = [1, 1]} : vector<512x384xf32> to vector<512x128xf32>
    %c1_i32_41 = arith.constant 1 : i32
    %43 = tpu.dynamic_rotate %42 by %c1_i32_41 dim 0 : vector<512x128xf32>, i32 -> vector<512x128xf32>
    %44 = vector.extract_strided_slice %41 {offsets = [0, 128], sizes = [512, 128], strides = [1, 1]} : vector<512x384xf32> to vector<512x128xf32>
    %45 = arith.addf %43, %44 : vector<512x128xf32>
    %46 = vector.extract_strided_slice %41 {offsets = [0, 256], sizes = [512, 128], strides = [1, 1]} : vector<512x384xf32> to vector<512x128xf32>
    %c511_i32_42 = arith.constant 511 : i32
    %47 = tpu.dynamic_rotate %46 by %c511_i32_42 dim 0 : vector<512x128xf32>, i32 -> vector<512x128xf32>
    %48 = arith.addf %45, %47 : vector<512x128xf32>
    %49 = vector.shape_cast %48 : vector<512x128xf32> to vector<16x32x128xf32>
    %50 = vector.extract_strided_slice %49 {offsets = [0, 0, 0], sizes = [16, 16, 128], strides = [1, 1, 1]} : vector<16x32x128xf32> to vector<16x16x128xf32>
    %c0_43 = arith.constant 0 : index
    %c0_44 = arith.constant 0 : index
    %51 = vector.load %arg5[%c0_43, %c0_44] : memref<1x128xf32, #tpu.memory_space<vmem>>, vector<1x128xf32>
    %52 = vector.shape_cast %51 : vector<1x128xf32> to vector<1x1x128xf32>
    %53 = vector.broadcast %52 : vector<1x1x128xf32> to vector<16x16x128xf32>
    %54 = arith.addf %50, %53 : vector<16x16x128xf32>
    %c0_45 = arith.constant 0 : index
    %c0_46 = arith.constant 0 : index
    %c0_47 = arith.constant 0 : index
    %c0_48 = arith.constant 0 : index
    %55 = vector.load %arg1[%c0_45, %c0_46, %c0_47, %c0_48] : memref<1x16x16x128xf32, #tpu.memory_space<vmem>>, vector<1x16x16x128xf32>
    %56 = vector.shape_cast %55 : vector<1x16x16x128xf32> to vector<16x16x128xf32>
    %57 = arith.addf %54, %56 : vector<16x16x128xf32>
    %cst_49 = arith.constant 0.000000e+00 : f32
    %58 = vector.broadcast %cst_49 : f32 to vector<16x16x128xf32>
    %59 = arith.maximumf %57, %58 : vector<16x16x128xf32>
    %c0_50 = arith.constant 0 : index
    %c0_51 = arith.constant 0 : index
    %c0_52 = arith.constant 0 : index
    %c0_53 = arith.constant 0 : index
    %60 = vector.load %arg6[%c0_50, %c0_51, %c0_52, %c0_53] : memref<1x16x16x128xf32, #tpu.memory_space<vmem>>, vector<1x16x16x128xf32>
    %61 = vector.shape_cast %60 : vector<1x16x16x128xf32> to vector<16x16x128xf32>
    %62 = vector.shape_cast %59 : vector<16x16x128xf32> to vector<1x16x16x128xf32>
    tpu.vector_store %arg6[%c0_50, %c0_51, %c0_52, %c0_53], %62 {strides = array<i32>} : memref<1x16x16x128xf32, #tpu.memory_space<vmem>>, vector<1x16x16x128xf32>,
    return
  }
  func.func @transform_0(%arg0: i32) -> (i32, i32, i32, i32) {
    %c0_i32 = arith.constant 0 : i32
    %c0_i32_0 = arith.constant 0 : i32
    %c0_i32_1 = arith.constant 0 : i32
    %c0_i32_2 = arith.constant 0 : i32
    return %arg0, %c0_i32, %c0_i32_0, %c0_i32_1 : i32, i32, i32, i32
  }
  func.func @transform_1(%arg0: i32) -> (i32, i32) {
    %c0_i32 = arith.constant 0 : i32
    %c0_i32_0 = arith.constant 0 : i32
    %c0_i32_1 = arith.constant 0 : i32
    return %c0_i32, %c0_i32_0 : i32, i32
  }
  func.func @transform_2(%arg0: i32) -> (i32, i32) {
    %c0_i32 = arith.constant 0 : i32
    %c0_i32_0 = arith.constant 0 : i32
    %c0_i32_1 = arith.constant 0 : i32
    return %c0_i32, %c0_i32_0 : i32, i32
  }
  func.func @transform_3(%arg0: i32) -> (i32, i32) {
    %c0_i32 = arith.constant 0 : i32
    %c0_i32_0 = arith.constant 0 : i32
    %c0_i32_1 = arith.constant 0 : i32
    return %c0_i32, %c0_i32_0 : i32, i32
  }
  func.func @transform_4(%arg0: i32) -> (i32, i32) {
    %c0_i32 = arith.constant 0 : i32
    %c0_i32_0 = arith.constant 0 : i32
    %c0_i32_1 = arith.constant 0 : i32
    return %c0_i32, %c0_i32_0 : i32, i32
  }
  func.func @transform_5(%arg0: i32) -> (i32, i32, i32, i32) {
    %c0_i32 = arith.constant 0 : i32
    %c0_i32_0 = arith.constant 0 : i32
    %c0_i32_1 = arith.constant 0 : i32
    %c0_i32_2 = arith.constant 0 : i32
    return %arg0, %c0_i32, %c0_i32_0, %c0_i32_1 : i32, i32, i32, i32
  }
}

</mosaic_0001>

<llo_original>
// kernel: tpu_custom_call.1
$region0: #{tpu_custom_call.1}
  #allocation0 [shape = 'u32[]', space=smem, size = 0x4, offset = 0x4, fixed_abs, tag = 'smem constant byte address 0x4 - core index']
  #allocation1 [shape = 'u32[144,128]{1,0:T(1,128)}', space=vmem, size = 0x12000, scoped, tag = 'internal scratch']
  #allocation2 [shape = 'bf16[18,32,128]{2,1,0:T(16,128)(2,1)}', space=vmem, size = 0x24000, scoped, tag = 'scratch operand']
  #allocation3 [shape = 'bf16[18,32,128]{2,1,0:T(16,128)(2,1)}', space=vmem, size = 0x24000, scoped, tag = 'scratch operand']
  %s0 = inlined_call_operand.hbm [shape: f32[2,16,16,128], index: 0, kind: input, shape index: {}]
  %s1 = inlined_call_operand.hbm [shape: bf16[384,384], index: 1, kind: input, shape index: {}]
  %s2 = inlined_call_operand.vmem [shape: f32[1,128], index: 2, kind: input, shape index: {}]
  %s3 = inlined_call_operand.hbm [shape: bf16[384,384], index: 3, kind: input, shape index: {}]
  %s4 = inlined_call_operand.vmem [shape: f32[1,128], index: 4, kind: input, shape index: {}]
  %s5 = inlined_call_operand.hbm [shape: f32[2,16,16,128], index: 5, kind: output, shape index: {}]
  %s6 = sld [smem:[#allocation0]]
  $region65: #{tpu_custom_call.1} parent=0
    _
  %s8 = ssub.s32 1, %s6
  %s9 = scalar_select 0, %s8, %s6
  $region1: #{tpu_custom_call.1} parent=0
    #allocation4 [shape = 'u8[262144]{0}', space=vmem, size = 0x40000, scoped, tag = 'input window, operand 0']
    #allocation5 [shape = 's32[2]{0}', space=sflag, size = 0x8, scoped, tag = 'scoped memory for tpu_custom_call.1']
    #allocation6 [shape = 's32[2]{0}', space=sflag, size = 0x8, scoped, tag = 'scoped memory for tpu_custom_call.1']
    #allocation7 [shape = 'u8[294912]{0}', space=vmem, size = 0x48000, scoped, tag = 'input window, operand 1, single buffered']
    #allocation8 [shape = 's32[1]{0}', space=sflag, size = 0x4, scoped, tag = 'scoped memory for tpu_custom_call.1']
    #allocation9 [shape = 'u8[294912]{0}', space=vmem, size = 0x48000, scoped, tag = 'input window, operand 3, single buffered']
    #allocation10 [shape = 'u8[262144]{0}', space=vmem, size = 0x40000, scoped, tag = 'output window, operand 0']
    %10 = vsyncpa [#allocation5], 0
    %s11 = scalar_lea.sflag [#allocation5], 1
    %12 = vsyncpa %s11, 0
    %13 = vsyncpa [#allocation8], 0
    %14 = vsyncpa [#allocation6], 0
    %s15 = scalar_lea.sflag [#allocation6], 1
    %16 = vsyncpa %s15, 0
    loop: start=0, step=1, limit=4
    $region2: #{tpu_custom_call.1} parent=1 // loop_pre_header
      _
    $region3: #{tpu_custom_call.1} parent=1 // loop_header
      %s18 = sphi 0, %s22
      %p19 = scmp.ge.s32.totalorder %s18, 4
      %s28 = sphi 0, %s30
      %s31 = sphi 0, %s28
      %s32 = sphi 0, %s31
      %s48 = sphi 0, %s32
      %s52 = sphi 0, %s52
      %s54 = sphi 0, %s52
      %s55 = sphi 0, %s54
      %s69 = sphi 0, %s55
      %s73 = sphi 0, %s73
      %s75 = sphi 0, %s73
      %s76 = sphi 0, %s75
      %s90 = sphi 0, %s76
      %s94 = sphi 0, %s94
      %s96 = sphi 0, %s94
      %s97 = sphi 0, %s96
      %s111 = sphi 0, %s97
      %s115 = sphi 0, %s115
      %s117 = sphi 0, %s115
      %s118 = sphi 0, %s117
      %s132 = sphi 0, %s118
      %s138 = sphi 0, %s140
      %s141 = sphi 0, %s138
      %s142 = sphi 0, %s141
      %s158 = sphi 0, %s142
    $region4: #{tpu_custom_call.1} parent=1 // loop_header_branch
      %21 = sbr.rel (%p19) target = $region8
    $region5: #{tpu_custom_call.1} parent=1 // loop_body
      %s23 = ssub.s32 %s18, 1
      %s24 = ssub.s32 %s18, 2
      %s25 = sadd.s32 %s18, 1
      %s26 = ssub.s32 %s18, %s25
      %p27 = scmp.eq.s32.totalorder %s26, 0
      %s29 = sadd.s32 %s28, 1
      %s30 = scalar_select %p27, %s28, %s29
      %p33 = pneg %p27
      %p34 = scmp.eq.s32.totalorder %s18, 1
      %p35 = por %p33, %p34
      %p36 = scmp.ne.s32.totalorder %s28, %s31
      %p37 = scmp.eq.s32.totalorder %s18, 0
      %p38 = por %p36, %p37
      %p39 = scmp.ne.s32.totalorder %s28, %s31
      %p40 = scmp.eq.s32.totalorder %s23, 1
      %p41 = por %p39, %p40
      %p42 = scmp.ne.s32.totalorder %s31, %s32
      %p43 = scmp.eq.s32.totalorder %s23, 0
      %p44 = por %p42, %p43
      %p45 = scmp.ne.s32.totalorder %s31, %s32
      %p46 = scmp.eq.s32.totalorder %s24, 1
      %p47 = por %p45, %p46
      %p49 = scmp.ne.s32.totalorder %s32, %s48
      %p50 = scmp.eq.s32.totalorder %s24, 0
      %p51 = por %p49, %p50
      %s53 = sadd.s32 %s52, 1
      %p56 = scmp.eq.s32.totalorder %s18, 1
      %p57 = scmp.ne.s32.totalorder %s52, %s54
      %p58 = scmp.eq.s32.totalorder %s18, 0
      %p59 = por %p57, %p58
      %p60 = scmp.ne.s32.totalorder %s52, %s54
      %p61 = scmp.eq.s32.totalorder %s23, 1
      %p62 = por %p60, %p61
      %p63 = scmp.ne.s32.totalorder %s54, %s55
      %p64 = scmp.eq.s32.totalorder %s23, 0
      %p65 = por %p63, %p64
      %p66 = scmp.ne.s32.totalorder %s54, %s55
      %p67 = scmp.eq.s32.totalorder %s24, 1
      %p68 = por %p66, %p67
      %p70 = scmp.ne.s32.totalorder %s55, %s69
      %p71 = scmp.eq.s32.totalorder %s24, 0
      %p72 = por %p70, %p71
      %s74 = sadd.s32 %s73, 1
      %p77 = scmp.eq.s32.totalorder %s18, 1
      %p78 = scmp.ne.s32.totalorder %s73, %s75
      %p79 = scmp.eq.s32.totalorder %s18, 0
      %p80 = por %p78, %p79
      %p81 = scmp.ne.s32.totalorder %s73, %s75
      %p82 = scmp.eq.s32.totalorder %s23, 1
      %p83 = por %p81, %p82
      %p84 = scmp.ne.s32.totalorder %s75, %s76
      %p85 = scmp.eq.s32.totalorder %s23, 0
      %p86 = por %p84, %p85
      %p87 = scmp.ne.s32.totalorder %s75, %s76
      %p88 = scmp.eq.s32.totalorder %s24, 1
      %p89 = por %p87, %p88
      %p91 = scmp.ne.s32.totalorder %s76, %s90
      %p92 = scmp.eq.s32.totalorder %s24, 0
      %p93 = por %p91, %p92
      %s95 = sadd.s32 %s94, 1
      %p98 = scmp.eq.s32.totalorder %s18, 1
      %p99 = scmp.ne.s32.totalorder %s94, %s96
      %p100 = scmp.eq.s32.totalorder %s18, 0
      %p101 = por %p99, %p100
      %p102 = scmp.ne.s32.totalorder %s94, %s96
      %p103 = scmp.eq.s32.totalorder %s23, 1
      %p104 = por %p102, %p103
      %p105 = scmp.ne.s32.totalorder %s96, %s97
      %p106 = scmp.eq.s32.totalorder %s23, 0
      %p107 = por %p105, %p106
      %p108 = scmp.ne.s32.totalorder %s96, %s97
      %p109 = scmp.eq.s32.totalorder %s24, 1
      %p110 = por %p108, %p109
      %p112 = scmp.ne.s32.totalorder %s97, %s111
      %p113 = scmp.eq.s32.totalorder %s24, 0
      %p114 = por %p112, %p113
      %s116 = sadd.s32 %s115, 1
      %p119 = scmp.eq.s32.totalorder %s18, 1
      %p120 = scmp.ne.s32.totalorder %s115, %s117
      %p121 = scmp.eq.s32.totalorder %s18, 0
      %p122 = por %p120, %p121
      %p123 = scmp.ne.s32.totalorder %s115, %s117
      %p124 = scmp.eq.s32.totalorder %s23, 1
      %p125 = por %p123, %p124
      %p126 = scmp.ne.s32.totalorder %s117, %s118
      %p127 = scmp.eq.s32.totalorder %s23, 0
      %p128 = por %p126, %p127
      %p129 = scmp.ne.s32.totalorder %s117, %s118
      %p130 = scmp.eq.s32.totalorder %s24, 1
      %p131 = por %p129, %p130
      %p133 = scmp.ne.s32.totalorder %s118, %s132
      %p134 = scmp.eq.s32.totalorder %s24, 0
      %p135 = por %p133, %p134
      %s136 = ssub.s32 %s18, %s25
      %p137 = scmp.eq.s32.totalorder %s136, 0
      %s139 = sadd.s32 %s138, 1
      %s140 = scalar_select %p137, %s138, %s139
      %p143 = pneg %p137
      %p144 = scmp.eq.s32.totalorder %s18, 1
      %p145 = por %p143, %p144
      %p146 = scmp.ne.s32.totalorder %s138, %s141
      %p147 = scmp.eq.s32.totalorder %s18, 0
      %p148 = por %p146, %p147
      %p149 = scmp.ne.s32.totalorder %s138, %s141
      %p150 = scmp.eq.s32.totalorder %s23, 1
      %p151 = por %p149, %p150
      %p152 = scmp.ne.s32.totalorder %s141, %s142
      %p153 = scmp.eq.s32.totalorder %s23, 0
      %p154 = por %p152, %p153
      %p155 = scmp.ne.s32.totalorder %s141, %s142
      %p156 = scmp.eq.s32.totalorder %s24, 1
      %p157 = por %p155, %p156
      %p159 = scmp.ne.s32.totalorder %s142, %s158
      %p160 = scmp.eq.s32.totalorder %s24, 0
      %p161 = por %p159, %p160
      %p162 = scmp.le.s32.totalorder 1, %s18
      %p163 = scmp.lt.s32.totalorder %s18, 3
      %p164 = pnand %p162, %p163
      %p165 = pneg %p164
      // Predicated region
      $region9: #{tpu_custom_call.1} parent=5 // pred_check
        _
      $region10: #{tpu_custom_call.1} parent=5 // pred_check_branch
        %167 = sbr.rel (%p164) target = $region12
      $region11: #{tpu_custom_call.1} parent=5 // pred_region
        %s168 = ssub.s32 %s18, 1
        // Predicated region
        $region13: #{tpu_custom_call.1} parent=11 // pred_check
          %p169 = pneg %p65
        $region14: #{tpu_custom_call.1} parent=11 // pred_check_branch
          %171 = sbr.rel (%p169) target = $region16
        $region15: #{tpu_custom_call.1} parent=11 // pred_region
          %s173 = ssub.s32 9216, 9216
          %174 = vsyncadd [#allocation8], %s173
          %s175 = sshll.u32 [#allocation7], 4
          %s176 = int_to_ptr.vmem [resolvable:$true] %s175
          %181 = dma.hbm_to_vmem [thread:$0]  %s1, 9216, %s176, [#allocation8], 192, 192, 12
        $region16: #{tpu_custom_call.1} parent=11 // pred_fallthru
          _
        // Predicated region
        $region17: #{tpu_custom_call.1} parent=11 // pred_check
          %p182 = pneg %p86
        $region18: #{tpu_custom_call.1} parent=11 // pred_check_branch
          %184 = sbr.rel (%p182) target = $region20
        $region19: #{tpu_custom_call.1} parent=11 // pred_region
          _
        $region20: #{tpu_custom_call.1} parent=11 // pred_fallthru
          _
        // Predicated region
        $region21: #{tpu_custom_call.1} parent=11 // pred_check
          %p185 = pneg %p107
        $region22: #{tpu_custom_call.1} parent=11 // pred_check_branch
          %187 = sbr.rel (%p185) target = $region24
        $region23: #{tpu_custom_call.1} parent=11 // pred_region
          %s189 = ssub.s32 9216, 9216
          %190 = vsyncadd [#allocation8], %s189
          %s191 = sshll.u32 [#allocation9], 4
          %s192 = int_to_ptr.vmem [resolvable:$true] %s191
          %197 = dma.hbm_to_vmem [thread:$0]  %s3, 9216, %s192, [#allocation8], 192, 192, 12
        $region24: #{tpu_custom_call.1} parent=11 // pred_fallthru
          _
        // Predicated region
        $region25: #{tpu_custom_call.1} parent=11 // pred_check
          %p198 = pneg %p128
        $region26: #{tpu_custom_call.1} parent=11 // pred_check_branch
          %200 = sbr.rel (%p198) target = $region28
        $region27: #{tpu_custom_call.1} parent=11 // pred_region
          _
        $region28: #{tpu_custom_call.1} parent=11 // pred_fallthru
          _
      $region12: #{tpu_custom_call.1} parent=5 // pred_fallthru
        _
      %p201 = scmp.lt.s32.totalorder %s18, 2
      // Predicated region
      $region29: #{tpu_custom_call.1} parent=5 // pred_check
        %p202 = pneg %p201
      $region30: #{tpu_custom_call.1} parent=5 // pred_check_branch
        %204 = sbr.rel (%p202) target = $region32
      $region31: #{tpu_custom_call.1} parent=5 // pred_region
        // Predicated region
        $region33: #{tpu_custom_call.1} parent=31 // pred_check
          %p205 = pneg %p38
        $region34: #{tpu_custom_call.1} parent=31 // pred_check_branch
          %207 = sbr.rel (%p205) target = $region36
        $region35: #{tpu_custom_call.1} parent=31 // pred_region
          %s208 = sand.u32 %s28, 1
          %s209 = scalar_lea.sflag [#allocation5], %s208
          %s210 = sand.u32 %s28, 1
          %s211 = smul.addr %s210, 256
          %s212 = scalar_lea.vmem [#allocation4], %s211
          %s214 = ssub.s32 4096, 4096
          %215 = vsyncadd %s209, %s214
          %s216 = smul.addr %s18, 32
          %s217 = smul.addr %s216, 128
          %s218 = scalar_lea.hbm %s0, %s217
          %s219 = sshll.u32 %s212, 4
          %s220 = int_to_ptr.vmem [resolvable:$true] %s219
          %225 = dma.hbm_to_vmem [thread:$0]  %s218, 4096, %s220, %s209, 128, 128, 8
        $region36: #{tpu_custom_call.1} parent=31 // pred_fallthru
          _
      $region32: #{tpu_custom_call.1} parent=5 // pred_fallthru
        _
      %p226 = scmp.le.s32.totalorder 1, %s18
      %p227 = scmp.lt.s32.totalorder %s18, 3
      %p228 = pnand %p226, %p227
      %p229 = pneg %p228
      // Predicated region
      $region37: #{tpu_custom_call.1} parent=5 // pred_check
        _
      $region38: #{tpu_custom_call.1} parent=5 // pred_check_branch
        %231 = sbr.rel (%p228) target = $region40
      $region39: #{tpu_custom_call.1} parent=5 // pred_region
        %s232 = ssub.s32 %s18, 1
        %s233 = sand.u32 %s31, 1
        %s234 = scalar_lea.sflag [#allocation5], %s233
        %s235 = sand.u32 %s31, 1
        %s236 = smul.addr %s235, 256
        %s237 = scalar_lea.vmem [#allocation4], %s236
        // Predicated region
        $region41: #{tpu_custom_call.1} parent=39 // pred_check
          %p238 = pneg %p44
        $region42: #{tpu_custom_call.1} parent=39 // pred_check_branch
          %240 = sbr.rel (%p238) target = $region44
        $region43: #{tpu_custom_call.1} parent=39 // pred_region
          %241 = dma.done %s234, 4096
        $region44: #{tpu_custom_call.1} parent=39 // pred_fallthru
          _
        // Predicated region
        $region45: #{tpu_custom_call.1} parent=39 // pred_check
          %p242 = pneg %p65
        $region46: #{tpu_custom_call.1} parent=39 // pred_check_branch
          %244 = sbr.rel (%p242) target = $region48
        $region47: #{tpu_custom_call.1} parent=39 // pred_region
          %245 = dma.done [#allocation8], 9216
        $region48: #{tpu_custom_call.1} parent=39 // pred_fallthru
          _
        // Predicated region
        $region49: #{tpu_custom_call.1} parent=39 // pred_check
          %p246 = pneg %p107
        $region50: #{tpu_custom_call.1} parent=39 // pred_check_branch
          %248 = sbr.rel (%p246) target = $region52
        $region51: #{tpu_custom_call.1} parent=39 // pred_region
          %249 = dma.done [#allocation8], 9216
        $region52: #{tpu_custom_call.1} parent=39 // pred_fallthru
          _
        %s250 = sand.u32 %s31, 1
        %s251 = scalar_lea.sflag [#allocation5], %s250
        %s252 = sand.u32 %s31, 1
        %s253 = smul.addr %s252, 256
        %s254 = scalar_lea.vmem [#allocation4], %s253
        %p255 = pneg %p44
        %p256 = pneg %p41
        %p257 = pneg %p65
        %p258 = pneg %p62
        %p259 = pneg %p86
        %p260 = pneg %p83
        %p261 = pneg %p107
        %p262 = pneg %p104
        %p263 = pneg %p128
        %p264 = pneg %p125
        %p265 = pneg %p154
        %p266 = pneg %p151
        %s267 = sand.u32 %s141, 1
        %s268 = scalar_lea.sflag [#allocation6], %s267
        %s269 = sand.u32 %s141, 1
        %s270 = smul.addr %s269, 256
        %s271 = scalar_lea.vmem [#allocation10], %s270
        %273 = vst [vmem:[#allocation2] sm:$0xff] 0
        %274 = vst [vmem:[#allocation2 + $0x8] sm:$0xff] 0
        %275 = vst [vmem:[#allocation2 + $0x10] sm:$0xff] 0
        %276 = vst [vmem:[#allocation2 + $0x18] sm:$0xff] 0
        %277 = vst [vmem:[#allocation2 + $0x20] sm:$0xff] 0
        %278 = vst [vmem:[#allocation2 + $0x28] sm:$0xff] 0
        %279 = vst [vmem:[#allocation2 + $0x30] sm:$0xff] 0
        %280 = vst [vmem:[#allocation2 + $0x38] sm:$0xff] 0
        %281 = vst [vmem:[#allocation2 + $0x40] sm:$0xff] 0
        %282 = vst [vmem:[#allocation2 + $0x48] sm:$0xff] 0
        %283 = vst [vmem:[#allocation2 + $0x50] sm:$0xff] 0
        %284 = vst [vmem:[#allocation2 + $0x58] sm:$0xff] 0
        %285 = vst [vmem:[#allocation2 + $0x60] sm:$0xff] 0
        %286 = vst [vmem:[#allocation2 + $0x68] sm:$0xff] 0
        %287 = vst [vmem:[#allocation2 + $0x70] sm:$0xff] 0
        %288 = vst [vmem:[#allocation2 + $0x78] sm:$0xff] 0
        %289 = vst [vmem:[#allocation2 + $0x80] sm:$0xff] 0
        %290 = vst [vmem:[#allocation2 + $0x88] sm:$0xff] 0
        %291 = vst [vmem:[#allocation2 + $0x90] sm:$0xff] 0
        %292 = vst [vmem:[#allocation2 + $0x98] sm:$0xff] 0
        %293 = vst [vmem:[#allocation2 + $0xa0] sm:$0xff] 0
        %294 = vst [vmem:[#allocation2 + $0xa8] sm:$0xff] 0
        %295 = vst [vmem:[#allocation2 + $0xb0] sm:$0xff] 0
        %296 = vst [vmem:[#allocation2 + $0xb8] sm:$0xff] 0
        %297 = vst [vmem:[#allocation2 + $0xc0] sm:$0xff] 0
        %298 = vst [vmem:[#allocation2 + $0xc8] sm:$0xff] 0
        %299 = vst [vmem:[#allocation2 + $0xd0] sm:$0xff] 0
        %300 = vst [vmem:[#allocation2 + $0xd8] sm:$0xff] 0
        %301 = vst [vmem:[#allocation2 + $0xe0] sm:$0xff] 0
        %302 = vst [vmem:[#allocation2 + $0xe8] sm:$0xff] 0
        %303 = vst [vmem:[#allocation2 + $0xf0] sm:$0xff] 0
        %304 = vst [vmem:[#allocation2 + $0xf8] sm:$0xff] 0
        %305 = vst [vmem:[#allocation2 + $0x100] sm:$0xff] 0
        %306 = vst [vmem:[#allocation2 + $0x108] sm:$0xff] 0
        %307 = vst [vmem:[#allocation2 + $0x110] sm:$0xff] 0
        %308 = vst [vmem:[#allocation2 + $0x118] sm:$0xff] 0
        %309 = vst [vmem:[#allocation3] sm:$0xff] 0
        %310 = vst [vmem:[#allocation3 + $0x8] sm:$0xff] 0
        %311 = vst [vmem:[#allocation3 + $0x10] sm:$0xff] 0
        %312 = vst [vmem:[#allocation3 + $0x18] sm:$0xff] 0
        %313 = vst [vmem:[#allocation3 + $0x20] sm:$0xff] 0
        %314 = vst [vmem:[#allocation3 + $0x28] sm:$0xff] 0
        %315 = vst [vmem:[#allocation3 + $0x30] sm:$0xff] 0
        %316 = vst [vmem:[#allocation3 + $0x38] sm:$0xff] 0
        %317 = vst [vmem:[#allocation3 + $0x40] sm:$0xff] 0
        %318 = vst [vmem:[#allocation3 + $0x48] sm:$0xff] 0
        %319 = vst [vmem:[#allocation3 + $0x50] sm:$0xff] 0
        %320 = vst [vmem:[#allocation3 + $0x58] sm:$0xff] 0
        %321 = vst [vmem:[#allocation3 + $0x60] sm:$0xff] 0
        %322 = vst [vmem:[#allocation3 + $0x68] sm:$0xff] 0
        %323 = vst [vmem:[#allocation3 + $0x70] sm:$0xff] 0
        %324 = vst [vmem:[#allocation3 + $0x78] sm:$0xff] 0
        %325 = vst [vmem:[#allocation3 + $0x80] sm:$0xff] 0
        %326 = vst [vmem:[#allocation3 + $0x88] sm:$0xff] 0
        %327 = vst [vmem:[#allocation3 + $0x90] sm:$0xff] 0
        %328 = vst [vmem:[#allocation3 + $0x98] sm:$0xff] 0
        %329 = vst [vmem:[#allocation3 + $0xa0] sm:$0xff] 0
        %330 = vst [vmem:[#allocation3 + $0xa8] sm:$0xff] 0
        %331 = vst [vmem:[#allocation3 + $0xb0] sm:$0xff] 0
        %332 = vst [vmem:[#allocation3 + $0xb8] sm:$0xff] 0
        %333 = vst [vmem:[#allocation3 + $0xc0] sm:$0xff] 0
        %334 = vst [vmem:[#allocation3 + $0xc8] sm:$0xff] 0
        %335 = vst [vmem:[#allocation3 + $0xd0] sm:$0xff] 0
        %336 = vst [vmem:[#allocation3 + $0xd8] sm:$0xff] 0
        %337 = vst [vmem:[#allocation3 + $0xe0] sm:$0xff] 0
        %338 = vst [vmem:[#allocation3 + $0xe8] sm:$0xff] 0
        %339 = vst [vmem:[#allocation3 + $0xf0] sm:$0xff] 0
        %340 = vst [vmem:[#allocation3 + $0xf8] sm:$0xff] 0
        %341 = vst [vmem:[#allocation3 + $0x100] sm:$0xff] 0
        %342 = vst [vmem:[#allocation3 + $0x108] sm:$0xff] 0
        %343 = vst [vmem:[#allocation3 + $0x110] sm:$0xff] 0
        %344 = vst [vmem:[#allocation3 + $0x118] sm:$0xff] 0
        %v345 = vld [vmem:[%s237] sm:$0xff]
        %v346 = vld [vmem:[%s237 + $0x8] sm:$0xff]
        %v347 = vld [vmem:[%s237 + $0x10] sm:$0xff]
        %v348 = vld [vmem:[%s237 + $0x18] sm:$0xff]
        %v349 = vld [vmem:[%s237 + $0x20] sm:$0xff]
        %v350 = vld [vmem:[%s237 + $0x28] sm:$0xff]
        %v351 = vld [vmem:[%s237 + $0x30] sm:$0xff]
        %v352 = vld [vmem:[%s237 + $0x38] sm:$0xff]
        %v353 = vld [vmem:[%s237 + $0x40] sm:$0xff]
        %v354 = vld [vmem:[%s237 + $0x48] sm:$0xff]
        %v355 = vld [vmem:[%s237 + $0x50] sm:$0xff]
        %v356 = vld [vmem:[%s237 + $0x58] sm:$0xff]
        %v357 = vld [vmem:[%s237 + $0x60] sm:$0xff]
        %v358 = vld [vmem:[%s237 + $0x68] sm:$0xff]
        %v359 = vld [vmem:[%s237 + $0x70] sm:$0xff]
        %v360 = vld [vmem:[%s237 + $0x78] sm:$0xff]
        %v361 = vld [vmem:[%s237 + $0x80] sm:$0xff]
        %v362 = vld [vmem:[%s237 + $0x88] sm:$0xff]
        %v363 = vld [vmem:[%s237 + $0x90] sm:$0xff]
        %v364 = vld [vmem:[%s237 + $0x98] sm:$0xff]
        %v365 = vld [vmem:[%s237 + $0xa0] sm:$0xff]
        %v366 = vld [vmem:[%s237 + $0xa8] sm:$0xff]
        %v367 = vld [vmem:[%s237 + $0xb0] sm:$0xff]
        %v368 = vld [vmem:[%s237 + $0xb8] sm:$0xff]
        %v369 = vld [vmem:[%s237 + $0xc0] sm:$0xff]
        %v370 = vld [vmem:[%s237 + $0xc8] sm:$0xff]
        %v371 = vld [vmem:[%s237 + $0xd0] sm:$0xff]
        %v372 = vld [vmem:[%s237 + $0xd8] sm:$0xff]
        %v373 = vld [vmem:[%s237 + $0xe0] sm:$0xff]
        %v374 = vld [vmem:[%s237 + $0xe8] sm:$0xff]
        %v375 = vld [vmem:[%s237 + $0xf0] sm:$0xff]
        %v376 = vld [vmem:[%s237 + $0xf8] sm:$0xff]
        %v377 = vpack.c.bf16 %v346, %v345
        %v378 = vpack.c.bf16 %v348, %v347
        %v379 = vpack.c.bf16 %v350, %v349
        %v380 = vpack.c.bf16 %v352, %v351
        %v381 = vpack.c.bf16 %v354, %v353
        %v382 = vpack.c.bf16 %v356, %v355
        %v383 = vpack.c.bf16 %v358, %v357
        %v384 = vpack.c.bf16 %v360, %v359
        %v385 = vpack.c.bf16 %v362, %v361
        %v386 = vpack.c.bf16 %v364, %v363
        %v387 = vpack.c.bf16 %v366, %v365
        %v388 = vpack.c.bf16 %v368, %v367
        %v389 = vpack.c.bf16 %v370, %v369
        %v390 = vpack.c.bf16 %v372, %v371
        %v391 = vpack.c.bf16 %v374, %v373
        %v392 = vpack.c.bf16 %v376, %v375
        %s393 = scalar_lea.vmem [#allocation2], 16
        %394 = vst [vmem:[%s393] sm:$0xff] %v377
        %395 = vst [vmem:[%s393 + $0x10] sm:$0xff] %v378
        %396 = vst [vmem:[%s393 + $0x20] sm:$0xff] %v379
        %397 = vst [vmem:[%s393 + $0x30] sm:$0xff] %v380
        %398 = vst [vmem:[%s393 + $0x40] sm:$0xff] %v381
        %399 = vst [vmem:[%s393 + $0x50] sm:$0xff] %v382
        %400 = vst [vmem:[%s393 + $0x60] sm:$0xff] %v383
        %401 = vst [vmem:[%s393 + $0x70] sm:$0xff] %v384
        %402 = vst [vmem:[%s393 + $0x80] sm:$0xff] %v385
        %403 = vst [vmem:[%s393 + $0x90] sm:$0xff] %v386
        %404 = vst [vmem:[%s393 + $0xa0] sm:$0xff] %v387
        %405 = vst [vmem:[%s393 + $0xb0] sm:$0xff] %v388
        %406 = vst [vmem:[%s393 + $0xc0] sm:$0xff] %v389
        %407 = vst [vmem:[%s393 + $0xd0] sm:$0xff] %v390
        %408 = vst [vmem:[%s393 + $0xe0] sm:$0xff] %v391
        %409 = vst [vmem:[%s393 + $0xf0] sm:$0xff] %v392
        %v410 = vld [vmem:[#allocation7] sm:$0xff]
        %v411 = vld [vmem:[#allocation7 + $0x8] sm:$0xf]
        %v412 = vld [vmem:[#allocation7 + $0xc] sm:$0xff]
        %v413 = vld [vmem:[#allocation7 + $0x14] sm:$0xf]
        %v414 = vld [vmem:[#allocation7 + $0x18] sm:$0xff]
        %v415 = vld [vmem:[#allocation7 + $0x20] sm:$0xf]
        %v416 = vld [vmem:[#allocation7 + $0x24] sm:$0xff]
        %v417 = vld [vmem:[#allocation7 + $0x2c] sm:$0xf]
        %v418 = vld [vmem:[#allocation7 + $0x30] sm:$0xff]
        %v419 = vld [vmem:[#allocation7 + $0x38] sm:$0xf]
        %v420 = vld [vmem:[#allocation7 + $0x3c] sm:$0xff]
        %v421 = vld [vmem:[#allocation7 + $0x44] sm:$0xf]
        %v422 = vld [vmem:[#allocation7 + $0x48] sm:$0xff]
        %v423 = vld [vmem:[#allocation7 + $0x50] sm:$0xf]
        %v424 = vld [vmem:[#allocation7 + $0x54] sm:$0xff]
        %v425 = vld [vmem:[#allocation7 + $0x5c] sm:$0xf]
        %v426 = vld [vmem:[#allocation7 + $0x60] sm:$0xff]
        %v427 = vld [vmem:[#allocation7 + $0x68] sm:$0xf]
        %v428 = vld [vmem:[#allocation7 + $0x6c] sm:$0xff]
        %v429 = vld [vmem:[#allocation7 + $0x74] sm:$0xf]
        %v430 = vld [vmem:[#allocation7 + $0x78] sm:$0xff]
        %v431 = vld [vmem:[#allocation7 + $0x80] sm:$0xf]
        %v432 = vld [vmem:[#allocation7 + $0x84] sm:$0xff]
        %v433 = vld [vmem:[#allocation7 + $0x8c] sm:$0xf]
        %v434 = vld [vmem:[#allocation7 + $0x90] sm:$0xff]
        %v435 = vld [vmem:[#allocation7 + $0x98] sm:$0xf]
        %v436 = vld [vmem:[#allocation7 + $0x9c] sm:$0xff]
        %v437 = vld [vmem:[#allocation7 + $0xa4] sm:$0xf]
        %v438 = vld [vmem:[#allocation7 + $0xa8] sm:$0xff]
        %v439 = vld [vmem:[#allocation7 + $0xb0] sm:$0xf]
        %v440 = vld [vmem:[#allocation7 + $0xb4] sm:$0xff]
        %v441 = vld [vmem:[#allocation7 + $0xbc] sm:$0xf]
        %v442 = vld [vmem:[#allocation7 + $0xc0] sm:$0xff]
        %v443 = vld [vmem:[#allocation7 + $0xc8] sm:$0xf]
        %v444 = vld [vmem:[#allocation7 + $0xcc] sm:$0xff]
        %v445 = vld [vmem:[#allocation7 + $0xd4] sm:$0xf]
        %v446 = vld [vmem:[#allocation7 + $0xd8] sm:$0xff]
        %v447 = vld [vmem:[#allocation7 + $0xe0] sm:$0xf]
        %v448 = vld [vmem:[#allocation7 + $0xe4] sm:$0xff]
        %v449 = vld [vmem:[#allocation7 + $0xec] sm:$0xf]
        %v450 = vld [vmem:[#allocation7 + $0xf0] sm:$0xff]
        %v451 = vld [vmem:[#allocation7 + $0xf8] sm:$0xf]
        %v452 = vld [vmem:[#allocation7 + $0xfc] sm:$0xff]
        %v453 = vld [vmem:[#allocation7 + $0x104] sm:$0xf]
        %v454 = vld [vmem:[#allocation7 + $0x108] sm:$0xff]
        %v455 = vld [vmem:[#allocation7 + $0x110] sm:$0xf]
        %v456 = vld [vmem:[#allocation7 + $0x114] sm:$0xff]
        %v457 = vld [vmem:[#allocation7 + $0x11c] sm:$0xf]
        %v458 = vld [vmem:[#allocation7 + $0x120] sm:$0xff]
        %v459 = vld [vmem:[#allocation7 + $0x128] sm:$0xf]
        %v460 = vld [vmem:[#allocation7 + $0x12c] sm:$0xff]
        %v461 = vld [vmem:[#allocation7 + $0x134] sm:$0xf]
        %v462 = vld [vmem:[#allocation7 + $0x138] sm:$0xff]
        %v463 = vld [vmem:[#allocation7 + $0x140] sm:$0xf]
        %v464 = vld [vmem:[#allocation7 + $0x144] sm:$0xff]
        %v465 = vld [vmem:[#allocation7 + $0x14c] sm:$0xf]
        %v466 = vld [vmem:[#allocation7 + $0x150] sm:$0xff]
        %v467 = vld [vmem:[#allocation7 + $0x158] sm:$0xf]
        %v468 = vld [vmem:[#allocation7 + $0x15c] sm:$0xff]
        %v469 = vld [vmem:[#allocation7 + $0x164] sm:$0xf]
        %v470 = vld [vmem:[#allocation7 + $0x168] sm:$0xff]
        %v471 = vld [vmem:[#allocation7 + $0x170] sm:$0xf]
        %v472 = vld [vmem:[#allocation7 + $0x174] sm:$0xff]
        %v473 = vld [vmem:[#allocation7 + $0x17c] sm:$0xf]
        %v474 = vld [vmem:[#allocation7 + $0x180] sm:$0xff]
        %v475 = vld [vmem:[#allocation7 + $0x188] sm:$0xf]
        %v476 = vld [vmem:[#allocation7 + $0x18c] sm:$0xff]
        %v477 = vld [vmem:[#allocation7 + $0x194] sm:$0xf]
        %v478 = vld [vmem:[#allocation7 + $0x198] sm:$0xff]
        %v479 = vld [vmem:[#allocation7 + $0x1a0] sm:$0xf]
        %v480 = vld [vmem:[#allocation7 + $0x1a4] sm:$0xff]
        %v481 = vld [vmem:[#allocation7 + $0x1ac] sm:$0xf]
        %v482 = vld [vmem:[#allocation7 + $0x1b0] sm:$0xff]
        %v483 = vld [vmem:[#allocation7 + $0x1b8] sm:$0xf]
        %v484 = vld [vmem:[#allocation7 + $0x1bc] sm:$0xff]
        %v485 = vld [vmem:[#allocation7 + $0x1c4] sm:$0xf]
        %v486 = vld [vmem:[#allocation7 + $0x1c8] sm:$0xff]
        %v487 = vld [vmem:[#allocation7 + $0x1d0] sm:$0xf]
        %v488 = vld [vmem:[#allocation7 + $0x1d4] sm:$0xff]
        %v489 = vld [vmem:[#allocation7 + $0x1dc] sm:$0xf]
        %v490 = vld [vmem:[#allocation7 + $0x1e0] sm:$0xff]
        %v491 = vld [vmem:[#allocation7 + $0x1e8] sm:$0xf]
        %v492 = vld [vmem:[#allocation7 + $0x1ec] sm:$0xff]
        %v493 = vld [vmem:[#allocation7 + $0x1f4] sm:$0xf]
        %v494 = vld [vmem:[#allocation7 + $0x1f8] sm:$0xff]
        %v495 = vld [vmem:[#allocation7 + $0x200] sm:$0xf]
        %v496 = vld [vmem:[#allocation7 + $0x204] sm:$0xff]
        %v497 = vld [vmem:[#allocation7 + $0x20c] sm:$0xf]
        %v498 = vld [vmem:[#allocation7 + $0x210] sm:$0xff]
        %v499 = vld [vmem:[#allocation7 + $0x218] sm:$0xf]
        %v500 = vld [vmem:[#allocation7 + $0x21c] sm:$0xff]
        %v501 = vld [vmem:[#allocation7 + $0x224] sm:$0xf]
        %v502 = vld [vmem:[#allocation7 + $0x228] sm:$0xff]
        %v503 = vld [vmem:[#allocation7 + $0x230] sm:$0xf]
        %v504 = vld [vmem:[#allocation7 + $0x234] sm:$0xff]
        %v505 = vld [vmem:[#allocation7 + $0x23c] sm:$0xf]
        %v506 = vld [vmem:[#allocation2] sm:$0xff]
        %v507 = vld [vmem:[#allocation2 + $0x8] sm:$0xff]
        %v508 = vld [vmem:[#allocation2 + $0x10] sm:$0xff]
        %v509 = vld [vmem:[#allocation2 + $0x18] sm:$0xff]
        %v510 = vld [vmem:[#allocation2 + $0x20] sm:$0xff]
        %v511 = vld [vmem:[#allocation2 + $0x28] sm:$0xff]
        %v512 = vld [vmem:[#allocation2 + $0x30] sm:$0xff]
        %v513 = vld [vmem:[#allocation2 + $0x38] sm:$0xff]
        %v514 = vld [vmem:[#allocation2 + $0x40] sm:$0xff]
        %v515 = vld [vmem:[#allocation2 + $0x48] sm:$0xff]
        %v516 = vld [vmem:[#allocation2 + $0x50] sm:$0xff]
        %v517 = vld [vmem:[#allocation2 + $0x58] sm:$0xff]
        %v518 = vld [vmem:[#allocation2 + $0x60] sm:$0xff]
        %v519 = vld [vmem:[#allocation2 + $0x68] sm:$0xff]
        %v520 = vld [vmem:[#allocation2 + $0x70] sm:$0xff]
        %v521 = vld [vmem:[#allocation2 + $0x78] sm:$0xff]
        %v522 = vld [vmem:[#allocation2 + $0x80] sm:$0xff]
        %v523 = vld [vmem:[#allocation2 + $0x88] sm:$0xff]
        %v524 = vld [vmem:[#allocation2 + $0x90] sm:$0xff]
        %v525 = vld [vmem:[#allocation2 + $0x98] sm:$0xff]
        %v526 = vld [vmem:[#allocation2 + $0xa0] sm:$0xff]
        %v527 = vld [vmem:[#allocation2 + $0xa8] sm:$0xff]
        %v528 = vld [vmem:[#allocation2 + $0xb0] sm:$0xff]
        %v529 = vld [vmem:[#allocation2 + $0xb8] sm:$0xff]
        %v530 = vld [vmem:[#allocation2 + $0xc0] sm:$0xff]
        %v531 = vld [vmem:[#allocation2 + $0xc8] sm:$0xff]
        %v532 = vld [vmem:[#allocation2 + $0xd0] sm:$0xff]
        %v533 = vld [vmem:[#allocation2 + $0xd8] sm:$0xff]
        %v534 = vld [vmem:[#allocation2 + $0xe0] sm:$0xff]
        %v535 = vld [vmem:[#allocation2 + $0xe8] sm:$0xff]
        %v536 = vld [vmem:[#allocation2 + $0xf0] sm:$0xff]
        %v537 = vld [vmem:[#allocation2 + $0xf8] sm:$0xff]
        %v538 = vld [vmem:[%s393] sm:$0xff]
        %v539 = vld [vmem:[%s393 + $0x8] sm:$0xff]
        %v540 = vld [vmem:[%s393 + $0x10] sm:$0xff]
        %v541 = vld [vmem:[%s393 + $0x18] sm:$0xff]
        %v542 = vld [vmem:[%s393 + $0x20] sm:$0xff]
        %v543 = vld [vmem:[%s393 + $0x28] sm:$0xff]
        %v544 = vld [vmem:[%s393 + $0x30] sm:$0xff]
        %v545 = vld [vmem:[%s393 + $0x38] sm:$0xff]
        %v546 = vld [vmem:[%s393 + $0x40] sm:$0xff]
        %v547 = vld [vmem:[%s393 + $0x48] sm:$0xff]
        %v548 = vld [vmem:[%s393 + $0x50] sm:$0xff]
        %v549 = vld [vmem:[%s393 + $0x58] sm:$0xff]
        %v550 = vld [vmem:[%s393 + $0x60] sm:$0xff]
        %v551 = vld [vmem:[%s393 + $0x68] sm:$0xff]
        %v552 = vld [vmem:[%s393 + $0x70] sm:$0xff]
        %v553 = vld [vmem:[%s393 + $0x78] sm:$0xff]
        %v554 = vld [vmem:[%s393 + $0x80] sm:$0xff]
        %v555 = vld [vmem:[%s393 + $0x88] sm:$0xff]
        %v556 = vld [vmem:[%s393 + $0x90] sm:$0xff]
        %v557 = vld [vmem:[%s393 + $0x98] sm:$0xff]
        %v558 = vld [vmem:[%s393 + $0xa0] sm:$0xff]
        %v559 = vld [vmem:[%s393 + $0xa8] sm:$0xff]
        %v560 = vld [vmem:[%s393 + $0xb0] sm:$0xff]
        %v561 = vld [vmem:[%s393 + $0xb8] sm:$0xff]
        %v562 = vld [vmem:[%s393 + $0xc0] sm:$0xff]
        %v563 = vld [vmem:[%s393 + $0xc8] sm:$0xff]
        %v564 = vld [vmem:[%s393 + $0xd0] sm:$0xff]
        %v565 = vld [vmem:[%s393 + $0xd8] sm:$0xff]
        %v566 = vld [vmem:[%s393 + $0xe0] sm:$0xff]
        %v567 = vld [vmem:[%s393 + $0xe8] sm:$0xff]
        %v568 = vld [vmem:[%s393 + $0xf0] sm:$0xff]
        %v569 = vld [vmem:[%s393 + $0xf8] sm:$0xff]
        %s570 = scalar_lea.vmem [#allocation2], 32
        %v571 = vld [vmem:[%s570] sm:$0xff]
        %v572 = vld [vmem:[%s570 + $0x8] sm:$0xff]
        %v573 = vld [vmem:[%s570 + $0x10] sm:$0xff]
        %v574 = vld [vmem:[%s570 + $0x18] sm:$0xff]
        %v575 = vld [vmem:[%s570 + $0x20] sm:$0xff]
        %v576 = vld [vmem:[%s570 + $0x28] sm:$0xff]
        %v577 = vld [vmem:[%s570 + $0x30] sm:$0xff]
        %v578 = vld [vmem:[%s570 + $0x38] sm:$0xff]
        %v579 = vld [vmem:[%s570 + $0x40] sm:$0xff]
        %v580 = vld [vmem:[%s570 + $0x48] sm:$0xff]
        %v581 = vld [vmem:[%s570 + $0x50] sm:$0xff]
        %v582 = vld [vmem:[%s570 + $0x58] sm:$0xff]
        %v583 = vld [vmem:[%s570 + $0x60] sm:$0xff]
        %v584 = vld [vmem:[%s570 + $0x68] sm:$0xff]
        %v585 = vld [vmem:[%s570 + $0x70] sm:$0xff]
        %v586 = vld [vmem:[%s570 + $0x78] sm:$0xff]
        %v587 = vld [vmem:[%s570 + $0x80] sm:$0xff]
        %v588 = vld [vmem:[%s570 + $0x88] sm:$0xff]
        %v589 = vld [vmem:[%s570 + $0x90] sm:$0xff]
        %v590 = vld [vmem:[%s570 + $0x98] sm:$0xff]
        %v591 = vld [vmem:[%s570 + $0xa0] sm:$0xff]
        %v592 = vld [vmem:[%s570 + $0xa8] sm:$0xff]
        %v593 = vld [vmem:[%s570 + $0xb0] sm:$0xff]
        %v594 = vld [vmem:[%s570 + $0xb8] sm:$0xff]
        %v595 = vld [vmem:[%s570 + $0xc0] sm:$0xff]
        %v596 = vld [vmem:[%s570 + $0xc8] sm:$0xff]
        %v597 = vld [vmem:[%s570 + $0xd0] sm:$0xff]
        %v598 = vld [vmem:[%s570 + $0xd8] sm:$0xff]
        %v599 = vld [vmem:[%s570 + $0xe0] sm:$0xff]
        %v600 = vld [vmem:[%s570 + $0xe8] sm:$0xff]
        %v601 = vld [vmem:[%s570 + $0xf0] sm:$0xff]
        %v602 = vld [vmem:[%s570 + $0xf8] sm:$0xff]
        %v699 = vunpack.c.l.b16 %v410
        %v700 = vunpack.c.h.b16 %v410
        %v701 = vunpack.c.l.b16 %v411
        %v702 = vunpack.c.l.b16 %v412
        %v703 = vunpack.c.h.b16 %v412
        %v704 = vunpack.c.l.b16 %v413
        %v705 = vunpack.c.l.b16 %v414
        %v706 = vunpack.c.h.b16 %v414
        %v707 = vunpack.c.l.b16 %v415
        %v708 = vunpack.c.l.b16 %v416
        %v709 = vunpack.c.h.b16 %v416
        %v710 = vunpack.c.l.b16 %v417
        %v711 = vunpack.c.l.b16 %v418
        %v712 = vunpack.c.h.b16 %v418
        %v713 = vunpack.c.l.b16 %v419
        %v714 = vunpack.c.l.b16 %v420
        %v715 = vunpack.c.h.b16 %v420
        %v716 = vunpack.c.l.b16 %v421
        %v717 = vunpack.c.l.b16 %v422
        %v718 = vunpack.c.h.b16 %v422
        %v719 = vunpack.c.l.b16 %v423
        %v720 = vunpack.c.l.b16 %v424
        %v721 = vunpack.c.h.b16 %v424
        %v722 = vunpack.c.l.b16 %v425
        %v723 = vunpack.c.l.b16 %v426
        %v724 = vunpack.c.h.b16 %v426
        %v725 = vunpack.c.l.b16 %v427
        %v726 = vunpack.c.l.b16 %v428
        %v727 = vunpack.c.h.b16 %v428
        %v728 = vunpack.c.l.b16 %v429
        %v729 = vunpack.c.l.b16 %v430
        %v730 = vunpack.c.h.b16 %v430
        %v731 = vunpack.c.l.b16 %v431
        %v732 = vunpack.c.l.b16 %v432
        %v733 = vunpack.c.h.b16 %v432
        %v734 = vunpack.c.l.b16 %v433
        %v735 = vunpack.c.l.b16 %v434
        %v736 = vunpack.c.h.b16 %v434
        %v737 = vunpack.c.l.b16 %v435
        %v738 = vunpack.c.l.b16 %v436
        %v739 = vunpack.c.h.b16 %v436
        %v740 = vunpack.c.l.b16 %v437
        %v741 = vunpack.c.l.b16 %v438
        %v742 = vunpack.c.h.b16 %v438
        %v743 = vunpack.c.l.b16 %v439
        %v744 = vunpack.c.l.b16 %v440
        %v745 = vunpack.c.h.b16 %v440
        %v746 = vunpack.c.l.b16 %v441
        %v747 = vunpack.c.l.b16 %v442
        %v748 = vunpack.c.h.b16 %v442
        %v749 = vunpack.c.l.b16 %v443
        %v750 = vunpack.c.l.b16 %v444
        %v751 = vunpack.c.h.b16 %v444
        %v752 = vunpack.c.l.b16 %v445
        %v753 = vunpack.c.l.b16 %v446
        %v754 = vunpack.c.h.b16 %v446
        %v755 = vunpack.c.l.b16 %v447
        %v756 = vunpack.c.l.b16 %v448
        %v757 = vunpack.c.h.b16 %v448
        %v758 = vunpack.c.l.b16 %v449
        %v759 = vunpack.c.l.b16 %v450
        %v760 = vunpack.c.h.b16 %v450
        %v761 = vunpack.c.l.b16 %v451
        %v762 = vunpack.c.l.b16 %v452
        %v763 = vunpack.c.h.b16 %v452
        %v764 = vunpack.c.l.b16 %v453
        %v765 = vunpack.c.l.b16 %v454
        %v766 = vunpack.c.h.b16 %v454
        %v767 = vunpack.c.l.b16 %v455
        %v768 = vunpack.c.l.b16 %v456
        %v769 = vunpack.c.h.b16 %v456
        %v770 = vunpack.c.l.b16 %v457
        %v771 = vunpack.c.l.b16 %v458
        %v772 = vunpack.c.h.b16 %v458
        %v773 = vunpack.c.l.b16 %v459
        %v774 = vunpack.c.l.b16 %v460
        %v775 = vunpack.c.h.b16 %v460
        %v776 = vunpack.c.l.b16 %v461
        %v777 = vunpack.c.l.b16 %v462
        %v778 = vunpack.c.h.b16 %v462
        %v779 = vunpack.c.l.b16 %v463
        %v780 = vunpack.c.l.b16 %v464
        %v781 = vunpack.c.h.b16 %v464
        %v782 = vunpack.c.l.b16 %v465
        %v783 = vunpack.c.l.b16 %v466
        %v784 = vunpack.c.h.b16 %v466
        %v785 = vunpack.c.l.b16 %v467
        %v786 = vunpack.c.l.b16 %v468
        %v787 = vunpack.c.h.b16 %v468
        %v788 = vunpack.c.l.b16 %v469
        %v789 = vunpack.c.l.b16 %v470
        %v790 = vunpack.c.h.b16 %v470
        %v791 = vunpack.c.l.b16 %v471
        %v792 = vunpack.c.l.b16 %v472
        %v793 = vunpack.c.h.b16 %v472
        %v794 = vunpack.c.l.b16 %v473
        %v795 = vunpack.c.l.b16 %v474
        %v796 = vunpack.c.h.b16 %v474
        %v797 = vunpack.c.l.b16 %v475
        %v798 = vunpack.c.l.b16 %v476
        %v799 = vunpack.c.h.b16 %v476
        %v800 = vunpack.c.l.b16 %v477
        %v801 = vunpack.c.l.b16 %v478
        %v802 = vunpack.c.h.b16 %v478
        %v803 = vunpack.c.l.b16 %v479
        %v804 = vunpack.c.l.b16 %v480
        %v805 = vunpack.c.h.b16 %v480
        %v806 = vunpack.c.l.b16 %v481
        %v807 = vunpack.c.l.b16 %v482
        %v808 = vunpack.c.h.b16 %v482
        %v809 = vunpack.c.l.b16 %v483
        %v810 = vunpack.c.l.b16 %v484
        %v811 = vunpack.c.h.b16 %v484
        %v812 = vunpack.c.l.b16 %v485
        %v813 = vunpack.c.l.b16 %v486
        %v814 = vunpack.c.h.b16 %v486
        %v815 = vunpack.c.l.b16 %v487
        %v816 = vunpack.c.l.b16 %v488
        %v817 = vunpack.c.h.b16 %v488
        %v818 = vunpack.c.l.b16 %v489
        %v819 = vunpack.c.l.b16 %v490
        %v820 = vunpack.c.h.b16 %v490
        %v821 = vunpack.c.l.b16 %v491
        %v822 = vunpack.c.l.b16 %v492
        %v823 = vunpack.c.h.b16 %v492
        %v824 = vunpack.c.l.b16 %v493
        %v825 = vunpack.c.l.b16 %v494
        %v826 = vunpack.c.h.b16 %v494
        %v827 = vunpack.c.l.b16 %v495
        %v828 = vunpack.c.l.b16 %v496
        %v829 = vunpack.c.h.b16 %v496
        %v830 = vunpack.c.l.b16 %v497
        %v831 = vunpack.c.l.b16 %v498
        %v832 = vunpack.c.h.b16 %v498
        %v833 = vunpack.c.l.b16 %v499
        %v834 = vunpack.c.l.b16 %v500
        %v835 = vunpack.c.h.b16 %v500
        %v836 = vunpack.c.l.b16 %v501
        %v837 = vunpack.c.l.b16 %v502
        %v838 = vunpack.c.h.b16 %v502
        %v839 = vunpack.c.l.b16 %v503
        %v840 = vunpack.c.l.b16 %v504
        %v841 = vunpack.c.h.b16 %v504
        %v842 = vunpack.c.l.b16 %v505
        %v843 = vpack.c.b16 %v702, %v699
        %v844 = vpack.c.b16 %v703, %v700
        %v845 = vpack.c.b16 %v704, %v701
        %v846 = vpack.c.b16 %v708, %v705
        %v847 = vpack.c.b16 %v709, %v706
        %v848 = vpack.c.b16 %v710, %v707
        %v849 = vpack.c.b16 %v714, %v711
        %v850 = vpack.c.b16 %v715, %v712
        %v851 = vpack.c.b16 %v716, %v713
        %v852 = vpack.c.b16 %v720, %v717
        %v853 = vpack.c.b16 %v721, %v718
        %v854 = vpack.c.b16 %v722, %v719
        %v855 = vpack.c.b16 %v726, %v723
        %v856 = vpack.c.b16 %v727, %v724
        %v857 = vpack.c.b16 %v728, %v725
        %v858 = vpack.c.b16 %v732, %v729
        %v859 = vpack.c.b16 %v733, %v730
        %v860 = vpack.c.b16 %v734, %v731
        %v861 = vpack.c.b16 %v738, %v735
        %v862 = vpack.c.b16 %v739, %v736
        %v863 = vpack.c.b16 %v740, %v737
        %v864 = vpack.c.b16 %v744, %v741
        %v865 = vpack.c.b16 %v745, %v742
        %v866 = vpack.c.b16 %v746, %v743
        %v867 = vpack.c.b16 %v750, %v747
        %v868 = vpack.c.b16 %v751, %v748
        %v869 = vpack.c.b16 %v752, %v749
        %v870 = vpack.c.b16 %v756, %v753
        %v871 = vpack.c.b16 %v757, %v754
        %v872 = vpack.c.b16 %v758, %v755
        %v873 = vpack.c.b16 %v762, %v759
        %v874 = vpack.c.b16 %v763, %v760
        %v875 = vpack.c.b16 %v764, %v761
        %v876 = vpack.c.b16 %v768, %v765
        %v877 = vpack.c.b16 %v769, %v766
        %v878 = vpack.c.b16 %v770, %v767
        %v879 = vpack.c.b16 %v774, %v771
        %v880 = vpack.c.b16 %v775, %v772
        %v881 = vpack.c.b16 %v776, %v773
        %v882 = vpack.c.b16 %v780, %v777
        %v883 = vpack.c.b16 %v781, %v778
        %v884 = vpack.c.b16 %v782, %v779
        %v885 = vpack.c.b16 %v786, %v783
        %v886 = vpack.c.b16 %v787, %v784
        %v887 = vpack.c.b16 %v788, %v785
        %v888 = vpack.c.b16 %v792, %v789
        %v889 = vpack.c.b16 %v793, %v790
        %v890 = vpack.c.b16 %v794, %v791
        %v891 = vpack.c.b16 %v798, %v795
        %v892 = vpack.c.b16 %v799, %v796
        %v893 = vpack.c.b16 %v800, %v797
        %v894 = vpack.c.b16 %v804, %v801
        %v895 = vpack.c.b16 %v805, %v802
        %v896 = vpack.c.b16 %v806, %v803
        %v897 = vpack.c.b16 %v810, %v807
        %v898 = vpack.c.b16 %v811, %v808
        %v899 = vpack.c.b16 %v812, %v809
        %v900 = vpack.c.b16 %v816, %v813
        %v901 = vpack.c.b16 %v817, %v814
        %v902 = vpack.c.b16 %v818, %v815
        %v903 = vpack.c.b16 %v822, %v819
        %v904 = vpack.c.b16 %v823, %v820
        %v905 = vpack.c.b16 %v824, %v821
        %v906 = vpack.c.b16 %v828, %v825
        %v907 = vpack.c.b16 %v829, %v826
        %v908 = vpack.c.b16 %v830, %v827
        %v909 = vpack.c.b16 %v834, %v831
        %v910 = vpack.c.b16 %v835, %v832
        %v911 = vpack.c.b16 %v836, %v833
        %v912 = vpack.c.b16 %v840, %v837
        %v913 = vpack.c.b16 %v841, %v838
        %v914 = vpack.c.b16 %v842, %v839
        %987 = vmatprep.subr.bf16.mxu0 %v844
        %988 = vmatpush1.bf16.msra.mxu0 %v843
        %989 = vmatprep.subr.bf16.mxu0 %v847
        %990 = vmatpush1.bf16.msra.mxu0 %v846
        %991 = vmatprep.subr.bf16.mxu0 %v850
        %992 = vmatpush1.bf16.msra.mxu0 %v849
        %993 = vmatprep.subr.bf16.mxu0 %v853
        %994 = vmatpush1.bf16.msra.mxu0 %v852
        %995 = vmatprep.subr.bf16.mxu0 %v856
        %996 = vmatpush1.bf16.msra.mxu0 %v855
        %997 = vmatprep.subr.bf16.mxu0 %v859
        %998 = vmatpush1.bf16.msra.mxu0 %v858
        %999 = vmatprep.subr.bf16.mxu0 %v862
        %1000 = vmatpush1.bf16.msra.mxu0 %v861
        %1001 = vmatprep.subr.bf16.mxu0 %v865
        %1002 = vmatpush1.bf16.msra.mxu0 %v864
        %1003 = vmatprep.subr.bf16.mxu0 %v868
        %1004 = vmatpush1.bf16.msra.mxu0 %v867
        %1005 = vmatprep.subr.bf16.mxu0 %v871
        %1006 = vmatpush1.bf16.msra.mxu0 %v870
        %1007 = vmatprep.subr.bf16.mxu0 %v874
        %1008 = vmatpush1.bf16.msra.mxu0 %v873
        %1009 = vmatprep.subr.bf16.mxu0 %v877
        %1010 = vmatpush1.bf16.msra.mxu0 %v876
        %1011 = vmatprep.subr.bf16.mxu0 %v880
        %1012 = vmatpush1.bf16.msra.mxu0 %v879
        %1013 = vmatprep.subr.bf16.mxu0 %v883
        %1014 = vmatpush1.bf16.msra.mxu0 %v882
        %1015 = vmatprep.subr.bf16.mxu0 %v886
        %1016 = vmatpush1.bf16.msra.mxu0 %v885
        %1017 = vmatprep.subr.bf16.mxu0 %v889
        %1018 = vmatpush1.bf16.msra.mxu0 %v888
        %1019 = vmatprep.mubr.bf16.mxu0 %v538
        %1020 = vmatmul.mubr.bf16.gmra.mrb[0].mxu0 %v506
        %v1021 = vpop.f32.mrb[0].mxu0
        %v1022 = vadd.f32 0.0, %v1021
        %v1023 = vpop.f32.mrb[0].mxu0
        %v1024 = vadd.f32 0.0, %v1023
        %v1025 = vpop.f32.mrb[0].mxu0
        %v1026 = vadd.f32 0.0, %v1025
        %v1027 = vpop.f32.mrb[0].mxu0
        %v1028 = vadd.f32 0.0, %v1027
        %1029 = vmatprep.mubr.bf16.mxu0 %v539
        %1030 = vmatmul.mubr.bf16.gmra.mrb[0].mxu0 %v507
        %v1031 = vpop.f32.mrb[0].mxu0
        %v1032 = vpop.f32.mrb[0].mxu0
        %v1033 = vpop.f32.mrb[0].mxu0
        %v1034 = vadd.f32 0.0, %v1033
        %v1035 = vpop.f32.mrb[0].mxu0
        %1036 = vmatprep.mubr.bf16.mxu0 %v540
        %1037 = vmatmul.mubr.bf16.gmra.mrb[0].mxu0 %v508
        %v1038 = vpop.f32.mrb[0].mxu0
        %v1039 = vadd.f32 0.0, %v1038
        %v1040 = vpop.f32.mrb[0].mxu0
        %v1041 = vadd.f32 0.0, %v1040
        %v1042 = vpop.f32.mrb[0].mxu0
        %v1043 = vadd.f32 0.0, %v1042
        %v1044 = vpop.f32.mrb[0].mxu0
        %v1045 = vadd.f32 0.0, %v1044
        %1046 = vmatprep.mubr.bf16.mxu0 %v541
        %1047 = vmatmul.mubr.bf16.gmra.mrb[0].mxu0 %v509
        %v1048 = vpop.f32.mrb[0].mxu0
        %v1049 = vpop.f32.mrb[0].mxu0
        %v1050 = vpop.f32.mrb[0].mxu0
        %v1051 = vadd.f32 0.0, %v1050
        %v1052 = vpop.f32.mrb[0].mxu0
        %1053 = vmatprep.mubr.bf16.mxu0 %v542
        %1054 = vmatmul.mubr.bf16.gmra.mrb[0].mxu0 %v510
        %v1055 = vpop.f32.mrb[0].mxu0
        %v1056 = vadd.f32 0.0, %v1055
        %v1057 = vpop.f32.mrb[0].mxu0
        %v1058 = vadd.f32 0.0, %v1057
        %v1059 = vpop.f32.mrb[0].mxu0
        %v1060 = vadd.f32 0.0, %v1059
        %v1061 = vpop.f32.mrb[0].mxu0
        %v1062 = vadd.f32 0.0, %v1061
        %1063 = vmatprep.mubr.bf16.mxu0 %v543
        %1064 = vmatmul.mubr.bf16.gmra.mrb[0].mxu0 %v511
        %v1065 = vpop.f32.mrb[0].mxu0
        %v1066 = vpop.f32.mrb[0].mxu0
        %v1067 = vpop.f32.mrb[0].mxu0
        %v1068 = vadd.f32 0.0, %v1067
        %v1069 = vpop.f32.mrb[0].mxu0
        %1070 = vmatprep.mubr.bf16.mxu0 %v544
        %1071 = vmatmul.mubr.bf16.gmra.mrb[0].mxu0 %v512
        %v1072 = vpop.f32.mrb[0].mxu0
        %v1073 = vadd.f32 0.0, %v1072
        %v1074 = vpop.f32.mrb[0].mxu0
        %v1075 = vadd.f32 0.0, %v1074
        %v1076 = vpop.f32.mrb[0].mxu0
        %v1077 = vadd.f32 0.0, %v1076
        %v1078 = vpop.f32.mrb[0].mxu0
        %v1079 = vadd.f32 0.0, %v1078
        %1080 = vmatprep.mubr.bf16.mxu0 %v545
        %1081 = vmatmul.mubr.bf16.gmra.mrb[0].mxu0 %v513
        %v1082 = vpop.f32.mrb[0].mxu0
        %v1083 = vpop.f32.mrb[0].mxu0
        %v1084 = vpop.f32.mrb[0].mxu0
        %v1085 = vadd.f32 0.0, %v1084
        %v1086 = vpop.f32.mrb[0].mxu0
        %1087 = vmatprep.mubr.bf16.mxu0 %v546
        %1088 = vmatmul.mubr.bf16.gmra.mrb[0].mxu0 %v514
        %v1089 = vpop.f32.mrb[0].mxu0
        %v1090 = vadd.f32 0.0, %v1089
        %v1091 = vpop.f32.mrb[0].mxu0
        %v1092 = vadd.f32 0.0, %v1091
        %v1093 = vpop.f32.mrb[0].mxu0
        %v1094 = vadd.f32 0.0, %v1093
        %v1095 = vpop.f32.mrb[0].mxu0
        %v1096 = vadd.f32 0.0, %v1095
        %1097 = vmatprep.mubr.bf16.mxu0 %v547
        %1098 = vmatmul.mubr.bf16.gmra.mrb[0].mxu0 %v515
        %v1099 = vpop.f32.mrb[0].mxu0
        %v1100 = vpop.f32.mrb[0].mxu0
        %v1101 = vpop.f32.mrb[0].mxu0
        %v1102 = vadd.f32 0.0, %v1101
        %v1103 = vpop.f32.mrb[0].mxu0
        %1104 = vmatprep.mubr.bf16.mxu0 %v548
        %1105 = vmatmul.mubr.bf16.gmra.mrb[0].mxu0 %v516
        %v1106 = vpop.f32.mrb[0].mxu0
        %v1107 = vadd.f32 0.0, %v1106
        %v1108 = vpop.f32.mrb[0].mxu0
        %v1109 = vadd.f32 0.0, %v1108
        %v1110 = vpop.f32.mrb[0].mxu0
        %v1111 = vadd.f32 0.0, %v1110
        %v1112 = vpop.f32.mrb[0].mxu0
        %v1113 = vadd.f32 0.0, %v1112
        %1114 = vmatprep.mubr.bf16.mxu0 %v549
        %1115 = vmatmul.mubr.bf16.gmra.mrb[0].mxu0 %v517
        %v1116 = vpop.f32.mrb[0].mxu0
        %v1117 = vpop.f32.mrb[0].mxu0
        %v1118 = vpop.f32.mrb[0].mxu0
        %v1119 = vadd.f32 0.0, %v1118
        %v1120 = vpop.f32.mrb[0].mxu0
        %1121 = vmatprep.mubr.bf16.mxu0 %v550
        %1122 = vmatmul.mubr.bf16.gmra.mrb[0].mxu0 %v518
        %v1123 = vpop.f32.mrb[0].mxu0
        %v1124 = vadd.f32 0.0, %v1123
        %v1125 = vpop.f32.mrb[0].mxu0
        %v1126 = vadd.f32 0.0, %v1125
        %v1127 = vpop.f32.mrb[0].mxu0
        %v1128 = vadd.f32 0.0, %v1127
        %v1129 = vpop.f32.mrb[0].mxu0
        %v1130 = vadd.f32 0.0, %v1129
        %1131 = vmatprep.mubr.bf16.mxu0 %v551
        %1132 = vmatmul.mubr.bf16.gmra.mrb[0].mxu0 %v519
        %v1133 = vpop.f32.mrb[0].mxu0
        %v1134 = vpop.f32.mrb[0].mxu0
        %v1135 = vpop.f32.mrb[0].mxu0
        %v1136 = vadd.f32 0.0, %v1135
        %v1137 = vpop.f32.mrb[0].mxu0
        %1138 = vmatprep.mubr.bf16.mxu0 %v552
        %1139 = vmatmul.mubr.bf16.gmra.mrb[0].mxu0 %v520
        %v1140 = vpop.f32.mrb[0].mxu0
        %v1141 = vadd.f32 0.0, %v1140
        %v1142 = vpop.f32.mrb[0].mxu0
        %v1143 = vadd.f32 0.0, %v1142
        %v1144 = vpop.f32.mrb[0].mxu0
        %v1145 = vadd.f32 0.0, %v1144
        %v1146 = vpop.f32.mrb[0].mxu0
        %v1147 = vadd.f32 0.0, %v1146
        %1148 = vmatprep.mubr.bf16.mxu0 %v553
        %1149 = vmatmul.mubr.bf16.gmra.mrb[0].mxu0 %v521
        %v1150 = vpop.f32.mrb[0].mxu0
        %v1151 = vpop.f32.mrb[0].mxu0
        %v1152 = vpop.f32.mrb[0].mxu0
        %v1153 = vadd.f32 0.0, %v1152
        %v1154 = vpop.f32.mrb[0].mxu0
        %1155 = vmatprep.mubr.bf16.mxu0 %v554
        %1156 = vmatmul.mubr.bf16.gmra.mrb[0].mxu0 %v522
        %v1157 = vpop.f32.mrb[0].mxu0
        %v1158 = vadd.f32 0.0, %v1157
        %v1159 = vpop.f32.mrb[0].mxu0
        %v1160 = vadd.f32 0.0, %v1159
        %v1161 = vpop.f32.mrb[0].mxu0
        %v1162 = vadd.f32 0.0, %v1161
        %v1163 = vpop.f32.mrb[0].mxu0
        %v1164 = vadd.f32 0.0, %v1163
        %1165 = vmatprep.mubr.bf16.mxu0 %v555
        %1166 = vmatmul.mubr.bf16.gmra.mrb[0].mxu0 %v523
        %v1167 = vpop.f32.mrb[0].mxu0
        %v1168 = vpop.f32.mrb[0].mxu0
        %v1169 = vpop.f32.mrb[0].mxu0
        %v1170 = vadd.f32 0.0, %v1169
        %v1171 = vpop.f32.mrb[0].mxu0
        %1172 = vmatprep.mubr.bf16.mxu0 %v556
        %1173 = vmatmul.mubr.bf16.gmra.mrb[0].mxu0 %v524
        %v1174 = vpop.f32.mrb[0].mxu0
        %v1175 = vadd.f32 0.0, %v1174
        %v1176 = vpop.f32.mrb[0].mxu0
        %v1177 = vadd.f32 0.0, %v1176
        %v1178 = vpop.f32.mrb[0].mxu0
        %v1179 = vadd.f32 0.0, %v1178
        %v1180 = vpop.f32.mrb[0].mxu0
        %v1181 = vadd.f32 0.0, %v1180
        %1182 = vmatprep.mubr.bf16.mxu0 %v557
        %1183 = vmatmul.mubr.bf16.gmra.mrb[0].mxu0 %v525
        %v1184 = vpop.f32.mrb[0].mxu0
        %v1185 = vpop.f32.mrb[0].mxu0
        %v1186 = vpop.f32.mrb[0].mxu0
        %v1187 = vadd.f32 0.0, %v1186
        %v1188 = vpop.f32.mrb[0].mxu0
        %1189 = vmatprep.mubr.bf16.mxu0 %v558
        %1190 = vmatmul.mubr.bf16.gmra.mrb[0].mxu0 %v526
        %v1191 = vpop.f32.mrb[0].mxu0
        %v1192 = vadd.f32 0.0, %v1191
        %v1193 = vpop.f32.mrb[0].mxu0
        %v1194 = vadd.f32 0.0, %v1193
        %v1195 = vpop.f32.mrb[0].mxu0
        %v1196 = vadd.f32 0.0, %v1195
        %v1197 = vpop.f32.mrb[0].mxu0
        %v1198 = vadd.f32 0.0, %v1197
        %1199 = vmatprep.mubr.bf16.mxu0 %v559
        %1200 = vmatmul.mubr.bf16.gmra.mrb[0].mxu0 %v527
        %v1201 = vpop.f32.mrb[0].mxu0
        %v1202 = vpop.f32.mrb[0].mxu0
        %v1203 = vpop.f32.mrb[0].mxu0
        %v1204 = vadd.f32 0.0, %v1203
        %v1205 = vpop.f32.mrb[0].mxu0
        %1206 = vmatprep.mubr.bf16.mxu0 %v560
        %1207 = vmatmul.mubr.bf16.gmra.mrb[0].mxu0 %v528
        %v1208 = vpop.f32.mrb[0].mxu0
        %v1209 = vadd.f32 0.0, %v1208
        %v1210 = vpop.f32.mrb[0].mxu0
        %v1211 = vadd.f32 0.0, %v1210
        %v1212 = vpop.f32.mrb[0].mxu0
        %v1213 = vadd.f32 0.0, %v1212
        %v1214 = vpop.f32.mrb[0].mxu0
        %v1215 = vadd.f32 0.0, %v1214
        %1216 = vmatprep.mubr.bf16.mxu0 %v561
        %1217 = vmatmul.mubr.bf16.gmra.mrb[0].mxu0 %v529
        %v1218 = vpop.f32.mrb[0].mxu0
        %v1219 = vpop.f32.mrb[0].mxu0
        %v1220 = vpop.f32.mrb[0].mxu0
        %v1221 = vadd.f32 0.0, %v1220
        %v1222 = vpop.f32.mrb[0].mxu0
        %1223 = vmatprep.mubr.bf16.mxu0 %v562
        %1224 = vmatmul.mubr.bf16.gmra.mrb[0].mxu0 %v530
        %v1225 = vpop.f32.mrb[0].mxu0
        %v1226 = vadd.f32 0.0, %v1225
        %v1227 = vpop.f32.mrb[0].mxu0
        %v1228 = vadd.f32 0.0, %v1227
        %v1229 = vpop.f32.mrb[0].mxu0
        %v1230 = vadd.f32 0.0, %v1229
        %v1231 = vpop.f32.mrb[0].mxu0
        %v1232 = vadd.f32 0.0, %v1231
        %1233 = vmatprep.mubr.bf16.mxu0 %v563
        %1234 = vmatmul.mubr.bf16.gmra.mrb[0].mxu0 %v531
        %v1235 = vpop.f32.mrb[0].mxu0
        %v1236 = vpop.f32.mrb[0].mxu0
        %v1237 = vpop.f32.mrb[0].mxu0
        %v1238 = vadd.f32 0.0, %v1237
        %v1239 = vpop.f32.mrb[0].mxu0
        %1240 = vmatprep.mubr.bf16.mxu0 %v564
        %1241 = vmatmul.mubr.bf16.gmra.mrb[0].mxu0 %v532
        %v1242 = vpop.f32.mrb[0].mxu0
        %v1243 = vadd.f32 0.0, %v1242
        %v1244 = vpop.f32.mrb[0].mxu0
        %v1245 = vadd.f32 0.0, %v1244
        %v1246 = vpop.f32.mrb[0].mxu0
        %v1247 = vadd.f32 0.0, %v1246
        %v1248 = vpop.f32.mrb[0].mxu0
        %v1249 = vadd.f32 0.0, %v1248
        %1250 = vmatprep.mubr.bf16.mxu0 %v565
        %1251 = vmatmul.mubr.bf16.gmra.mrb[0].mxu0 %v533
        %v1252 = vpop.f32.mrb[0].mxu0
        %v1253 = vpop.f32.mrb[0].mxu0
        %v1254 = vpop.f32.mrb[0].mxu0
        %v1255 = vadd.f32 0.0, %v1254
        %v1256 = vpop.f32.mrb[0].mxu0
        %1257 = vmatprep.mubr.bf16.mxu0 %v566
        %1258 = vmatmul.mubr.bf16.gmra.mrb[0].mxu0 %v534
        %v1259 = vpop.f32.mrb[0].mxu0
        %v1260 = vadd.f32 0.0, %v1259
        %v1261 = vpop.f32.mrb[0].mxu0
        %v1262 = vadd.f32 0.0, %v1261
        %v1263 = vpop.f32.mrb[0].mxu0
        %v1264 = vadd.f32 0.0, %v1263
        %v1265 = vpop.f32.mrb[0].mxu0
        %v1266 = vadd.f32 0.0, %v1265
        %1267 = vmatprep.mubr.bf16.mxu0 %v567
        %1268 = vmatmul.mubr.bf16.gmra.mrb[0].mxu0 %v535
        %v1269 = vpop.f32.mrb[0].mxu0
        %v1270 = vpop.f32.mrb[0].mxu0
        %v1271 = vpop.f32.mrb[0].mxu0
        %v1272 = vadd.f32 0.0, %v1271
        %v1273 = vpop.f32.mrb[0].mxu0
        %1274 = vmatprep.mubr.bf16.mxu0 %v568
        %1275 = vmatmul.mubr.bf16.gmra.mrb[0].mxu0 %v536
        %v1276 = vpop.f32.mrb[0].mxu0
        %v1277 = vadd.f32 0.0, %v1276
        %v1278 = vpop.f32.mrb[0].mxu0
        %v1279 = vadd.f32 0.0, %v1278
        %v1280 = vpop.f32.mrb[0].mxu0
        %v1281 = vadd.f32 0.0, %v1280
        %v1282 = vpop.f32.mrb[0].mxu0
        %v1283 = vadd.f32 0.0, %v1282
        %1284 = vmatprep.mubr.bf16.mxu0 %v569
        %1285 = vmatmul.mubr.bf16.gmra.mrb[0].mxu0 %v537
        %v1286 = vpop.f32.mrb[0].mxu0
        %v1287 = vpop.f32.mrb[0].mxu0
        %v1288 = vpop.f32.mrb[0].mxu0
        %v1289 = vadd.f32 0.0, %v1288
        %v1290 = vpop.f32.mrb[0].mxu0
        %1291 = vdwg.mxu0
        %1292 = vmatprep.subr.bf16.mxu0 %v892
        %1293 = vmatpush1.bf16.msra.mxu0 %v891
        %1294 = vmatprep.subr.bf16.mxu0 %v895
        %1295 = vmatpush1.bf16.msra.mxu0 %v894
        %1296 = vmatprep.subr.bf16.mxu0 %v898
        %1297 = vmatpush1.bf16.msra.mxu0 %v897
        %1298 = vmatprep.subr.bf16.mxu0 %v901
        %1299 = vmatpush1.bf16.msra.mxu0 %v900
        %1300 = vmatprep.subr.bf16.mxu0 %v904
        %1301 = vmatpush1.bf16.msra.mxu0 %v903
        %1302 = vmatprep.subr.bf16.mxu0 %v907
        %1303 = vmatpush1.bf16.msra.mxu0 %v906
        %1304 = vmatprep.subr.bf16.mxu0 %v910
        %1305 = vmatpush1.bf16.msra.mxu0 %v909
        %1306 = vmatprep.subr.bf16.mxu0 %v913
        %1307 = vmatpush1.bf16.msra.mxu0 %v912
        %1308 = vmatprep.subr.bf16.mxu0 0
        %1309 = vmatpush1.bf16.msra.mxu0 0
        %1310 = vmatprep.subr.bf16.mxu0 0
        %1311 = vmatpush1.bf16.msra.mxu0 0
        %1312 = vmatprep.subr.bf16.mxu0 0
        %1313 = vmatpush1.bf16.msra.mxu0 0
        %1314 = vmatprep.subr.bf16.mxu0 0
        %1315 = vmatpush1.bf16.msra.mxu0 0
        %1316 = vmatprep.subr.bf16.mxu0 0
        %1317 = vmatpush1.bf16.msra.mxu0 0
        %1318 = vmatprep.subr.bf16.mxu0 0
        %1319 = vmatpush1.bf16.msra.mxu0 0
        %1320 = vmatprep.subr.bf16.mxu0 0
        %1321 = vmatpush1.bf16.msra.mxu0 0
        %1322 = vmatprep.subr.bf16.mxu0 0
        %1323 = vmatpush1.bf16.msra.mxu0 0
        %1324 = vmatprep.mubr.bf16.mxu0 0
        %1325 = vmatmul.mubr.bf16.gmra.mrb[0].mxu0 %v571
        %v1326 = vpop.f32.mrb[0].mxu0
        %v1327 = vadd.f32 %v1022, %v1326
        %v1328 = vpop.f32.mrb[0].mxu0
        %v1329 = vadd.f32 %v1024, %v1328
        %v1330 = vpop.f32.mrb[0].mxu0
        %v1331 = vadd.f32 %v1026, %v1330
        %v1332 = vpop.f32.mrb[0].mxu0
        %v1333 = vadd.f32 %v1028, %v1332
        %1334 = vmatprep.mubr.bf16.mxu0 0
        %1335 = vmatmul.mubr.bf16.gmra.mrb[0].mxu0 %v572
        %v1336 = vpop.f32.mrb[0].mxu0
        %v1337 = vpop.f32.mrb[0].mxu0
        %v1338 = vpop.f32.mrb[0].mxu0
        %v1339 = vadd.f32 %v1034, %v1338
        %v1340 = vpop.f32.mrb[0].mxu0
        %1341 = vmatprep.mubr.bf16.mxu0 0
        %1342 = vmatmul.mubr.bf16.gmra.mrb[0].mxu0 %v573
        %v1343 = vpop.f32.mrb[0].mxu0
        %v1344 = vadd.f32 %v1039, %v1343
        %v1345 = vpop.f32.mrb[0].mxu0
        %v1346 = vadd.f32 %v1041, %v1345
        %v1347 = vpop.f32.mrb[0].mxu0
        %v1348 = vadd.f32 %v1043, %v1347
        %v1349 = vpop.f32.mrb[0].mxu0
        %v1350 = vadd.f32 %v1045, %v1349
        %1351 = vmatprep.mubr.bf16.mxu0 0
        %1352 = vmatmul.mubr.bf16.gmra.mrb[0].mxu0 %v574
        %v1353 = vpop.f32.mrb[0].mxu0
        %v1354 = vpop.f32.mrb[0].mxu0
        %v1355 = vpop.f32.mrb[0].mxu0
        %v1356 = vadd.f32 %v1051, %v1355
        %v1357 = vpop.f32.mrb[0].mxu0
        %1358 = vmatprep.mubr.bf16.mxu0 0
        %1359 = vmatmul.mubr.bf16.gmra.mrb[0].mxu0 %v575
        %v1360 = vpop.f32.mrb[0].mxu0
        %v1361 = vadd.f32 %v1056, %v1360
        %v1362 = vpop.f32.mrb[0].mxu0
        %v1363 = vadd.f32 %v1058, %v1362
        %v1364 = vpop.f32.mrb[0].mxu0
        %v1365 = vadd.f32 %v1060, %v1364
        %v1366 = vpop.f32.mrb[0].mxu0
        %v1367 = vadd.f32 %v1062, %v1366
        %1368 = vmatprep.mubr.bf16.mxu0 0
        %1369 = vmatmul.mubr.bf16.gmra.mrb[0].mxu0 %v576
        %v1370 = vpop.f32.mrb[0].mxu0
        %v1371 = vpop.f32.mrb[0].mxu0
        %v1372 = vpop.f32.mrb[0].mxu0
        %v1373 = vadd.f32 %v1068, %v1372
        %v1374 = vpop.f32.mrb[0].mxu0
        %1375 = vmatprep.mubr.bf16.mxu0 0
        %1376 = vmatmul.mubr.bf16.gmra.mrb[0].mxu0 %v577
        %v1377 = vpop.f32.mrb[0].mxu0
        %v1378 = vadd.f32 %v1073, %v1377
        %v1379 = vpop.f32.mrb[0].mxu0
        %v1380 = vadd.f32 %v1075, %v1379
        %v1381 = vpop.f32.mrb[0].mxu0
        %v1382 = vadd.f32 %v1077, %v1381
        %v1383 = vpop.f32.mrb[0].mxu0
        %v1384 = vadd.f32 %v1079, %v1383
        %1385 = vmatprep.mubr.bf16.mxu0 0
        %1386 = vmatmul.mubr.bf16.gmra.mrb[0].mxu0 %v578
        %v1387 = vpop.f32.mrb[0].mxu0
        %v1388 = vpop.f32.mrb[0].mxu0
        %v1389 = vpop.f32.mrb[0].mxu0
        %v1390 = vadd.f32 %v1085, %v1389
        %v1391 = vpop.f32.mrb[0].mxu0
        %1392 = vmatprep.mubr.bf16.mxu0 0
        %1393 = vmatmul.mubr.bf16.gmra.mrb[0].mxu0 %v579
        %v1394 = vpop.f32.mrb[0].mxu0
        %v1395 = vadd.f32 %v1090, %v1394
        %v1396 = vpop.f32.mrb[0].mxu0
        %v1397 = vadd.f32 %v1092, %v1396
        %v1398 = vpop.f32.mrb[0].mxu0
        %v1399 = vadd.f32 %v1094, %v1398
        %v1400 = vpop.f32.mrb[0].mxu0
        %v1401 = vadd.f32 %v1096, %v1400
        %1402 = vmatprep.mubr.bf16.mxu0 0
        %1403 = vmatmul.mubr.bf16.gmra.mrb[0].mxu0 %v580
        %v1404 = vpop.f32.mrb[0].mxu0
        %v1405 = vpop.f32.mrb[0].mxu0
        %v1406 = vpop.f32.mrb[0].mxu0
        %v1407 = vadd.f32 %v1102, %v1406
        %v1408 = vpop.f32.mrb[0].mxu0
        %1409 = vmatprep.mubr.bf16.mxu0 0
        %1410 = vmatmul.mubr.bf16.gmra.mrb[0].mxu0 %v581
        %v1411 = vpop.f32.mrb[0].mxu0
        %v1412 = vadd.f32 %v1107, %v1411
        %v1413 = vpop.f32.mrb[0].mxu0
        %v1414 = vadd.f32 %v1109, %v1413
        %v1415 = vpop.f32.mrb[0].mxu0
        %v1416 = vadd.f32 %v1111, %v1415
        %v1417 = vpop.f32.mrb[0].mxu0
        %v1418 = vadd.f32 %v1113, %v1417
        %1419 = vmatprep.mubr.bf16.mxu0 0
        %1420 = vmatmul.mubr.bf16.gmra.mrb[0].mxu0 %v582
        %v1421 = vpop.f32.mrb[0].mxu0
        %v1422 = vpop.f32.mrb[0].mxu0
        %v1423 = vpop.f32.mrb[0].mxu0
        %v1424 = vadd.f32 %v1119, %v1423
        %v1425 = vpop.f32.mrb[0].mxu0
        %1426 = vmatprep.mubr.bf16.mxu0 0
        %1427 = vmatmul.mubr.bf16.gmra.mrb[0].mxu0 %v583
        %v1428 = vpop.f32.mrb[0].mxu0
        %v1429 = vadd.f32 %v1124, %v1428
        %v1430 = vpop.f32.mrb[0].mxu0
        %v1431 = vadd.f32 %v1126, %v1430
        %v1432 = vpop.f32.mrb[0].mxu0
        %v1433 = vadd.f32 %v1128, %v1432
        %v1434 = vpop.f32.mrb[0].mxu0
        %v1435 = vadd.f32 %v1130, %v1434
        %1436 = vmatprep.mubr.bf16.mxu0 0
        %1437 = vmatmul.mubr.bf16.gmra.mrb[0].mxu0 %v584
        %v1438 = vpop.f32.mrb[0].mxu0
        %v1439 = vpop.f32.mrb[0].mxu0
        %v1440 = vpop.f32.mrb[0].mxu0
        %v1441 = vadd.f32 %v1136, %v1440
        %v1442 = vpop.f32.mrb[0].mxu0
        %1443 = vmatprep.mubr.bf16.mxu0 0
        %1444 = vmatmul.mubr.bf16.gmra.mrb[0].mxu0 %v585
        %v1445 = vpop.f32.mrb[0].mxu0
        %v1446 = vadd.f32 %v1141, %v1445
        %v1447 = vpop.f32.mrb[0].mxu0
        %v1448 = vadd.f32 %v1143, %v1447
        %v1449 = vpop.f32.mrb[0].mxu0
        %v1450 = vadd.f32 %v1145, %v1449
        %v1451 = vpop.f32.mrb[0].mxu0
        %v1452 = vadd.f32 %v1147, %v1451
        %1453 = vmatprep.mubr.bf16.mxu0 0
        %1454 = vmatmul.mubr.bf16.gmra.mrb[0].mxu0 %v586
        %v1455 = vpop.f32.mrb[0].mxu0
        %v1456 = vpop.f32.mrb[0].mxu0
        %v1457 = vpop.f32.mrb[0].mxu0
        %v1458 = vadd.f32 %v1153, %v1457
        %v1459 = vpop.f32.mrb[0].mxu0
        %1460 = vmatprep.mubr.bf16.mxu0 0
        %1461 = vmatmul.mubr.bf16.gmra.mrb[0].mxu0 %v587
        %v1462 = vpop.f32.mrb[0].mxu0
        %v1463 = vadd.f32 %v1158, %v1462
        %v1464 = vpop.f32.mrb[0].mxu0
        %v1465 = vadd.f32 %v1160, %v1464
        %v1466 = vpop.f32.mrb[0].mxu0
        %v1467 = vadd.f32 %v1162, %v1466
        %v1468 = vpop.f32.mrb[0].mxu0
        %v1469 = vadd.f32 %v1164, %v1468
        %1470 = vmatprep.mubr.bf16.mxu0 0
        %1471 = vmatmul.mubr.bf16.gmra.mrb[0].mxu0 %v588
        %v1472 = vpop.f32.mrb[0].mxu0
        %v1473 = vpop.f32.mrb[0].mxu0
        %v1474 = vpop.f32.mrb[0].mxu0
        %v1475 = vadd.f32 %v1170, %v1474
        %v1476 = vpop.f32.mrb[0].mxu0
        %1477 = vmatprep.mubr.bf16.mxu0 0
        %1478 = vmatmul.mubr.bf16.gmra.mrb[0].mxu0 %v589
        %v1479 = vpop.f32.mrb[0].mxu0
        %v1480 = vadd.f32 %v1175, %v1479
        %v1481 = vpop.f32.mrb[0].mxu0
        %v1482 = vadd.f32 %v1177, %v1481
        %v1483 = vpop.f32.mrb[0].mxu0
        %v1484 = vadd.f32 %v1179, %v1483
        %v1485 = vpop.f32.mrb[0].mxu0
        %v1486 = vadd.f32 %v1181, %v1485
        %1487 = vmatprep.mubr.bf16.mxu0 0
        %1488 = vmatmul.mubr.bf16.gmra.mrb[0].mxu0 %v590
        %v1489 = vpop.f32.mrb[0].mxu0
        %v1490 = vpop.f32.mrb[0].mxu0
        %v1491 = vpop.f32.mrb[0].mxu0
        %v1492 = vadd.f32 %v1187, %v1491
        %v1493 = vpop.f32.mrb[0].mxu0
        %1494 = vmatprep.mubr.bf16.mxu0 0
        %1495 = vmatmul.mubr.bf16.gmra.mrb[0].mxu0 %v591
        %v1496 = vpop.f32.mrb[0].mxu0
        %v1497 = vadd.f32 %v1192, %v1496
        %v1498 = vpop.f32.mrb[0].mxu0
        %v1499 = vadd.f32 %v1194, %v1498
        %v1500 = vpop.f32.mrb[0].mxu0
        %v1501 = vadd.f32 %v1196, %v1500
        %v1502 = vpop.f32.mrb[0].mxu0
        %v1503 = vadd.f32 %v1198, %v1502
        %1504 = vmatprep.mubr.bf16.mxu0 0
        %1505 = vmatmul.mubr.bf16.gmra.mrb[0].mxu0 %v592
        %v1506 = vpop.f32.mrb[0].mxu0
        %v1507 = vpop.f32.mrb[0].mxu0
        %v1508 = vpop.f32.mrb[0].mxu0
        %v1509 = vadd.f32 %v1204, %v1508
        %v1510 = vpop.f32.mrb[0].mxu0
        %1511 = vmatprep.mubr.bf16.mxu0 0
        %1512 = vmatmul.mubr.bf16.gmra.mrb[0].mxu0 %v593
        %v1513 = vpop.f32.mrb[0].mxu0
        %v1514 = vadd.f32 %v1209, %v1513
        %v1515 = vpop.f32.mrb[0].mxu0
        %v1516 = vadd.f32 %v1211, %v1515
        %v1517 = vpop.f32.mrb[0].mxu0
        %v1518 = vadd.f32 %v1213, %v1517
        %v1519 = vpop.f32.mrb[0].mxu0
        %v1520 = vadd.f32 %v1215, %v1519
        %1521 = vmatprep.mubr.bf16.mxu0 0
        %1522 = vmatmul.mubr.bf16.gmra.mrb[0].mxu0 %v594
        %v1523 = vpop.f32.mrb[0].mxu0
        %v1524 = vpop.f32.mrb[0].mxu0
        %v1525 = vpop.f32.mrb[0].mxu0
        %v1526 = vadd.f32 %v1221, %v1525
        %v1527 = vpop.f32.mrb[0].mxu0
        %1528 = vmatprep.mubr.bf16.mxu0 0
        %1529 = vmatmul.mubr.bf16.gmra.mrb[0].mxu0 %v595
        %v1530 = vpop.f32.mrb[0].mxu0
        %v1531 = vadd.f32 %v1226, %v1530
        %v1532 = vpop.f32.mrb[0].mxu0
        %v1533 = vadd.f32 %v1228, %v1532
        %v1534 = vpop.f32.mrb[0].mxu0
        %v1535 = vadd.f32 %v1230, %v1534
        %v1536 = vpop.f32.mrb[0].mxu0
        %v1537 = vadd.f32 %v1232, %v1536
        %1538 = vmatprep.mubr.bf16.mxu0 0
        %1539 = vmatmul.mubr.bf16.gmra.mrb[0].mxu0 %v596
        %v1540 = vpop.f32.mrb[0].mxu0
        %v1541 = vpop.f32.mrb[0].mxu0
        %v1542 = vpop.f32.mrb[0].mxu0
        %v1543 = vadd.f32 %v1238, %v1542
        %v1544 = vpop.f32.mrb[0].mxu0
        %1545 = vmatprep.mubr.bf16.mxu0 0
        %1546 = vmatmul.mubr.bf16.gmra.mrb[0].mxu0 %v597
        %v1547 = vpop.f32.mrb[0].mxu0
        %v1548 = vadd.f32 %v1243, %v1547
        %v1549 = vpop.f32.mrb[0].mxu0
        %v1550 = vadd.f32 %v1245, %v1549
        %v1551 = vpop.f32.mrb[0].mxu0
        %v1552 = vadd.f32 %v1247, %v1551
        %v1553 = vpop.f32.mrb[0].mxu0
        %v1554 = vadd.f32 %v1249, %v1553
        %1555 = vmatprep.mubr.bf16.mxu0 0
        %1556 = vmatmul.mubr.bf16.gmra.mrb[0].mxu0 %v598
        %v1557 = vpop.f32.mrb[0].mxu0
        %v1558 = vpop.f32.mrb[0].mxu0
        %v1559 = vpop.f32.mrb[0].mxu0
        %v1560 = vadd.f32 %v1255, %v1559
        %v1561 = vpop.f32.mrb[0].mxu0
        %1562 = vmatprep.mubr.bf16.mxu0 0
        %1563 = vmatmul.mubr.bf16.gmra.mrb[0].mxu0 %v599
        %v1564 = vpop.f32.mrb[0].mxu0
        %v1565 = vadd.f32 %v1260, %v1564
        %v1566 = vpop.f32.mrb[0].mxu0
        %v1567 = vadd.f32 %v1262, %v1566
        %v1568 = vpop.f32.mrb[0].mxu0
        %v1569 = vadd.f32 %v1264, %v1568
        %v1570 = vpop.f32.mrb[0].mxu0
        %v1571 = vadd.f32 %v1266, %v1570
        %1572 = vmatprep.mubr.bf16.mxu0 0
        %1573 = vmatmul.mubr.bf16.gmra.mrb[0].mxu0 %v600
        %v1574 = vpop.f32.mrb[0].mxu0
        %v1575 = vpop.f32.mrb[0].mxu0
        %v1576 = vpop.f32.mrb[0].mxu0
        %v1577 = vadd.f32 %v1272, %v1576
        %v1578 = vpop.f32.mrb[0].mxu0
        %1579 = vmatprep.mubr.bf16.mxu0 0
        %1580 = vmatmul.mubr.bf16.gmra.mrb[0].mxu0 %v601
        %v1581 = vpop.f32.mrb[0].mxu0
        %v1582 = vadd.f32 %v1277, %v1581
        %v1583 = vpop.f32.mrb[0].mxu0
        %v1584 = vadd.f32 %v1279, %v1583
        %v1585 = vpop.f32.mrb[0].mxu0
        %v1586 = vadd.f32 %v1281, %v1585
        %v1587 = vpop.f32.mrb[0].mxu0
        %v1588 = vadd.f32 %v1283, %v1587
        %1589 = vmatprep.mubr.bf16.mxu0 0
        %1590 = vmatmul.mubr.bf16.gmra.mrb[0].mxu0 %v602
        %v1591 = vpop.f32.mrb[0].mxu0
        %v1592 = vpop.f32.mrb[0].mxu0
        %v1593 = vpop.f32.mrb[0].mxu0
        %v1594 = vadd.f32 %v1289, %v1593
        %v1595 = vpop.f32.mrb[0].mxu0
        %1596 = vdwg.mxu0
        %1597 = vmatprep.subr.bf16.mxu0 0
        %1598 = vmatpush1.bf16.msra.mxu0 %v845
        %1599 = vmatprep.subr.bf16.mxu0 0
        %1600 = vmatpush1.bf16.msra.mxu0 %v848
        %1601 = vmatprep.subr.bf16.mxu0 0
        %1602 = vmatpush1.bf16.msra.mxu0 %v851
        %1603 = vmatprep.subr.bf16.mxu0 0
        %1604 = vmatpush1.bf16.msra.mxu0 %v854
        %1605 = vmatprep.subr.bf16.mxu0 0
        %1606 = vmatpush1.bf16.msra.mxu0 %v857
        %1607 = vmatprep.subr.bf16.mxu0 0
        %1608 = vmatpush1.bf16.msra.mxu0 %v860
        %1609 = vmatprep.subr.bf16.mxu0 0
        %1610 = vmatpush1.bf16.msra.mxu0 %v863
        %1611 = vmatprep.subr.bf16.mxu0 0
        %1612 = vmatpush1.bf16.msra.mxu0 %v866
        %1613 = vmatprep.subr.bf16.mxu0 0
        %1614 = vmatpush1.bf16.msra.mxu0 %v869
        %1615 = vmatprep.subr.bf16.mxu0 0
        %1616 = vmatpush1.bf16.msra.mxu0 %v872
        %1617 = vmatprep.subr.bf16.mxu0 0
        %1618 = vmatpush1.bf16.msra.mxu0 %v875
        %1619 = vmatprep.subr.bf16.mxu0 0
        %1620 = vmatpush1.bf16.msra.mxu0 %v878
        %1621 = vmatprep.subr.bf16.mxu0 0
        %1622 = vmatpush1.bf16.msra.mxu0 %v881
        %1623 = vmatprep.subr.bf16.mxu0 0
        %1624 = vmatpush1.bf16.msra.mxu0 %v884
        %1625 = vmatprep.subr.bf16.mxu0 0
        %1626 = vmatpush1.bf16.msra.mxu0 %v887
        %1627 = vmatprep.subr.bf16.mxu0 0
        %1628 = vmatpush1.bf16.msra.mxu0 %v890
        %1629 = vmatprep.mubr.bf16.mxu0 %v538
        %1630 = vmatmul.mubr.bf16.gmra.mrb[0].mxu0 %v506
        %v1631 = vpop.f32.mrb[0].mxu0
        %v1632 = vadd.f32 0.0, %v1631
        %v1633 = vpop.f32.mrb[0].mxu0
        %v1634 = vpop.f32.mrb[0].mxu0
        %v1635 = vadd.f32 0.0, %v1634
        %v1636 = vpop.f32.mrb[0].mxu0
        %1637 = vmatprep.mubr.bf16.mxu0 %v539
        %1638 = vmatmul.mubr.bf16.gmra.mrb[0].mxu0 %v507
        %v1639 = vpop.f32.mrb[0].mxu0
        %v1640 = vadd.f32 0.0, %v1639
        %v1641 = vpop.f32.mrb[0].mxu0
        %v1642 = vpop.f32.mrb[0].mxu0
        %v1643 = vpop.f32.mrb[0].mxu0
        %1644 = vmatprep.mubr.bf16.mxu0 %v540
        %1645 = vmatmul.mubr.bf16.gmra.mrb[0].mxu0 %v508
        %v1646 = vpop.f32.mrb[0].mxu0
        %v1647 = vadd.f32 0.0, %v1646
        %v1648 = vpop.f32.mrb[0].mxu0
        %v1649 = vpop.f32.mrb[0].mxu0
        %v1650 = vadd.f32 0.0, %v1649
        %v1651 = vpop.f32.mrb[0].mxu0
        %1652 = vmatprep.mubr.bf16.mxu0 %v541
        %1653 = vmatmul.mubr.bf16.gmra.mrb[0].mxu0 %v509
        %v1654 = vpop.f32.mrb[0].mxu0
        %v1655 = vadd.f32 0.0, %v1654
        %v1656 = vpop.f32.mrb[0].mxu0
        %v1657 = vpop.f32.mrb[0].mxu0
        %v1658 = vpop.f32.mrb[0].mxu0
        %1659 = vmatprep.mubr.bf16.mxu0 %v542
        %1660 = vmatmul.mubr.bf16.gmra.mrb[0].mxu0 %v510
        %v1661 = vpop.f32.mrb[0].mxu0
        %v1662 = vadd.f32 0.0, %v1661
        %v1663 = vpop.f32.mrb[0].mxu0
        %v1664 = vpop.f32.mrb[0].mxu0
        %v1665 = vadd.f32 0.0, %v1664
        %v1666 = vpop.f32.mrb[0].mxu0
        %1667 = vmatprep.mubr.bf16.mxu0 %v543
        %1668 = vmatmul.mubr.bf16.gmra.mrb[0].mxu0 %v511
        %v1669 = vpop.f32.mrb[0].mxu0
        %v1670 = vadd.f32 0.0, %v1669
        %v1671 = vpop.f32.mrb[0].mxu0
        %v1672 = vpop.f32.mrb[0].mxu0
        %v1673 = vpop.f32.mrb[0].mxu0
        %1674 = vmatprep.mubr.bf16.mxu0 %v544
        %1675 = vmatmul.mubr.bf16.gmra.mrb[0].mxu0 %v512
        %v1676 = vpop.f32.mrb[0].mxu0
        %v1677 = vadd.f32 0.0, %v1676
        %v1678 = vpop.f32.mrb[0].mxu0
        %v1679 = vpop.f32.mrb[0].mxu0
        %v1680 = vadd.f32 0.0, %v1679
        %v1681 = vpop.f32.mrb[0].mxu0
        %1682 = vmatprep.mubr.bf16.mxu0 %v545
        %1683 = vmatmul.mubr.bf16.gmra.mrb[0].mxu0 %v513
        %v1684 = vpop.f32.mrb[0].mxu0
        %v1685 = vadd.f32 0.0, %v1684
        %v1686 = vpop.f32.mrb[0].mxu0
        %v1687 = vpop.f32.mrb[0].mxu0
        %v1688 = vpop.f32.mrb[0].mxu0
        %1689 = vmatprep.mubr.bf16.mxu0 %v546
        %1690 = vmatmul.mubr.bf16.gmra.mrb[0].mxu0 %v514
        %v1691 = vpop.f32.mrb[0].mxu0
        %v1692 = vadd.f32 0.0, %v1691
        %v1693 = vpop.f32.mrb[0].mxu0
        %v1694 = vpop.f32.mrb[0].mxu0
        %v1695 = vadd.f32 0.0, %v1694
        %v1696 = vpop.f32.mrb[0].mxu0
        %1697 = vmatprep.mubr.bf16.mxu0 %v547
        %1698 = vmatmul.mubr.bf16.gmra.mrb[0].mxu0 %v515
        %v1699 = vpop.f32.mrb[0].mxu0
        %v1700 = vadd.f32 0.0, %v1699
        %v1701 = vpop.f32.mrb[0].mxu0
        %v1702 = vpop.f32.mrb[0].mxu0
        %v1703 = vpop.f32.mrb[0].mxu0
        %1704 = vmatprep.mubr.bf16.mxu0 %v548
        %1705 = vmatmul.mubr.bf16.gmra.mrb[0].mxu0 %v516
        %v1706 = vpop.f32.mrb[0].mxu0
        %v1707 = vadd.f32 0.0, %v1706
        %v1708 = vpop.f32.mrb[0].mxu0
        %v1709 = vpop.f32.mrb[0].mxu0
        %v1710 = vadd.f32 0.0, %v1709
        %v1711 = vpop.f32.mrb[0].mxu0
        %1712 = vmatprep.mubr.bf16.mxu0 %v549
        %1713 = vmatmul.mubr.bf16.gmra.mrb[0].mxu0 %v517
        %v1714 = vpop.f32.mrb[0].mxu0
        %v1715 = vadd.f32 0.0, %v1714
        %v1716 = vpop.f32.mrb[0].mxu0
        %v1717 = vpop.f32.mrb[0].mxu0
        %v1718 = vpop.f32.mrb[0].mxu0
        %1719 = vmatprep.mubr.bf16.mxu0 %v550
        %1720 = vmatmul.mubr.bf16.gmra.mrb[0].mxu0 %v518
        %v1721 = vpop.f32.mrb[0].mxu0
        %v1722 = vadd.f32 0.0, %v1721
        %v1723 = vpop.f32.mrb[0].mxu0
        %v1724 = vpop.f32.mrb[0].mxu0
        %v1725 = vadd.f32 0.0, %v1724
        %v1726 = vpop.f32.mrb[0].mxu0
        %1727 = vmatprep.mubr.bf16.mxu0 %v551
        %1728 = vmatmul.mubr.bf16.gmra.mrb[0].mxu0 %v519
        %v1729 = vpop.f32.mrb[0].mxu0
        %v1730 = vadd.f32 0.0, %v1729
        %v1731 = vpop.f32.mrb[0].mxu0
        %v1732 = vpop.f32.mrb[0].mxu0
        %v1733 = vpop.f32.mrb[0].mxu0
        %1734 = vmatprep.mubr.bf16.mxu0 %v552
        %1735 = vmatmul.mubr.bf16.gmra.mrb[0].mxu0 %v520
        %v1736 = vpop.f32.mrb[0].mxu0
        %v1737 = vadd.f32 0.0, %v1736
        %v1738 = vpop.f32.mrb[0].mxu0
        %v1739 = vpop.f32.mrb[0].mxu0
        %v1740 = vadd.f32 0.0, %v1739
        %v1741 = vpop.f32.mrb[0].mxu0
        %1742 = vmatprep.mubr.bf16.mxu0 %v553
        %1743 = vmatmul.mubr.bf16.gmra.mrb[0].mxu0 %v521
        %v1744 = vpop.f32.mrb[0].mxu0
        %v1745 = vadd.f32 0.0, %v1744
        %v1746 = vpop.f32.mrb[0].mxu0
        %v1747 = vpop.f32.mrb[0].mxu0
        %v1748 = vpop.f32.mrb[0].mxu0
        %1749 = vmatprep.mubr.bf16.mxu0 %v554
        %1750 = vmatmul.mubr.bf16.gmra.mrb[0].mxu0 %v522
        %v1751 = vpop.f32.mrb[0].mxu0
        %v1752 = vadd.f32 0.0, %v1751
        %v1753 = vpop.f32.mrb[0].mxu0
        %v1754 = vpop.f32.mrb[0].mxu0
        %v1755 = vadd.f32 0.0, %v1754
        %v1756 = vpop.f32.mrb[0].mxu0
        %1757 = vmatprep.mubr.bf16.mxu0 %v555
        %1758 = vmatmul.mubr.bf16.gmra.mrb[0].mxu0 %v523
        %v1759 = vpop.f32.mrb[0].mxu0
        %v1760 = vadd.f32 0.0, %v1759
        %v1761 = vpop.f32.mrb[0].mxu0
        %v1762 = vpop.f32.mrb[0].mxu0
        %v1763 = vpop.f32.mrb[0].mxu0
        %1764 = vmatprep.mubr.bf16.mxu0 %v556
        %1765 = vmatmul.mubr.bf16.gmra.mrb[0].mxu0 %v524
        %v1766 = vpop.f32.mrb[0].mxu0
        %v1767 = vadd.f32 0.0, %v1766
        %v1768 = vpop.f32.mrb[0].mxu0
        %v1769 = vpop.f32.mrb[0].mxu0
        %v1770 = vadd.f32 0.0, %v1769
        %v1771 = vpop.f32.mrb[0].mxu0
        %1772 = vmatprep.mubr.bf16.mxu0 %v557
        %1773 = vmatmul.mubr.bf16.gmra.mrb[0].mxu0 %v525
        %v1774 = vpop.f32.mrb[0].mxu0
        %v1775 = vadd.f32 0.0, %v1774
        %v1776 = vpop.f32.mrb[0].mxu0
        %v1777 = vpop.f32.mrb[0].mxu0
        %v1778 = vpop.f32.mrb[0].mxu0
        %1779 = vmatprep.mubr.bf16.mxu0 %v558
        %1780 = vmatmul.mubr.bf16.gmra.mrb[0].mxu0 %v526
        %v1781 = vpop.f32.mrb[0].mxu0
        %v1782 = vadd.f32 0.0, %v1781
        %v1783 = vpop.f32.mrb[0].mxu0
        %v1784 = vpop.f32.mrb[0].mxu0
        %v1785 = vadd.f32 0.0, %v1784
        %v1786 = vpop.f32.mrb[0].mxu0
        %1787 = vmatprep.mubr.bf16.mxu0 %v559
        %1788 = vmatmul.mubr.bf16.gmra.mrb[0].mxu0 %v527
        %v1789 = vpop.f32.mrb[0].mxu0
        %v1790 = vadd.f32 0.0, %v1789
        %v1791 = vpop.f32.mrb[0].mxu0
        %v1792 = vpop.f32.mrb[0].mxu0
        %v1793 = vpop.f32.mrb[0].mxu0
        %1794 = vmatprep.mubr.bf16.mxu0 %v560
        %1795 = vmatmul.mubr.bf16.gmra.mrb[0].mxu0 %v528
        %v1796 = vpop.f32.mrb[0].mxu0
        %v1797 = vadd.f32 0.0, %v1796
        %v1798 = vpop.f32.mrb[0].mxu0
        %v1799 = vpop.f32.mrb[0].mxu0
        %v1800 = vadd.f32 0.0, %v1799
        %v1801 = vpop.f32.mrb[0].mxu0
        %1802 = vmatprep.mubr.bf16.mxu0 %v561
        %1803 = vmatmul.mubr.bf16.gmra.mrb[0].mxu0 %v529
        %v1804 = vpop.f32.mrb[0].mxu0
        %v1805 = vadd.f32 0.0, %v1804
        %v1806 = vpop.f32.mrb[0].mxu0
        %v1807 = vpop.f32.mrb[0].mxu0
        %v1808 = vpop.f32.mrb[0].mxu0
        %1809 = vmatprep.mubr.bf16.mxu0 %v562
        %1810 = vmatmul.mubr.bf16.gmra.mrb[0].mxu0 %v530
        %v1811 = vpop.f32.mrb[0].mxu0
        %v1812 = vadd.f32 0.0, %v1811
        %v1813 = vpop.f32.mrb[0].mxu0
        %v1814 = vpop.f32.mrb[0].mxu0
        %v1815 = vadd.f32 0.0, %v1814
        %v1816 = vpop.f32.mrb[0].mxu0
        %1817 = vmatprep.mubr.bf16.mxu0 %v563
        %1818 = vmatmul.mubr.bf16.gmra.mrb[0].mxu0 %v531
        %v1819 = vpop.f32.mrb[0].mxu0
        %v1820 = vadd.f32 0.0, %v1819
        %v1821 = vpop.f32.mrb[0].mxu0
        %v1822 = vpop.f32.mrb[0].mxu0
        %v1823 = vpop.f32.mrb[0].mxu0
        %1824 = vmatprep.mubr.bf16.mxu0 %v564
        %1825 = vmatmul.mubr.bf16.gmra.mrb[0].mxu0 %v532
        %v1826 = vpop.f32.mrb[0].mxu0
        %v1827 = vadd.f32 0.0, %v1826
        %v1828 = vpop.f32.mrb[0].mxu0
        %v1829 = vpop.f32.mrb[0].mxu0
        %v1830 = vadd.f32 0.0, %v1829
        %v1831 = vpop.f32.mrb[0].mxu0
        %1832 = vmatprep.mubr.bf16.mxu0 %v565
        %1833 = vmatmul.mubr.bf16.gmra.mrb[0].mxu0 %v533
        %v1834 = vpop.f32.mrb[0].mxu0
        %v1835 = vadd.f32 0.0, %v1834
        %v1836 = vpop.f32.mrb[0].mxu0
        %v1837 = vpop.f32.mrb[0].mxu0
        %v1838 = vpop.f32.mrb[0].mxu0
        %1839 = vmatprep.mubr.bf16.mxu0 %v566
        %1840 = vmatmul.mubr.bf16.gmra.mrb[0].mxu0 %v534
        %v1841 = vpop.f32.mrb[0].mxu0
        %v1842 = vadd.f32 0.0, %v1841
        %v1843 = vpop.f32.mrb[0].mxu0
        %v1844 = vpop.f32.mrb[0].mxu0
        %v1845 = vadd.f32 0.0, %v1844
        %v1846 = vpop.f32.mrb[0].mxu0
        %1847 = vmatprep.mubr.bf16.mxu0 %v567
        %1848 = vmatmul.mubr.bf16.gmra.mrb[0].mxu0 %v535
        %v1849 = vpop.f32.mrb[0].mxu0
        %v1850 = vadd.f32 0.0, %v1849
        %v1851 = vpop.f32.mrb[0].mxu0
        %v1852 = vpop.f32.mrb[0].mxu0
        %v1853 = vpop.f32.mrb[0].mxu0
        %1854 = vmatprep.mubr.bf16.mxu0 %v568
        %1855 = vmatmul.mubr.bf16.gmra.mrb[0].mxu0 %v536
        %v1856 = vpop.f32.mrb[0].mxu0
        %v1857 = vadd.f32 0.0, %v1856
        %v1858 = vpop.f32.mrb[0].mxu0
        %v1859 = vpop.f32.mrb[0].mxu0
        %v1860 = vadd.f32 0.0, %v1859
        %v1861 = vpop.f32.mrb[0].mxu0
        %1862 = vmatprep.mubr.bf16.mxu0 %v569
        %1863 = vmatmul.mubr.bf16.gmra.mrb[0].mxu0 %v537
        %v1864 = vpop.f32.mrb[0].mxu0
        %v1865 = vadd.f32 0.0, %v1864
        %v1866 = vpop.f32.mrb[0].mxu0
        %v1867 = vpop.f32.mrb[0].mxu0
        %v1868 = vpop.f32.mrb[0].mxu0
        %1869 = vdwg.mxu0
        %1870 = vmatprep.subr.bf16.mxu0 0
        %1871 = vmatpush1.bf16.msra.mxu0 %v893
        %1872 = vmatprep.subr.bf16.mxu0 0
        %1873 = vmatpush1.bf16.msra.mxu0 %v896
        %1874 = vmatprep.subr.bf16.mxu0 0
        %1875 = vmatpush1.bf16.msra.mxu0 %v899
        %1876 = vmatprep.subr.bf16.mxu0 0
        %1877 = vmatpush1.bf16.msra.mxu0 %v902
        %1878 = vmatprep.subr.bf16.mxu0 0
        %1879 = vmatpush1.bf16.msra.mxu0 %v905
        %1880 = vmatprep.subr.bf16.mxu0 0
        %1881 = vmatpush1.bf16.msra.mxu0 %v908
        %1882 = vmatprep.subr.bf16.mxu0 0
        %1883 = vmatpush1.bf16.msra.mxu0 %v911
        %1884 = vmatprep.subr.bf16.mxu0 0
        %1885 = vmatpush1.bf16.msra.mxu0 %v914
        %1886 = vmatprep.subr.bf16.mxu0 0
        %1887 = vmatpush1.bf16.msra.mxu0 0
        %1888 = vmatprep.subr.bf16.mxu0 0
        %1889 = vmatpush1.bf16.msra.mxu0 0
        %1890 = vmatprep.subr.bf16.mxu0 0
        %1891 = vmatpush1.bf16.msra.mxu0 0
        %1892 = vmatprep.subr.bf16.mxu0 0
        %1893 = vmatpush1.bf16.msra.mxu0 0
        %1894 = vmatprep.subr.bf16.mxu0 0
        %1895 = vmatpush1.bf16.msra.mxu0 0
        %1896 = vmatprep.subr.bf16.mxu0 0
        %1897 = vmatpush1.bf16.msra.mxu0 0
        %1898 = vmatprep.subr.bf16.mxu0 0
        %1899 = vmatpush1.bf16.msra.mxu0 0
        %1900 = vmatprep.subr.bf16.mxu0 0
        %1901 = vmatpush1.bf16.msra.mxu0 0
        %1902 = vmatprep.mubr.bf16.mxu0 0
        %1903 = vmatmul.mubr.bf16.gmra.mrb[0].mxu0 %v571
        %v1904 = vpop.f32.mrb[0].mxu0
        %v1905 = vadd.f32 %v1632, %v1904
        %v1906 = vpop.f32.mrb[0].mxu0
        %v1907 = vpop.f32.mrb[0].mxu0
        %v1908 = vadd.f32 %v1635, %v1907
        %v1909 = vpop.f32.mrb[0].mxu0
        %1910 = vmatprep.mubr.bf16.mxu0 0
        %1911 = vmatmul.mubr.bf16.gmra.mrb[0].mxu0 %v572
        %v1912 = vpop.f32.mrb[0].mxu0
        %v1913 = vadd.f32 %v1640, %v1912
        %v1914 = vpop.f32.mrb[0].mxu0
        %v1915 = vpop.f32.mrb[0].mxu0
        %v1916 = vpop.f32.mrb[0].mxu0
        %1917 = vmatprep.mubr.bf16.mxu0 0
        %1918 = vmatmul.mubr.bf16.gmra.mrb[0].mxu0 %v573
        %v1919 = vpop.f32.mrb[0].mxu0
        %v1920 = vadd.f32 %v1647, %v1919
        %v1921 = vpop.f32.mrb[0].mxu0
        %v1922 = vpop.f32.mrb[0].mxu0
        %v1923 = vadd.f32 %v1650, %v1922
        %v1924 = vpop.f32.mrb[0].mxu0
        %1925 = vmatprep.mubr.bf16.mxu0 0
        %1926 = vmatmul.mubr.bf16.gmra.mrb[0].mxu0 %v574
        %v1927 = vpop.f32.mrb[0].mxu0
        %v1928 = vadd.f32 %v1655, %v1927
        %v1929 = vpop.f32.mrb[0].mxu0
        %v1930 = vpop.f32.mrb[0].mxu0
        %v1931 = vpop.f32.mrb[0].mxu0
        %1932 = vmatprep.mubr.bf16.mxu0 0
        %1933 = vmatmul.mubr.bf16.gmra.mrb[0].mxu0 %v575
        %v1934 = vpop.f32.mrb[0].mxu0
        %v1935 = vadd.f32 %v1662, %v1934
        %v1936 = vpop.f32.mrb[0].mxu0
        %v1937 = vpop.f32.mrb[0].mxu0
        %v1938 = vadd.f32 %v1665, %v1937
        %v1939 = vpop.f32.mrb[0].mxu0
        %1940 = vmatprep.mubr.bf16.mxu0 0
        %1941 = vmatmul.mubr.bf16.gmra.mrb[0].mxu0 %v576
        %v1942 = vpop.f32.mrb[0].mxu0
        %v1943 = vadd.f32 %v1670, %v1942
        %v1944 = vpop.f32.mrb[0].mxu0
        %v1945 = vpop.f32.mrb[0].mxu0
        %v1946 = vpop.f32.mrb[0].mxu0
        %1947 = vmatprep.mubr.bf16.mxu0 0
        %1948 = vmatmul.mubr.bf16.gmra.mrb[0].mxu0 %v577
        %v1949 = vpop.f32.mrb[0].mxu0
        %v1950 = vadd.f32 %v1677, %v1949
        %v1951 = vpop.f32.mrb[0].mxu0
        %v1952 = vpop.f32.mrb[0].mxu0
        %v1953 = vadd.f32 %v1680, %v1952
        %v1954 = vpop.f32.mrb[0].mxu0
        %1955 = vmatprep.mubr.bf16.mxu0 0
        %1956 = vmatmul.mubr.bf16.gmra.mrb[0].mxu0 %v578
        %v1957 = vpop.f32.mrb[0].mxu0
        %v1958 = vadd.f32 %v1685, %v1957
        %v1959 = vpop.f32.mrb[0].mxu0
        %v1960 = vpop.f32.mrb[0].mxu0
        %v1961 = vpop.f32.mrb[0].mxu0
        %1962 = vmatprep.mubr.bf16.mxu0 0
        %1963 = vmatmul.mubr.bf16.gmra.mrb[0].mxu0 %v579
        %v1964 = vpop.f32.mrb[0].mxu0
        %v1965 = vadd.f32 %v1692, %v1964
        %v1966 = vpop.f32.mrb[0].mxu0
        %v1967 = vpop.f32.mrb[0].mxu0
        %v1968 = vadd.f32 %v1695, %v1967
        %v1969 = vpop.f32.mrb[0].mxu0
        %1970 = vmatprep.mubr.bf16.mxu0 0
        %1971 = vmatmul.mubr.bf16.gmra.mrb[0].mxu0 %v580
        %v1972 = vpop.f32.mrb[0].mxu0
        %v1973 = vadd.f32 %v1700, %v1972
        %v1974 = vpop.f32.mrb[0].mxu0
        %v1975 = vpop.f32.mrb[0].mxu0
        %v1976 = vpop.f32.mrb[0].mxu0
        %1977 = vmatprep.mubr.bf16.mxu0 0
        %1978 = vmatmul.mubr.bf16.gmra.mrb[0].mxu0 %v581
        %v1979 = vpop.f32.mrb[0].mxu0
        %v1980 = vadd.f32 %v1707, %v1979
        %v1981 = vpop.f32.mrb[0].mxu0
        %v1982 = vpop.f32.mrb[0].mxu0
        %v1983 = vadd.f32 %v1710, %v1982
        %v1984 = vpop.f32.mrb[0].mxu0
        %1985 = vmatprep.mubr.bf16.mxu0 0
        %1986 = vmatmul.mubr.bf16.gmra.mrb[0].mxu0 %v582
        %v1987 = vpop.f32.mrb[0].mxu0
        %v1988 = vadd.f32 %v1715, %v1987
        %v1989 = vpop.f32.mrb[0].mxu0
        %v1990 = vpop.f32.mrb[0].mxu0
        %v1991 = vpop.f32.mrb[0].mxu0
        %1992 = vmatprep.mubr.bf16.mxu0 0
        %1993 = vmatmul.mubr.bf16.gmra.mrb[0].mxu0 %v583
        %v1994 = vpop.f32.mrb[0].mxu0
        %v1995 = vadd.f32 %v1722, %v1994
        %v1996 = vpop.f32.mrb[0].mxu0
        %v1997 = vpop.f32.mrb[0].mxu0
        %v1998 = vadd.f32 %v1725, %v1997
        %v1999 = vpop.f32.mrb[0].mxu0
        %2000 = vmatprep.mubr.bf16.mxu0 0
        %2001 = vmatmul.mubr.bf16.gmra.mrb[0].mxu0 %v584
        %v2002 = vpop.f32.mrb[0].mxu0
        %v2003 = vadd.f32 %v1730, %v2002
        %v2004 = vpop.f32.mrb[0].mxu0
        %v2005 = vpop.f32.mrb[0].mxu0
        %v2006 = vpop.f32.mrb[0].mxu0
        %2007 = vmatprep.mubr.bf16.mxu0 0
        %2008 = vmatmul.mubr.bf16.gmra.mrb[0].mxu0 %v585
        %v2009 = vpop.f32.mrb[0].mxu0
        %v2010 = vadd.f32 %v1737, %v2009
        %v2011 = vpop.f32.mrb[0].mxu0
        %v2012 = vpop.f32.mrb[0].mxu0
        %v2013 = vadd.f32 %v1740, %v2012
        %v2014 = vpop.f32.mrb[0].mxu0
        %2015 = vmatprep.mubr.bf16.mxu0 0
        %2016 = vmatmul.mubr.bf16.gmra.mrb[0].mxu0 %v586
        %v2017 = vpop.f32.mrb[0].mxu0
        %v2018 = vadd.f32 %v1745, %v2017
        %v2019 = vpop.f32.mrb[0].mxu0
        %v2020 = vpop.f32.mrb[0].mxu0
        %v2021 = vpop.f32.mrb[0].mxu0
        %2022 = vmatprep.mubr.bf16.mxu0 0
        %2023 = vmatmul.mubr.bf16.gmra.mrb[0].mxu0 %v587
        %v2024 = vpop.f32.mrb[0].mxu0
        %v2025 = vadd.f32 %v1752, %v2024
        %v2026 = vpop.f32.mrb[0].mxu0
        %v2027 = vpop.f32.mrb[0].mxu0
        %v2028 = vadd.f32 %v1755, %v2027
        %v2029 = vpop.f32.mrb[0].mxu0
        %2030 = vmatprep.mubr.bf16.mxu0 0
        %2031 = vmatmul.mubr.bf16.gmra.mrb[0].mxu0 %v588
        %v2032 = vpop.f32.mrb[0].mxu0
        %v2033 = vadd.f32 %v1760, %v2032
        %v2034 = vpop.f32.mrb[0].mxu0
        %v2035 = vpop.f32.mrb[0].mxu0
        %v2036 = vpop.f32.mrb[0].mxu0
        %2037 = vmatprep.mubr.bf16.mxu0 0
        %2038 = vmatmul.mubr.bf16.gmra.mrb[0].mxu0 %v589
        %v2039 = vpop.f32.mrb[0].mxu0
        %v2040 = vadd.f32 %v1767, %v2039
        %v2041 = vpop.f32.mrb[0].mxu0
        %v2042 = vpop.f32.mrb[0].mxu0
        %v2043 = vadd.f32 %v1770, %v2042
        %v2044 = vpop.f32.mrb[0].mxu0
        %2045 = vmatprep.mubr.bf16.mxu0 0
        %2046 = vmatmul.mubr.bf16.gmra.mrb[0].mxu0 %v590
        %v2047 = vpop.f32.mrb[0].mxu0
        %v2048 = vadd.f32 %v1775, %v2047
        %v2049 = vpop.f32.mrb[0].mxu0
        %v2050 = vpop.f32.mrb[0].mxu0
        %v2051 = vpop.f32.mrb[0].mxu0
        %2052 = vmatprep.mubr.bf16.mxu0 0
        %2053 = vmatmul.mubr.bf16.gmra.mrb[0].mxu0 %v591
        %v2054 = vpop.f32.mrb[0].mxu0
        %v2055 = vadd.f32 %v1782, %v2054
        %v2056 = vpop.f32.mrb[0].mxu0
        %v2057 = vpop.f32.mrb[0].mxu0
        %v2058 = vadd.f32 %v1785, %v2057
        %v2059 = vpop.f32.mrb[0].mxu0
        %2060 = vmatprep.mubr.bf16.mxu0 0
        %2061 = vmatmul.mubr.bf16.gmra.mrb[0].mxu0 %v592
        %v2062 = vpop.f32.mrb[0].mxu0
        %v2063 = vadd.f32 %v1790, %v2062
        %v2064 = vpop.f32.mrb[0].mxu0
        %v2065 = vpop.f32.mrb[0].mxu0
        %v2066 = vpop.f32.mrb[0].mxu0
        %2067 = vmatprep.mubr.bf16.mxu0 0
        %2068 = vmatmul.mubr.bf16.gmra.mrb[0].mxu0 %v593
        %v2069 = vpop.f32.mrb[0].mxu0
        %v2070 = vadd.f32 %v1797, %v2069
        %v2071 = vpop.f32.mrb[0].mxu0
        %v2072 = vpop.f32.mrb[0].mxu0
        %v2073 = vadd.f32 %v1800, %v2072
        %v2074 = vpop.f32.mrb[0].mxu0
        %2075 = vmatprep.mubr.bf16.mxu0 0
        %2076 = vmatmul.mubr.bf16.gmra.mrb[0].mxu0 %v594
        %v2077 = vpop.f32.mrb[0].mxu0
        %v2078 = vadd.f32 %v1805, %v2077
        %v2079 = vpop.f32.mrb[0].mxu0
        %v2080 = vpop.f32.mrb[0].mxu0
        %v2081 = vpop.f32.mrb[0].mxu0
        %2082 = vmatprep.mubr.bf16.mxu0 0
        %2083 = vmatmul.mubr.bf16.gmra.mrb[0].mxu0 %v595
        %v2084 = vpop.f32.mrb[0].mxu0
        %v2085 = vadd.f32 %v1812, %v2084
        %v2086 = vpop.f32.mrb[0].mxu0
        %v2087 = vpop.f32.mrb[0].mxu0
        %v2088 = vadd.f32 %v1815, %v2087
        %v2089 = vpop.f32.mrb[0].mxu0
        %2090 = vmatprep.mubr.bf16.mxu0 0
        %2091 = vmatmul.mubr.bf16.gmra.mrb[0].mxu0 %v596
        %v2092 = vpop.f32.mrb[0].mxu0
        %v2093 = vadd.f32 %v1820, %v2092
        %v2094 = vpop.f32.mrb[0].mxu0
        %v2095 = vpop.f32.mrb[0].mxu0
        %v2096 = vpop.f32.mrb[0].mxu0
        %2097 = vmatprep.mubr.bf16.mxu0 0
        %2098 = vmatmul.mubr.bf16.gmra.mrb[0].mxu0 %v597
        %v2099 = vpop.f32.mrb[0].mxu0
        %v2100 = vadd.f32 %v1827, %v2099
        %v2101 = vpop.f32.mrb[0].mxu0
        %v2102 = vpop.f32.mrb[0].mxu0
        %v2103 = vadd.f32 %v1830, %v2102
        %v2104 = vpop.f32.mrb[0].mxu0
        %2105 = vmatprep.mubr.bf16.mxu0 0
        %2106 = vmatmul.mubr.bf16.gmra.mrb[0].mxu0 %v598
        %v2107 = vpop.f32.mrb[0].mxu0
        %v2108 = vadd.f32 %v1835, %v2107
        %v2109 = vpop.f32.mrb[0].mxu0
        %v2110 = vpop.f32.mrb[0].mxu0
        %v2111 = vpop.f32.mrb[0].mxu0
        %2112 = vmatprep.mubr.bf16.mxu0 0
        %2113 = vmatmul.mubr.bf16.gmra.mrb[0].mxu0 %v599
        %v2114 = vpop.f32.mrb[0].mxu0
        %v2115 = vadd.f32 %v1842, %v2114
        %v2116 = vpop.f32.mrb[0].mxu0
        %v2117 = vpop.f32.mrb[0].mxu0
        %v2118 = vadd.f32 %v1845, %v2117
        %v2119 = vpop.f32.mrb[0].mxu0
        %2120 = vmatprep.mubr.bf16.mxu0 0
        %2121 = vmatmul.mubr.bf16.gmra.mrb[0].mxu0 %v600
        %v2122 = vpop.f32.mrb[0].mxu0
        %v2123 = vadd.f32 %v1850, %v2122
        %v2124 = vpop.f32.mrb[0].mxu0
        %v2125 = vpop.f32.mrb[0].mxu0
        %v2126 = vpop.f32.mrb[0].mxu0
        %2127 = vmatprep.mubr.bf16.mxu0 0
        %2128 = vmatmul.mubr.bf16.gmra.mrb[0].mxu0 %v601
        %v2129 = vpop.f32.mrb[0].mxu0
        %v2130 = vadd.f32 %v1857, %v2129
        %v2131 = vpop.f32.mrb[0].mxu0
        %v2132 = vpop.f32.mrb[0].mxu0
        %v2133 = vadd.f32 %v1860, %v2132
        %v2134 = vpop.f32.mrb[0].mxu0
        %2135 = vmatprep.mubr.bf16.mxu0 0
        %2136 = vmatmul.mubr.bf16.gmra.mrb[0].mxu0 %v602
        %v2137 = vpop.f32.mrb[0].mxu0
        %v2138 = vadd.f32 %v1865, %v2137
        %v2139 = vpop.f32.mrb[0].mxu0
        %v2140 = vpop.f32.mrb[0].mxu0
        %v2141 = vpop.f32.mrb[0].mxu0
        %2142 = vdwg.mxu0
        %v2143 = vrot.slane %v1327, 7
        %v2144 = vrot.slane %v1331, 7
        %v2145 = vrot.slane %v1339, 7
        %v2146 = vrot.slane %v1344, 7
        %v2147 = vrot.slane %v1348, 7
        %v2148 = vrot.slane %v1356, 7
        %v2149 = vrot.slane %v1361, 7
        %v2150 = vrot.slane %v1365, 7
        %v2151 = vrot.slane %v1373, 7
        %v2152 = vrot.slane %v1378, 7
        %v2153 = vrot.slane %v1382, 7
        %v2154 = vrot.slane %v1390, 7
        %v2155 = vrot.slane %v1395, 7
        %v2156 = vrot.slane %v1399, 7
        %v2157 = vrot.slane %v1407, 7
        %v2158 = vrot.slane %v1412, 7
        %v2159 = vrot.slane %v1416, 7
        %v2160 = vrot.slane %v1424, 7
        %v2161 = vrot.slane %v1429, 7
        %v2162 = vrot.slane %v1433, 7
        %v2163 = vrot.slane %v1441, 7
        %v2164 = vrot.slane %v1446, 7
        %v2165 = vrot.slane %v1450, 7
        %v2166 = vrot.slane %v1458, 7
        %v2167 = vrot.slane %v1463, 7
        %v2168 = vrot.slane %v1467, 7
        %v2169 = vrot.slane %v1475, 7
        %v2170 = vrot.slane %v1480, 7
        %v2171 = vrot.slane %v1484, 7
        %v2172 = vrot.slane %v1492, 7
        %v2173 = vrot.slane %v1497, 7
        %v2174 = vrot.slane %v1501, 7
        %v2175 = vrot.slane %v1509, 7
        %v2176 = vrot.slane %v1514, 7
        %v2177 = vrot.slane %v1518, 7
        %v2178 = vrot.slane %v1526, 7
        %v2179 = vrot.slane %v1531, 7
        %v2180 = vrot.slane %v1535, 7
        %v2181 = vrot.slane %v1543, 7
        %v2182 = vrot.slane %v1548, 7
        %v2183 = vrot.slane %v1552, 7
        %v2184 = vrot.slane %v1560, 7
        %v2185 = vrot.slane %v1565, 7
        %v2186 = vrot.slane %v1569, 7
        %v2187 = vrot.slane %v1577, 7
        %v2188 = vrot.slane %v1582, 7
        %v2189 = vrot.slane %v1586, 7
        %v2190 = vrot.slane %v1594, 7
        %v2191 = vlaneseq
        %v2192 = vshrl.u32 %v2191, 7
        %vm2193 = vcmp.lt.s32.totalorder %v2192, 1
        %v2194 = vsel %vm2193, %v2188, %v2189
        %v2195 = vsel %vm2193, %v2187, %v2188
        %v2196 = vsel %vm2193, %v2185, %v2186
        %v2197 = vsel %vm2193, %v2184, %v2185
        %v2198 = vsel %vm2193, %v2182, %v2183
        %v2199 = vsel %vm2193, %v2181, %v2182
        %v2200 = vsel %vm2193, %v2179, %v2180
        %v2201 = vsel %vm2193, %v2178, %v2179
        %v2202 = vsel %vm2193, %v2176, %v2177
        %v2203 = vsel %vm2193, %v2175, %v2176
        %v2204 = vsel %vm2193, %v2173, %v2174
        %v2205 = vsel %vm2193, %v2172, %v2173
        %v2206 = vsel %vm2193, %v2170, %v2171
        %v2207 = vsel %vm2193, %v2169, %v2170
        %v2208 = vsel %vm2193, %v2167, %v2168
        %v2209 = vsel %vm2193, %v2166, %v2167
        %v2210 = vsel %vm2193, %v2164, %v2165
        %v2211 = vsel %vm2193, %v2163, %v2164
        %v2212 = vsel %vm2193, %v2161, %v2162
        %v2213 = vsel %vm2193, %v2160, %v2161
        %v2214 = vsel %vm2193, %v2158, %v2159
        %v2215 = vsel %vm2193, %v2157, %v2158
        %v2216 = vsel %vm2193, %v2155, %v2156
        %v2217 = vsel %vm2193, %v2154, %v2155
        %v2218 = vsel %vm2193, %v2152, %v2153
        %v2219 = vsel %vm2193, %v2151, %v2152
        %v2220 = vsel %vm2193, %v2149, %v2150
        %v2221 = vsel %vm2193, %v2148, %v2149
        %v2222 = vsel %vm2193, %v2146, %v2147
        %v2223 = vsel %vm2193, %v2145, %v2146
        %v2224 = vsel %vm2193, %v2143, %v2144
        %v2225 = vsel %vm2193, %v2190, %v2143
        %v2226 = vadd.f32 %v2225, %v1329
        %v2227 = vadd.f32 %v2224, %v1333
        %v2228 = vadd.f32 %v2223, %v1346
        %v2229 = vadd.f32 %v2222, %v1350
        %v2230 = vadd.f32 %v2221, %v1363
        %v2231 = vadd.f32 %v2220, %v1367
        %v2232 = vadd.f32 %v2219, %v1380
        %v2233 = vadd.f32 %v2218, %v1384
        %v2234 = vadd.f32 %v2217, %v1397
        %v2235 = vadd.f32 %v2216, %v1401
        %v2236 = vadd.f32 %v2215, %v1414
        %v2237 = vadd.f32 %v2214, %v1418
        %v2238 = vadd.f32 %v2213, %v1431
        %v2239 = vadd.f32 %v2212, %v1435
        %v2240 = vadd.f32 %v2211, %v1448
        %v2241 = vadd.f32 %v2210, %v1452
        %v2242 = vadd.f32 %v2209, %v1465
        %v2243 = vadd.f32 %v2208, %v1469
        %v2244 = vadd.f32 %v2207, %v1482
        %v2245 = vadd.f32 %v2206, %v1486
        %v2246 = vadd.f32 %v2205, %v1499
        %v2247 = vadd.f32 %v2204, %v1503
        %v2248 = vadd.f32 %v2203, %v1516
        %v2249 = vadd.f32 %v2202, %v1520
        %v2250 = vadd.f32 %v2201, %v1533
        %v2251 = vadd.f32 %v2200, %v1537
        %v2252 = vadd.f32 %v2199, %v1550
        %v2253 = vadd.f32 %v2198, %v1554
        %v2254 = vadd.f32 %v2197, %v1567
        %v2255 = vadd.f32 %v2196, %v1571
        %v2256 = vadd.f32 %v2195, %v1584
        %v2257 = vadd.f32 %v2194, %v1588
        %v2258 = vrot.slane %v1905, 1
        %v2259 = vrot.slane %v1908, 1
        %v2260 = vrot.slane %v1913, 1
        %v2261 = vrot.slane %v1920, 1
        %v2262 = vrot.slane %v1923, 1
        %v2263 = vrot.slane %v1928, 1
        %v2264 = vrot.slane %v1935, 1
        %v2265 = vrot.slane %v1938, 1
        %v2266 = vrot.slane %v1943, 1
        %v2267 = vrot.slane %v1950, 1
        %v2268 = vrot.slane %v1953, 1
        %v2269 = vrot.slane %v1958, 1
        %v2270 = vrot.slane %v1965, 1
        %v2271 = vrot.slane %v1968, 1
        %v2272 = vrot.slane %v1973, 1
        %v2273 = vrot.slane %v1980, 1
        %v2274 = vrot.slane %v1983, 1
        %v2275 = vrot.slane %v1988, 1
        %v2276 = vrot.slane %v1995, 1
        %v2277 = vrot.slane %v1998, 1
        %v2278 = vrot.slane %v2003, 1
        %v2279 = vrot.slane %v2010, 1
        %v2280 = vrot.slane %v2013, 1
        %v2281 = vrot.slane %v2018, 1
        %v2282 = vrot.slane %v2025, 1
        %v2283 = vrot.slane %v2028, 1
        %v2284 = vrot.slane %v2033, 1
        %v2285 = vrot.slane %v2040, 1
        %v2286 = vrot.slane %v2043, 1
        %v2287 = vrot.slane %v2048, 1
        %v2288 = vrot.slane %v2055, 1
        %v2289 = vrot.slane %v2058, 1
        %v2290 = vrot.slane %v2063, 1
        %v2291 = vrot.slane %v2070, 1
        %v2292 = vrot.slane %v2073, 1
        %v2293 = vrot.slane %v2078, 1
        %v2294 = vrot.slane %v2085, 1
        %v2295 = vrot.slane %v2088, 1
        %v2296 = vrot.slane %v2093, 1
        %v2297 = vrot.slane %v2100, 1
        %v2298 = vrot.slane %v2103, 1
        %v2299 = vrot.slane %v2108, 1
        %v2300 = vrot.slane %v2115, 1
        %v2301 = vrot.slane %v2118, 1
        %v2302 = vrot.slane %v2123, 1
        %v2303 = vrot.slane %v2130, 1
        %v2304 = vrot.slane %v2133, 1
        %v2305 = vrot.slane %v2138, 1
        %vm2306 = vcmp.lt.s32.totalorder %v2192, 7
        %v2307 = vsel %vm2306, %v2304, %v2305
        %v2308 = vsel %vm2306, %v2303, %v2304
        %v2309 = vsel %vm2306, %v2301, %v2302
        %v2310 = vsel %vm2306, %v2300, %v2301
        %v2311 = vsel %vm2306, %v2298, %v2299
        %v2312 = vsel %vm2306, %v2297, %v2298
        %v2313 = vsel %vm2306, %v2295, %v2296
        %v2314 = vsel %vm2306, %v2294, %v2295
        %v2315 = vsel %vm2306, %v2292, %v2293
        %v2316 = vsel %vm2306, %v2291, %v2292
        %v2317 = vsel %vm2306, %v2289, %v2290
        %v2318 = vsel %vm2306, %v2288, %v2289
        %v2319 = vsel %vm2306, %v2286, %v2287
        %v2320 = vsel %vm2306, %v2285, %v2286
        %v2321 = vsel %vm2306, %v2283, %v2284
        %v2322 = vsel %vm2306, %v2282, %v2283
        %v2323 = vsel %vm2306, %v2280, %v2281
        %v2324 = vsel %vm2306, %v2279, %v2280
        %v2325 = vsel %vm2306, %v2277, %v2278
        %v2326 = vsel %vm2306, %v2276, %v2277
        %v2327 = vsel %vm2306, %v2274, %v2275
        %v2328 = vsel %vm2306, %v2273, %v2274
        %v2329 = vsel %vm2306, %v2271, %v2272
        %v2330 = vsel %vm2306, %v2270, %v2271
        %v2331 = vsel %vm2306, %v2268, %v2269
        %v2332 = vsel %vm2306, %v2267, %v2268
        %v2333 = vsel %vm2306, %v2265, %v2266
        %v2334 = vsel %vm2306, %v2264, %v2265
        %v2335 = vsel %vm2306, %v2262, %v2263
        %v2336 = vsel %vm2306, %v2261, %v2262
        %v2337 = vsel %vm2306, %v2259, %v2260
        %v2338 = vsel %vm2306, %v2258, %v2259
        %v2339 = vadd.f32 %v2226, %v2338
        %v2340 = vadd.f32 %v2227, %v2337
        %v2341 = vadd.f32 %v2228, %v2336
        %v2342 = vadd.f32 %v2229, %v2335
        %v2343 = vadd.f32 %v2230, %v2334
        %v2344 = vadd.f32 %v2231, %v2333
        %v2345 = vadd.f32 %v2232, %v2332
        %v2346 = vadd.f32 %v2233, %v2331
        %v2347 = vadd.f32 %v2234, %v2330
        %v2348 = vadd.f32 %v2235, %v2329
        %v2349 = vadd.f32 %v2236, %v2328
        %v2350 = vadd.f32 %v2237, %v2327
        %v2351 = vadd.f32 %v2238, %v2326
        %v2352 = vadd.f32 %v2239, %v2325
        %v2353 = vadd.f32 %v2240, %v2324
        %v2354 = vadd.f32 %v2241, %v2323
        %v2355 = vadd.f32 %v2242, %v2322
        %v2356 = vadd.f32 %v2243, %v2321
        %v2357 = vadd.f32 %v2244, %v2320
        %v2358 = vadd.f32 %v2245, %v2319
        %v2359 = vadd.f32 %v2246, %v2318
        %v2360 = vadd.f32 %v2247, %v2317
        %v2361 = vadd.f32 %v2248, %v2316
        %v2362 = vadd.f32 %v2249, %v2315
        %v2363 = vadd.f32 %v2250, %v2314
        %v2364 = vadd.f32 %v2251, %v2313
        %v2365 = vadd.f32 %v2252, %v2312
        %v2366 = vadd.f32 %v2253, %v2311
        %v2367 = vadd.f32 %v2254, %v2310
        %v2368 = vadd.f32 %v2255, %v2309
        %v2369 = vadd.f32 %v2256, %v2308
        %v2370 = vadd.f32 %v2257, %v2307
        %v2371 = vld [vmem:[%s2] sm:$0x1]
        %v2373 = vlaneseq
        %v2374 = vshrl.u32 %v2373, 7
        %v2375 = vsub.s32 0, %v2374
        %v2376 = vrot.slane %v2371, %v2375
        %v2378 = vadd.f32 %v2339, %v2376
        %v2379 = vadd.f32 %v2340, %v2376
        %v2380 = vadd.f32 %v2341, %v2376
        %v2381 = vadd.f32 %v2342, %v2376
        %v2382 = vadd.f32 %v2343, %v2376
        %v2383 = vadd.f32 %v2344, %v2376
        %v2384 = vadd.f32 %v2345, %v2376
        %v2385 = vadd.f32 %v2346, %v2376
        %v2386 = vadd.f32 %v2347, %v2376
        %v2387 = vadd.f32 %v2348, %v2376
        %v2388 = vadd.f32 %v2349, %v2376
        %v2389 = vadd.f32 %v2350, %v2376
        %v2390 = vadd.f32 %v2351, %v2376
        %v2391 = vadd.f32 %v2352, %v2376
        %v2392 = vadd.f32 %v2353, %v2376
        %v2393 = vadd.f32 %v2354, %v2376
        %v2394 = vadd.f32 %v2355, %v2376
        %v2395 = vadd.f32 %v2356, %v2376
        %v2396 = vadd.f32 %v2357, %v2376
        %v2397 = vadd.f32 %v2358, %v2376
        %v2398 = vadd.f32 %v2359, %v2376
        %v2399 = vadd.f32 %v2360, %v2376
        %v2400 = vadd.f32 %v2361, %v2376
        %v2401 = vadd.f32 %v2362, %v2376
        %v2402 = vadd.f32 %v2363, %v2376
        %v2403 = vadd.f32 %v2364, %v2376
        %v2404 = vadd.f32 %v2365, %v2376
        %v2405 = vadd.f32 %v2366, %v2376
        %v2406 = vadd.f32 %v2367, %v2376
        %v2407 = vadd.f32 %v2368, %v2376
        %v2408 = vadd.f32 %v2369, %v2376
        %v2409 = vadd.f32 %v2370, %v2376
        %v2410 = vmax.f32 %v2378, 0.0
        %v2411 = vmax.f32 %v2379, 0.0
        %v2412 = vmax.f32 %v2380, 0.0
        %v2413 = vmax.f32 %v2381, 0.0
        %v2414 = vmax.f32 %v2382, 0.0
        %v2415 = vmax.f32 %v2383, 0.0
        %v2416 = vmax.f32 %v2384, 0.0
        %v2417 = vmax.f32 %v2385, 0.0
        %v2418 = vmax.f32 %v2386, 0.0
        %v2419 = vmax.f32 %v2387, 0.0
        %v2420 = vmax.f32 %v2388, 0.0
        %v2421 = vmax.f32 %v2389, 0.0
        %v2422 = vmax.f32 %v2390, 0.0
        %v2423 = vmax.f32 %v2391, 0.0
        %v2424 = vmax.f32 %v2392, 0.0
        %v2425 = vmax.f32 %v2393, 0.0
        %v2426 = vmax.f32 %v2394, 0.0
        %v2427 = vmax.f32 %v2395, 0.0
        %v2428 = vmax.f32 %v2396, 0.0
        %v2429 = vmax.f32 %v2397, 0.0
        %v2430 = vmax.f32 %v2398, 0.0
        %v2431 = vmax.f32 %v2399, 0.0
        %v2432 = vmax.f32 %v2400, 0.0
        %v2433 = vmax.f32 %v2401, 0.0
        %v2434 = vmax.f32 %v2402, 0.0
        %v2435 = vmax.f32 %v2403, 0.0
        %v2436 = vmax.f32 %v2404, 0.0
        %v2437 = vmax.f32 %v2405, 0.0
        %v2438 = vmax.f32 %v2406, 0.0
        %v2439 = vmax.f32 %v2407, 0.0
        %v2440 = vmax.f32 %v2408, 0.0
        %v2441 = vmax.f32 %v2409, 0.0
        %v2442 = vpack.c.bf16 %v2411, %v2410
        %v2443 = vpack.c.bf16 %v2413, %v2412
        %v2444 = vpack.c.bf16 %v2415, %v2414
        %v2445 = vpack.c.bf16 %v2417, %v2416
        %v2446 = vpack.c.bf16 %v2419, %v2418
        %v2447 = vpack.c.bf16 %v2421, %v2420
        %v2448 = vpack.c.bf16 %v2423, %v2422
        %v2449 = vpack.c.bf16 %v2425, %v2424
        %v2450 = vpack.c.bf16 %v2427, %v2426
        %v2451 = vpack.c.bf16 %v2429, %v2428
        %v2452 = vpack.c.bf16 %v2431, %v2430
        %v2453 = vpack.c.bf16 %v2433, %v2432
        %v2454 = vpack.c.bf16 %v2435, %v2434
        %v2455 = vpack.c.bf16 %v2437, %v2436
        %v2456 = vpack.c.bf16 %v2439, %v2438
        %v2457 = vpack.c.bf16 %v2441, %v2440
        %s2458 = scalar_lea.vmem [#allocation3], 16
        %2459 = vst [vmem:[%s2458] sm:$0xff] %v2442
        %2460 = vst [vmem:[%s2458 + $0x10] sm:$0xff] %v2443
        %2461 = vst [vmem:[%s2458 + $0x20] sm:$0xff] %v2444
        %2462 = vst [vmem:[%s2458 + $0x30] sm:$0xff] %v2445
        %2463 = vst [vmem:[%s2458 + $0x40] sm:$0xff] %v2446
        %2464 = vst [vmem:[%s2458 + $0x50] sm:$0xff] %v2447
        %2465 = vst [vmem:[%s2458 + $0x60] sm:$0xff] %v2448
        %2466 = vst [vmem:[%s2458 + $0x70] sm:$0xff] %v2449
        %2467 = vst [vmem:[%s2458 + $0x80] sm:$0xff] %v2450
        %2468 = vst [vmem:[%s2458 + $0x90] sm:$0xff] %v2451
        %2469 = vst [vmem:[%s2458 + $0xa0] sm:$0xff] %v2452
        %2470 = vst [vmem:[%s2458 + $0xb0] sm:$0xff] %v2453
        %2471 = vst [vmem:[%s2458 + $0xc0] sm:$0xff] %v2454
        %2472 = vst [vmem:[%s2458 + $0xd0] sm:$0xff] %v2455
        %2473 = vst [vmem:[%s2458 + $0xe0] sm:$0xff] %v2456
        %2474 = vst [vmem:[%s2458 + $0xf0] sm:$0xff] %v2457
        %v2475 = vld [vmem:[#allocation9] sm:$0xff]
        %v2476 = vld [vmem:[#allocation9 + $0x8] sm:$0xf]
        %v2477 = vld [vmem:[#allocation9 + $0xc] sm:$0xff]
        %v2478 = vld [vmem:[#allocation9 + $0x14] sm:$0xf]
        %v2479 = vld [vmem:[#allocation9 + $0x18] sm:$0xff]
        %v2480 = vld [vmem:[#allocation9 + $0x20] sm:$0xf]
        %v2481 = vld [vmem:[#allocation9 + $0x24] sm:$0xff]
        %v2482 = vld [vmem:[#allocation9 + $0x2c] sm:$0xf]
        %v2483 = vld [vmem:[#allocation9 + $0x30] sm:$0xff]
        %v2484 = vld [vmem:[#allocation9 + $0x38] sm:$0xf]
        %v2485 = vld [vmem:[#allocation9 + $0x3c] sm:$0xff]
        %v2486 = vld [vmem:[#allocation9 + $0x44] sm:$0xf]
        %v2487 = vld [vmem:[#allocation9 + $0x48] sm:$0xff]
        %v2488 = vld [vmem:[#allocation9 + $0x50] sm:$0xf]
        %v2489 = vld [vmem:[#allocation9 + $0x54] sm:$0xff]
        %v2490 = vld [vmem:[#allocation9 + $0x5c] sm:$0xf]
        %v2491 = vld [vmem:[#allocation9 + $0x60] sm:$0xff]
        %v2492 = vld [vmem:[#allocation9 + $0x68] sm:$0xf]
        %v2493 = vld [vmem:[#allocation9 + $0x6c] sm:$0xff]
        %v2494 = vld [vmem:[#allocation9 + $0x74] sm:$0xf]
        %v2495 = vld [vmem:[#allocation9 + $0x78] sm:$0xff]
        %v2496 = vld [vmem:[#allocation9 + $0x80] sm:$0xf]
        %v2497 = vld [vmem:[#allocation9 + $0x84] sm:$0xff]
        %v2498 = vld [vmem:[#allocation9 + $0x8c] sm:$0xf]
        %v2499 = vld [vmem:[#allocation9 + $0x90] sm:$0xff]
        %v2500 = vld [vmem:[#allocation9 + $0x98] sm:$0xf]
        %v2501 = vld [vmem:[#allocation9 + $0x9c] sm:$0xff]
        %v2502 = vld [vmem:[#allocation9 + $0xa4] sm:$0xf]
        %v2503 = vld [vmem:[#allocation9 + $0xa8] sm:$0xff]
        %v2504 = vld [vmem:[#allocation9 + $0xb0] sm:$0xf]
        %v2505 = vld [vmem:[#allocation9 + $0xb4] sm:$0xff]
        %v2506 = vld [vmem:[#allocation9 + $0xbc] sm:$0xf]
        %v2507 = vld [vmem:[#allocation9 + $0xc0] sm:$0xff]
        %v2508 = vld [vmem:[#allocation9 + $0xc8] sm:$0xf]
        %v2509 = vld [vmem:[#allocation9 + $0xcc] sm:$0xff]
        %v2510 = vld [vmem:[#allocation9 + $0xd4] sm:$0xf]
        %v2511 = vld [vmem:[#allocation9 + $0xd8] sm:$0xff]
        %v2512 = vld [vmem:[#allocation9 + $0xe0] sm:$0xf]
        %v2513 = vld [vmem:[#allocation9 + $0xe4] sm:$0xff]
        %v2514 = vld [vmem:[#allocation9 + $0xec] sm:$0xf]
        %v2515 = vld [vmem:[#allocation9 + $0xf0] sm:$0xff]
        %v2516 = vld [vmem:[#allocation9 + $0xf8] sm:$0xf]
        %v2517 = vld [vmem:[#allocation9 + $0xfc] sm:$0xff]
        %v2518 = vld [vmem:[#allocation9 + $0x104] sm:$0xf]
        %v2519 = vld [vmem:[#allocation9 + $0x108] sm:$0xff]
        %v2520 = vld [vmem:[#allocation9 + $0x110] sm:$0xf]
        %v2521 = vld [vmem:[#allocation9 + $0x114] sm:$0xff]
        %v2522 = vld [vmem:[#allocation9 + $0x11c] sm:$0xf]
        %v2523 = vld [vmem:[#allocation9 + $0x120] sm:$0xff]
        %v2524 = vld [vmem:[#allocation9 + $0x128] sm:$0xf]
        %v2525 = vld [vmem:[#allocation9 + $0x12c] sm:$0xff]
        %v2526 = vld [vmem:[#allocation9 + $0x134] sm:$0xf]
        %v2527 = vld [vmem:[#allocation9 + $0x138] sm:$0xff]
        %v2528 = vld [vmem:[#allocation9 + $0x140] sm:$0xf]
        %v2529 = vld [vmem:[#allocation9 + $0x144] sm:$0xff]
        %v2530 = vld [vmem:[#allocation9 + $0x14c] sm:$0xf]
        %v2531 = vld [vmem:[#allocation9 + $0x150] sm:$0xff]
        %v2532 = vld [vmem:[#allocation9 + $0x158] sm:$0xf]
        %v2533 = vld [vmem:[#allocation9 + $0x15c] sm:$0xff]
        %v2534 = vld [vmem:[#allocation9 + $0x164] sm:$0xf]
        %v2535 = vld [vmem:[#allocation9 + $0x168] sm:$0xff]
        %v2536 = vld [vmem:[#allocation9 + $0x170] sm:$0xf]
        %v2537 = vld [vmem:[#allocation9 + $0x174] sm:$0xff]
        %v2538 = vld [vmem:[#allocation9 + $0x17c] sm:$0xf]
        %v2539 = vld [vmem:[#allocation9 + $0x180] sm:$0xff]
        %v2540 = vld [vmem:[#allocation9 + $0x188] sm:$0xf]
        %v2541 = vld [vmem:[#allocation9 + $0x18c] sm:$0xff]
        %v2542 = vld [vmem:[#allocation9 + $0x194] sm:$0xf]
        %v2543 = vld [vmem:[#allocation9 + $0x198] sm:$0xff]
        %v2544 = vld [vmem:[#allocation9 + $0x1a0] sm:$0xf]
        %v2545 = vld [vmem:[#allocation9 + $0x1a4] sm:$0xff]
        %v2546 = vld [vmem:[#allocation9 + $0x1ac] sm:$0xf]
        %v2547 = vld [vmem:[#allocation9 + $0x1b0] sm:$0xff]
        %v2548 = vld [vmem:[#allocation9 + $0x1b8] sm:$0xf]
        %v2549 = vld [vmem:[#allocation9 + $0x1bc] sm:$0xff]
        %v2550 = vld [vmem:[#allocation9 + $0x1c4] sm:$0xf]
        %v2551 = vld [vmem:[#allocation9 + $0x1c8] sm:$0xff]
        %v2552 = vld [vmem:[#allocation9 + $0x1d0] sm:$0xf]
        %v2553 = vld [vmem:[#allocation9 + $0x1d4] sm:$0xff]
        %v2554 = vld [vmem:[#allocation9 + $0x1dc] sm:$0xf]
        %v2555 = vld [vmem:[#allocation9 + $0x1e0] sm:$0xff]
        %v2556 = vld [vmem:[#allocation9 + $0x1e8] sm:$0xf]
        %v2557 = vld [vmem:[#allocation9 + $0x1ec] sm:$0xff]
        %v2558 = vld [vmem:[#allocation9 + $0x1f4] sm:$0xf]
        %v2559 = vld [vmem:[#allocation9 + $0x1f8] sm:$0xff]
        %v2560 = vld [vmem:[#allocation9 + $0x200] sm:$0xf]
        %v2561 = vld [vmem:[#allocation9 + $0x204] sm:$0xff]
        %v2562 = vld [vmem:[#allocation9 + $0x20c] sm:$0xf]
        %v2563 = vld [vmem:[#allocation9 + $0x210] sm:$0xff]
        %v2564 = vld [vmem:[#allocation9 + $0x218] sm:$0xf]
        %v2565 = vld [vmem:[#allocation9 + $0x21c] sm:$0xff]
        %v2566 = vld [vmem:[#allocation9 + $0x224] sm:$0xf]
        %v2567 = vld [vmem:[#allocation9 + $0x228] sm:$0xff]
        %v2568 = vld [vmem:[#allocation9 + $0x230] sm:$0xf]
        %v2569 = vld [vmem:[#allocation9 + $0x234] sm:$0xff]
        %v2570 = vld [vmem:[#allocation9 + $0x23c] sm:$0xf]
        %v2571 = vld [vmem:[#allocation3] sm:$0xff]
        %v2572 = vld [vmem:[#allocation3 + $0x8] sm:$0xff]
        %v2573 = vld [vmem:[#allocation3 + $0x10] sm:$0xff]
        %v2574 = vld [vmem:[#allocation3 + $0x18] sm:$0xff]
        %v2575 = vld [vmem:[#allocation3 + $0x20] sm:$0xff]
        %v2576 = vld [vmem:[#allocation3 + $0x28] sm:$0xff]
        %v2577 = vld [vmem:[#allocation3 + $0x30] sm:$0xff]
        %v2578 = vld [vmem:[#allocation3 + $0x38] sm:$0xff]
        %v2579 = vld [vmem:[#allocation3 + $0x40] sm:$0xff]
        %v2580 = vld [vmem:[#allocation3 + $0x48] sm:$0xff]
        %v2581 = vld [vmem:[#allocation3 + $0x50] sm:$0xff]
        %v2582 = vld [vmem:[#allocation3 + $0x58] sm:$0xff]
        %v2583 = vld [vmem:[#allocation3 + $0x60] sm:$0xff]
        %v2584 = vld [vmem:[#allocation3 + $0x68] sm:$0xff]
        %v2585 = vld [vmem:[#allocation3 + $0x70] sm:$0xff]
        %v2586 = vld [vmem:[#allocation3 + $0x78] sm:$0xff]
        %v2587 = vld [vmem:[#allocation3 + $0x80] sm:$0xff]
        %v2588 = vld [vmem:[#allocation3 + $0x88] sm:$0xff]
        %v2589 = vld [vmem:[#allocation3 + $0x90] sm:$0xff]
        %v2590 = vld [vmem:[#allocation3 + $0x98] sm:$0xff]
        %v2591 = vld [vmem:[#allocation3 + $0xa0] sm:$0xff]
        %v2592 = vld [vmem:[#allocation3 + $0xa8] sm:$0xff]
        %v2593 = vld [vmem:[#allocation3 + $0xb0] sm:$0xff]
        %v2594 = vld [vmem:[#allocation3 + $0xb8] sm:$0xff]
        %v2595 = vld [vmem:[#allocation3 + $0xc0] sm:$0xff]
        %v2596 = vld [vmem:[#allocation3 + $0xc8] sm:$0xff]
        %v2597 = vld [vmem:[#allocation3 + $0xd0] sm:$0xff]
        %v2598 = vld [vmem:[#allocation3 + $0xd8] sm:$0xff]
        %v2599 = vld [vmem:[#allocation3 + $0xe0] sm:$0xff]
        %v2600 = vld [vmem:[#allocation3 + $0xe8] sm:$0xff]
        %v2601 = vld [vmem:[#allocation3 + $0xf0] sm:$0xff]
        %v2602 = vld [vmem:[#allocation3 + $0xf8] sm:$0xff]
        %v2603 = vld [vmem:[%s2458] sm:$0xff]
        %v2604 = vld [vmem:[%s2458 + $0x8] sm:$0xff]
        %v2605 = vld [vmem:[%s2458 + $0x10] sm:$0xff]
        %v2606 = vld [vmem:[%s2458 + $0x18] sm:$0xff]
        %v2607 = vld [vmem:[%s2458 + $0x20] sm:$0xff]
        %v2608 = vld [vmem:[%s2458 + $0x28] sm:$0xff]
        %v2609 = vld [vmem:[%s2458 + $0x30] sm:$0xff]
        %v2610 = vld [vmem:[%s2458 + $0x38] sm:$0xff]
        %v2611 = vld [vmem:[%s2458 + $0x40] sm:$0xff]
        %v2612 = vld [vmem:[%s2458 + $0x48] sm:$0xff]
        %v2613 = vld [vmem:[%s2458 + $0x50] sm:$0xff]
        %v2614 = vld [vmem:[%s2458 + $0x58] sm:$0xff]
        %v2615 = vld [vmem:[%s2458 + $0x60] sm:$0xff]
        %v2616 = vld [vmem:[%s2458 + $0x68] sm:$0xff]
        %v2617 = vld [vmem:[%s2458 + $0x70] sm:$0xff]
        %v2618 = vld [vmem:[%s2458 + $0x78] sm:$0xff]
        %v2619 = vld [vmem:[%s2458 + $0x80] sm:$0xff]
        %v2620 = vld [vmem:[%s2458 + $0x88] sm:$0xff]
        %v2621 = vld [vmem:[%s2458 + $0x90] sm:$0xff]
        %v2622 = vld [vmem:[%s2458 + $0x98] sm:$0xff]
        %v2623 = vld [vmem:[%s2458 + $0xa0] sm:$0xff]
        %v2624 = vld [vmem:[%s2458 + $0xa8] sm:$0xff]
        %v2625 = vld [vmem:[%s2458 + $0xb0] sm:$0xff]
        %v2626 = vld [vmem:[%s2458 + $0xb8] sm:$0xff]
        %v2627 = vld [vmem:[%s2458 + $0xc0] sm:$0xff]
        %v2628 = vld [vmem:[%s2458 + $0xc8] sm:$0xff]
        %v2629 = vld [vmem:[%s2458 + $0xd0] sm:$0xff]
        %v2630 = vld [vmem:[%s2458 + $0xd8] sm:$0xff]
        %v2631 = vld [vmem:[%s2458 + $0xe0] sm:$0xff]
        %v2632 = vld [vmem:[%s2458 + $0xe8] sm:$0xff]
        %v2633 = vld [vmem:[%s2458 + $0xf0] sm:$0xff]
        %v2634 = vld [vmem:[%s2458 + $0xf8] sm:$0xff]
        %s2635 = scalar_lea.vmem [#allocation3], 32
        %v2636 = vld [vmem:[%s2635] sm:$0xff]
        %v2637 = vld [vmem:[%s2635 + $0x8] sm:$0xff]
        %v2638 = vld [vmem:[%s2635 + $0x10] sm:$0xff]
        %v2639 = vld [vmem:[%s2635 + $0x18] sm:$0xff]
        %v2640 = vld [vmem:[%s2635 + $0x20] sm:$0xff]
        %v2641 = vld [vmem:[%s2635 + $0x28] sm:$0xff]
        %v2642 = vld [vmem:[%s2635 + $0x30] sm:$0xff]
        %v2643 = vld [vmem:[%s2635 + $0x38] sm:$0xff]
        %v2644 = vld [vmem:[%s2635 + $0x40] sm:$0xff]
        %v2645 = vld [vmem:[%s2635 + $0x48] sm:$0xff]
        %v2646 = vld [vmem:[%s2635 + $0x50] sm:$0xff]
        %v2647 = vld [vmem:[%s2635 + $0x58] sm:$0xff]
        %v2648 = vld [vmem:[%s2635 + $0x60] sm:$0xff]
        %v2649 = vld [vmem:[%s2635 + $0x68] sm:$0xff]
        %v2650 = vld [vmem:[%s2635 + $0x70] sm:$0xff]
        %v2651 = vld [vmem:[%s2635 + $0x78] sm:$0xff]
        %v2652 = vld [vmem:[%s2635 + $0x80] sm:$0xff]
        %v2653 = vld [vmem:[%s2635 + $0x88] sm:$0xff]
        %v2654 = vld [vmem:[%s2635 + $0x90] sm:$0xff]
        %v2655 = vld [vmem:[%s2635 + $0x98] sm:$0xff]
        %v2656 = vld [vmem:[%s2635 + $0xa0] sm:$0xff]
        %v2657 = vld [vmem:[%s2635 + $0xa8] sm:$0xff]
        %v2658 = vld [vmem:[%s2635 + $0xb0] sm:$0xff]
        %v2659 = vld [vmem:[%s2635 + $0xb8] sm:$0xff]
        %v2660 = vld [vmem:[%s2635 + $0xc0] sm:$0xff]
        %v2661 = vld [vmem:[%s2635 + $0xc8] sm:$0xff]
        %v2662 = vld [vmem:[%s2635 + $0xd0] sm:$0xff]
        %v2663 = vld [vmem:[%s2635 + $0xd8] sm:$0xff]
        %v2664 = vld [vmem:[%s2635 + $0xe0] sm:$0xff]
        %v2665 = vld [vmem:[%s2635 + $0xe8] sm:$0xff]
        %v2666 = vld [vmem:[%s2635 + $0xf0] sm:$0xff]
        %v2667 = vld [vmem:[%s2635 + $0xf8] sm:$0xff]
        %v2764 = vunpack.c.l.b16 %v2475
        %v2765 = vunpack.c.h.b16 %v2475
        %v2766 = vunpack.c.l.b16 %v2476
        %v2767 = vunpack.c.l.b16 %v2477
        %v2768 = vunpack.c.h.b16 %v2477
        %v2769 = vunpack.c.l.b16 %v2478
        %v2770 = vunpack.c.l.b16 %v2479
        %v2771 = vunpack.c.h.b16 %v2479
        %v2772 = vunpack.c.l.b16 %v2480
        %v2773 = vunpack.c.l.b16 %v2481
        %v2774 = vunpack.c.h.b16 %v2481
        %v2775 = vunpack.c.l.b16 %v2482
        %v2776 = vunpack.c.l.b16 %v2483
        %v2777 = vunpack.c.h.b16 %v2483
        %v2778 = vunpack.c.l.b16 %v2484
        %v2779 = vunpack.c.l.b16 %v2485
        %v2780 = vunpack.c.h.b16 %v2485
        %v2781 = vunpack.c.l.b16 %v2486
        %v2782 = vunpack.c.l.b16 %v2487
        %v2783 = vunpack.c.h.b16 %v2487
        %v2784 = vunpack.c.l.b16 %v2488
        %v2785 = vunpack.c.l.b16 %v2489
        %v2786 = vunpack.c.h.b16 %v2489
        %v2787 = vunpack.c.l.b16 %v2490
        %v2788 = vunpack.c.l.b16 %v2491
        %v2789 = vunpack.c.h.b16 %v2491
        %v2790 = vunpack.c.l.b16 %v2492
        %v2791 = vunpack.c.l.b16 %v2493
        %v2792 = vunpack.c.h.b16 %v2493
        %v2793 = vunpack.c.l.b16 %v2494
        %v2794 = vunpack.c.l.b16 %v2495
        %v2795 = vunpack.c.h.b16 %v2495
        %v2796 = vunpack.c.l.b16 %v2496
        %v2797 = vunpack.c.l.b16 %v2497
        %v2798 = vunpack.c.h.b16 %v2497
        %v2799 = vunpack.c.l.b16 %v2498
        %v2800 = vunpack.c.l.b16 %v2499
        %v2801 = vunpack.c.h.b16 %v2499
        %v2802 = vunpack.c.l.b16 %v2500
        %v2803 = vunpack.c.l.b16 %v2501
        %v2804 = vunpack.c.h.b16 %v2501
        %v2805 = vunpack.c.l.b16 %v2502
        %v2806 = vunpack.c.l.b16 %v2503
        %v2807 = vunpack.c.h.b16 %v2503
        %v2808 = vunpack.c.l.b16 %v2504
        %v2809 = vunpack.c.l.b16 %v2505
        %v2810 = vunpack.c.h.b16 %v2505
        %v2811 = vunpack.c.l.b16 %v2506
        %v2812 = vunpack.c.l.b16 %v2507
        %v2813 = vunpack.c.h.b16 %v2507
        %v2814 = vunpack.c.l.b16 %v2508
        %v2815 = vunpack.c.l.b16 %v2509
        %v2816 = vunpack.c.h.b16 %v2509
        %v2817 = vunpack.c.l.b16 %v2510
        %v2818 = vunpack.c.l.b16 %v2511
        %v2819 = vunpack.c.h.b16 %v2511
        %v2820 = vunpack.c.l.b16 %v2512
        %v2821 = vunpack.c.l.b16 %v2513
        %v2822 = vunpack.c.h.b16 %v2513
        %v2823 = vunpack.c.l.b16 %v2514
        %v2824 = vunpack.c.l.b16 %v2515
        %v2825 = vunpack.c.h.b16 %v2515
        %v2826 = vunpack.c.l.b16 %v2516
        %v2827 = vunpack.c.l.b16 %v2517
        %v2828 = vunpack.c.h.b16 %v2517
        %v2829 = vunpack.c.l.b16 %v2518
        %v2830 = vunpack.c.l.b16 %v2519
        %v2831 = vunpack.c.h.b16 %v2519
        %v2832 = vunpack.c.l.b16 %v2520
        %v2833 = vunpack.c.l.b16 %v2521
        %v2834 = vunpack.c.h.b16 %v2521
        %v2835 = vunpack.c.l.b16 %v2522
        %v2836 = vunpack.c.l.b16 %v2523
        %v2837 = vunpack.c.h.b16 %v2523
        %v2838 = vunpack.c.l.b16 %v2524
        %v2839 = vunpack.c.l.b16 %v2525
        %v2840 = vunpack.c.h.b16 %v2525
        %v2841 = vunpack.c.l.b16 %v2526
        %v2842 = vunpack.c.l.b16 %v2527
        %v2843 = vunpack.c.h.b16 %v2527
        %v2844 = vunpack.c.l.b16 %v2528
        %v2845 = vunpack.c.l.b16 %v2529
        %v2846 = vunpack.c.h.b16 %v2529
        %v2847 = vunpack.c.l.b16 %v2530
        %v2848 = vunpack.c.l.b16 %v2531
        %v2849 = vunpack.c.h.b16 %v2531
        %v2850 = vunpack.c.l.b16 %v2532
        %v2851 = vunpack.c.l.b16 %v2533
        %v2852 = vunpack.c.h.b16 %v2533
        %v2853 = vunpack.c.l.b16 %v2534
        %v2854 = vunpack.c.l.b16 %v2535
        %v2855 = vunpack.c.h.b16 %v2535
        %v2856 = vunpack.c.l.b16 %v2536
        %v2857 = vunpack.c.l.b16 %v2537
        %v2858 = vunpack.c.h.b16 %v2537
        %v2859 = vunpack.c.l.b16 %v2538
        %v2860 = vunpack.c.l.b16 %v2539
        %v2861 = vunpack.c.h.b16 %v2539
        %v2862 = vunpack.c.l.b16 %v2540
        %v2863 = vunpack.c.l.b16 %v2541
        %v2864 = vunpack.c.h.b16 %v2541
        %v2865 = vunpack.c.l.b16 %v2542
        %v2866 = vunpack.c.l.b16 %v2543
        %v2867 = vunpack.c.h.b16 %v2543
        %v2868 = vunpack.c.l.b16 %v2544
        %v2869 = vunpack.c.l.b16 %v2545
        %v2870 = vunpack.c.h.b16 %v2545
        %v2871 = vunpack.c.l.b16 %v2546
        %v2872 = vunpack.c.l.b16 %v2547
        %v2873 = vunpack.c.h.b16 %v2547
        %v2874 = vunpack.c.l.b16 %v2548
        %v2875 = vunpack.c.l.b16 %v2549
        %v2876 = vunpack.c.h.b16 %v2549
        %v2877 = vunpack.c.l.b16 %v2550
        %v2878 = vunpack.c.l.b16 %v2551
        %v2879 = vunpack.c.h.b16 %v2551
        %v2880 = vunpack.c.l.b16 %v2552
        %v2881 = vunpack.c.l.b16 %v2553
        %v2882 = vunpack.c.h.b16 %v2553
        %v2883 = vunpack.c.l.b16 %v2554
        %v2884 = vunpack.c.l.b16 %v2555
        %v2885 = vunpack.c.h.b16 %v2555
        %v2886 = vunpack.c.l.b16 %v2556
        %v2887 = vunpack.c.l.b16 %v2557
        %v2888 = vunpack.c.h.b16 %v2557
        %v2889 = vunpack.c.l.b16 %v2558
        %v2890 = vunpack.c.l.b16 %v2559
        %v2891 = vunpack.c.h.b16 %v2559
        %v2892 = vunpack.c.l.b16 %v2560
        %v2893 = vunpack.c.l.b16 %v2561
        %v2894 = vunpack.c.h.b16 %v2561
        %v2895 = vunpack.c.l.b16 %v2562
        %v2896 = vunpack.c.l.b16 %v2563
        %v2897 = vunpack.c.h.b16 %v2563
        %v2898 = vunpack.c.l.b16 %v2564
        %v2899 = vunpack.c.l.b16 %v2565
        %v2900 = vunpack.c.h.b16 %v2565
        %v2901 = vunpack.c.l.b16 %v2566
        %v2902 = vunpack.c.l.b16 %v2567
        %v2903 = vunpack.c.h.b16 %v2567
        %v2904 = vunpack.c.l.b16 %v2568
        %v2905 = vunpack.c.l.b16 %v2569
        %v2906 = vunpack.c.h.b16 %v2569
        %v2907 = vunpack.c.l.b16 %v2570
        %v2908 = vpack.c.b16 %v2767, %v2764
        %v2909 = vpack.c.b16 %v2768, %v2765
        %v2910 = vpack.c.b16 %v2769, %v2766
        %v2911 = vpack.c.b16 %v2773, %v2770
        %v2912 = vpack.c.b16 %v2774, %v2771
        %v2913 = vpack.c.b16 %v2775, %v2772
        %v2914 = vpack.c.b16 %v2779, %v2776
        %v2915 = vpack.c.b16 %v2780, %v2777
        %v2916 = vpack.c.b16 %v2781, %v2778
        %v2917 = vpack.c.b16 %v2785, %v2782
        %v2918 = vpack.c.b16 %v2786, %v2783
        %v2919 = vpack.c.b16 %v2787, %v2784
        %v2920 = vpack.c.b16 %v2791, %v2788
        %v2921 = vpack.c.b16 %v2792, %v2789
        %v2922 = vpack.c.b16 %v2793, %v2790
        %v2923 = vpack.c.b16 %v2797, %v2794
        %v2924 = vpack.c.b16 %v2798, %v2795
        %v2925 = vpack.c.b16 %v2799, %v2796
        %v2926 = vpack.c.b16 %v2803, %v2800
        %v2927 = vpack.c.b16 %v2804, %v2801
        %v2928 = vpack.c.b16 %v2805, %v2802
        %v2929 = vpack.c.b16 %v2809, %v2806
        %v2930 = vpack.c.b16 %v2810, %v2807
        %v2931 = vpack.c.b16 %v2811, %v2808
        %v2932 = vpack.c.b16 %v2815, %v2812
        %v2933 = vpack.c.b16 %v2816, %v2813
        %v2934 = vpack.c.b16 %v2817, %v2814
        %v2935 = vpack.c.b16 %v2821, %v2818
        %v2936 = vpack.c.b16 %v2822, %v2819
        %v2937 = vpack.c.b16 %v2823, %v2820
        %v2938 = vpack.c.b16 %v2827, %v2824
        %v2939 = vpack.c.b16 %v2828, %v2825
        %v2940 = vpack.c.b16 %v2829, %v2826
        %v2941 = vpack.c.b16 %v2833, %v2830
        %v2942 = vpack.c.b16 %v2834, %v2831
        %v2943 = vpack.c.b16 %v2835, %v2832
        %v2944 = vpack.c.b16 %v2839, %v2836
        %v2945 = vpack.c.b16 %v2840, %v2837
        %v2946 = vpack.c.b16 %v2841, %v2838
        %v2947 = vpack.c.b16 %v2845, %v2842
        %v2948 = vpack.c.b16 %v2846, %v2843
        %v2949 = vpack.c.b16 %v2847, %v2844
        %v2950 = vpack.c.b16 %v2851, %v2848
        %v2951 = vpack.c.b16 %v2852, %v2849
        %v2952 = vpack.c.b16 %v2853, %v2850
        %v2953 = vpack.c.b16 %v2857, %v2854
        %v2954 = vpack.c.b16 %v2858, %v2855
        %v2955 = vpack.c.b16 %v2859, %v2856
        %v2956 = vpack.c.b16 %v2863, %v2860
        %v2957 = vpack.c.b16 %v2864, %v2861
        %v2958 = vpack.c.b16 %v2865, %v2862
        %v2959 = vpack.c.b16 %v2869, %v2866
        %v2960 = vpack.c.b16 %v2870, %v2867
        %v2961 = vpack.c.b16 %v2871, %v2868
        %v2962 = vpack.c.b16 %v2875, %v2872
        %v2963 = vpack.c.b16 %v2876, %v2873
        %v2964 = vpack.c.b16 %v2877, %v2874
        %v2965 = vpack.c.b16 %v2881, %v2878
        %v2966 = vpack.c.b16 %v2882, %v2879
        %v2967 = vpack.c.b16 %v2883, %v2880
        %v2968 = vpack.c.b16 %v2887, %v2884
        %v2969 = vpack.c.b16 %v2888, %v2885
        %v2970 = vpack.c.b16 %v2889, %v2886
        %v2971 = vpack.c.b16 %v2893, %v2890
        %v2972 = vpack.c.b16 %v2894, %v2891
        %v2973 = vpack.c.b16 %v2895, %v2892
        %v2974 = vpack.c.b16 %v2899, %v2896
        %v2975 = vpack.c.b16 %v2900, %v2897
        %v2976 = vpack.c.b16 %v2901, %v2898
        %v2977 = vpack.c.b16 %v2905, %v2902
        %v2978 = vpack.c.b16 %v2906, %v2903
        %v2979 = vpack.c.b16 %v2907, %v2904
        %3052 = vmatprep.subr.bf16.mxu0 %v2909
        %3053 = vmatpush1.bf16.msra.mxu0 %v2908
        %3054 = vmatprep.subr.bf16.mxu0 %v2912
        %3055 = vmatpush1.bf16.msra.mxu0 %v2911
        %3056 = vmatprep.subr.bf16.mxu0 %v2915
        %3057 = vmatpush1.bf16.msra.mxu0 %v2914
        %3058 = vmatprep.subr.bf16.mxu0 %v2918
        %3059 = vmatpush1.bf16.msra.mxu0 %v2917
        %3060 = vmatprep.subr.bf16.mxu0 %v2921
        %3061 = vmatpush1.bf16.msra.mxu0 %v2920
        %3062 = vmatprep.subr.bf16.mxu0 %v2924
        %3063 = vmatpush1.bf16.msra.mxu0 %v2923
        %3064 = vmatprep.subr.bf16.mxu0 %v2927
        %3065 = vmatpush1.bf16.msra.mxu0 %v2926
        %3066 = vmatprep.subr.bf16.mxu0 %v2930
        %3067 = vmatpush1.bf16.msra.mxu0 %v2929
        %3068 = vmatprep.subr.bf16.mxu0 %v2933
        %3069 = vmatpush1.bf16.msra.mxu0 %v2932
        %3070 = vmatprep.subr.bf16.mxu0 %v2936
        %3071 = vmatpush1.bf16.msra.mxu0 %v2935
        %3072 = vmatprep.subr.bf16.mxu0 %v2939
        %3073 = vmatpush1.bf16.msra.mxu0 %v2938
        %3074 = vmatprep.subr.bf16.mxu0 %v2942
        %3075 = vmatpush1.bf16.msra.mxu0 %v2941
        %3076 = vmatprep.subr.bf16.mxu0 %v2945
        %3077 = vmatpush1.bf16.msra.mxu0 %v2944
        %3078 = vmatprep.subr.bf16.mxu0 %v2948
        %3079 = vmatpush1.bf16.msra.mxu0 %v2947
        %3080 = vmatprep.subr.bf16.mxu0 %v2951
        %3081 = vmatpush1.bf16.msra.mxu0 %v2950
        %3082 = vmatprep.subr.bf16.mxu0 %v2954
        %3083 = vmatpush1.bf16.msra.mxu0 %v2953
        %3084 = vmatprep.mubr.bf16.mxu0 %v2603
        %3085 = vmatmul.mubr.bf16.gmra.mrb[0].mxu0 %v2571
        %v3086 = vpop.f32.mrb[0].mxu0
        %v3087 = vadd.f32 0.0, %v3086
        %v3088 = vpop.f32.mrb[0].mxu0
        %v3089 = vadd.f32 0.0, %v3088
        %v3090 = vpop.f32.mrb[0].mxu0
        %v3091 = vadd.f32 0.0, %v3090
        %v3092 = vpop.f32.mrb[0].mxu0
        %v3093 = vadd.f32 0.0, %v3092
        %3094 = vmatprep.mubr.bf16.mxu0 %v2604
        %3095 = vmatmul.mubr.bf16.gmra.mrb[0].mxu0 %v2572
        %v3096 = vpop.f32.mrb[0].mxu0
        %v3097 = vpop.f32.mrb[0].mxu0
        %v3098 = vpop.f32.mrb[0].mxu0
        %v3099 = vadd.f32 0.0, %v3098
        %v3100 = vpop.f32.mrb[0].mxu0
        %3101 = vmatprep.mubr.bf16.mxu0 %v2605
        %3102 = vmatmul.mubr.bf16.gmra.mrb[0].mxu0 %v2573
        %v3103 = vpop.f32.mrb[0].mxu0
        %v3104 = vadd.f32 0.0, %v3103
        %v3105 = vpop.f32.mrb[0].mxu0
        %v3106 = vadd.f32 0.0, %v3105
        %v3107 = vpop.f32.mrb[0].mxu0
        %v3108 = vadd.f32 0.0, %v3107
        %v3109 = vpop.f32.mrb[0].mxu0
        %v3110 = vadd.f32 0.0, %v3109
        %3111 = vmatprep.mubr.bf16.mxu0 %v2606
        %3112 = vmatmul.mubr.bf16.gmra.mrb[0].mxu0 %v2574
        %v3113 = vpop.f32.mrb[0].mxu0
        %v3114 = vpop.f32.mrb[0].mxu0
        %v3115 = vpop.f32.mrb[0].mxu0
        %v3116 = vadd.f32 0.0, %v3115
        %v3117 = vpop.f32.mrb[0].mxu0
        %3118 = vmatprep.mubr.bf16.mxu0 %v2607
        %3119 = vmatmul.mubr.bf16.gmra.mrb[0].mxu0 %v2575
        %v3120 = vpop.f32.mrb[0].mxu0
        %v3121 = vadd.f32 0.0, %v3120
        %v3122 = vpop.f32.mrb[0].mxu0
        %v3123 = vadd.f32 0.0, %v3122
        %v3124 = vpop.f32.mrb[0].mxu0
        %v3125 = vadd.f32 0.0, %v3124
        %v3126 = vpop.f32.mrb[0].mxu0
        %v3127 = vadd.f32 0.0, %v3126
        %3128 = vmatprep.mubr.bf16.mxu0 %v2608
        %3129 = vmatmul.mubr.bf16.gmra.mrb[0].mxu0 %v2576
        %v3130 = vpop.f32.mrb[0].mxu0
        %v3131 = vpop.f32.mrb[0].mxu0
        %v3132 = vpop.f32.mrb[0].mxu0
        %v3133 = vadd.f32 0.0, %v3132
        %v3134 = vpop.f32.mrb[0].mxu0
        %3135 = vmatprep.mubr.bf16.mxu0 %v2609
        %3136 = vmatmul.mubr.bf16.gmra.mrb[0].mxu0 %v2577
        %v3137 = vpop.f32.mrb[0].mxu0
        %v3138 = vadd.f32 0.0, %v3137
        %v3139 = vpop.f32.mrb[0].mxu0
        %v3140 = vadd.f32 0.0, %v3139
        %v3141 = vpop.f32.mrb[0].mxu0
        %v3142 = vadd.f32 0.0, %v3141
        %v3143 = vpop.f32.mrb[0].mxu0
        %v3144 = vadd.f32 0.0, %v3143
        %3145 = vmatprep.mubr.bf16.mxu0 %v2610
        %3146 = vmatmul.mubr.bf16.gmra.mrb[0].mxu0 %v2578
        %v3147 = vpop.f32.mrb[0].mxu0
        %v3148 = vpop.f32.mrb[0].mxu0
        %v3149 = vpop.f32.mrb[0].mxu0
        %v3150 = vadd.f32 0.0, %v3149
        %v3151 = vpop.f32.mrb[0].mxu0
        %3152 = vmatprep.mubr.bf16.mxu0 %v2611
        %3153 = vmatmul.mubr.bf16.gmra.mrb[0].mxu0 %v2579
        %v3154 = vpop.f32.mrb[0].mxu0
        %v3155 = vadd.f32 0.0, %v3154
        %v3156 = vpop.f32.mrb[0].mxu0
        %v3157 = vadd.f32 0.0, %v3156
        %v3158 = vpop.f32.mrb[0].mxu0
        %v3159 = vadd.f32 0.0, %v3158
        %v3160 = vpop.f32.mrb[0].mxu0
        %v3161 = vadd.f32 0.0, %v3160
        %3162 = vmatprep.mubr.bf16.mxu0 %v2612
        %3163 = vmatmul.mubr.bf16.gmra.mrb[0].mxu0 %v2580
        %v3164 = vpop.f32.mrb[0].mxu0
        %v3165 = vpop.f32.mrb[0].mxu0
        %v3166 = vpop.f32.mrb[0].mxu0
        %v3167 = vadd.f32 0.0, %v3166
        %v3168 = vpop.f32.mrb[0].mxu0
        %3169 = vmatprep.mubr.bf16.mxu0 %v2613
        %3170 = vmatmul.mubr.bf16.gmra.mrb[0].mxu0 %v2581
        %v3171 = vpop.f32.mrb[0].mxu0
        %v3172 = vadd.f32 0.0, %v3171
        %v3173 = vpop.f32.mrb[0].mxu0
        %v3174 = vadd.f32 0.0, %v3173
        %v3175 = vpop.f32.mrb[0].mxu0
        %v3176 = vadd.f32 0.0, %v3175
        %v3177 = vpop.f32.mrb[0].mxu0
        %v3178 = vadd.f32 0.0, %v3177
        %3179 = vmatprep.mubr.bf16.mxu0 %v2614
        %3180 = vmatmul.mubr.bf16.gmra.mrb[0].mxu0 %v2582
        %v3181 = vpop.f32.mrb[0].mxu0
        %v3182 = vpop.f32.mrb[0].mxu0
        %v3183 = vpop.f32.mrb[0].mxu0
        %v3184 = vadd.f32 0.0, %v3183
        %v3185 = vpop.f32.mrb[0].mxu0
        %3186 = vmatprep.mubr.bf16.mxu0 %v2615
        %3187 = vmatmul.mubr.bf16.gmra.mrb[0].mxu0 %v2583
        %v3188 = vpop.f32.mrb[0].mxu0
        %v3189 = vadd.f32 0.0, %v3188
        %v3190 = vpop.f32.mrb[0].mxu0
        %v3191 = vadd.f32 0.0, %v3190
        %v3192 = vpop.f32.mrb[0].mxu0
        %v3193 = vadd.f32 0.0, %v3192
        %v3194 = vpop.f32.mrb[0].mxu0
        %v3195 = vadd.f32 0.0, %v3194
        %3196 = vmatprep.mubr.bf16.mxu0 %v2616
        %3197 = vmatmul.mubr.bf16.gmra.mrb[0].mxu0 %v2584
        %v3198 = vpop.f32.mrb[0].mxu0
        %v3199 = vpop.f32.mrb[0].mxu0
        %v3200 = vpop.f32.mrb[0].mxu0
        %v3201 = vadd.f32 0.0, %v3200
        %v3202 = vpop.f32.mrb[0].mxu0
        %3203 = vmatprep.mubr.bf16.mxu0 %v2617
        %3204 = vmatmul.mubr.bf16.gmra.mrb[0].mxu0 %v2585
        %v3205 = vpop.f32.mrb[0].mxu0
        %v3206 = vadd.f32 0.0, %v3205
        %v3207 = vpop.f32.mrb[0].mxu0
        %v3208 = vadd.f32 0.0, %v3207
        %v3209 = vpop.f32.mrb[0].mxu0
        %v3210 = vadd.f32 0.0, %v3209
        %v3211 = vpop.f32.mrb[0].mxu0
        %v3212 = vadd.f32 0.0, %v3211
        %3213 = vmatprep.mubr.bf16.mxu0 %v2618
        %3214 = vmatmul.mubr.bf16.gmra.mrb[0].mxu0 %v2586
        %v3215 = vpop.f32.mrb[0].mxu0
        %v3216 = vpop.f32.mrb[0].mxu0
        %v3217 = vpop.f32.mrb[0].mxu0
        %v3218 = vadd.f32 0.0, %v3217
        %v3219 = vpop.f32.mrb[0].mxu0
        %3220 = vmatprep.mubr.bf16.mxu0 %v2619
        %3221 = vmatmul.mubr.bf16.gmra.mrb[0].mxu0 %v2587
        %v3222 = vpop.f32.mrb[0].mxu0
        %v3223 = vadd.f32 0.0, %v3222
        %v3224 = vpop.f32.mrb[0].mxu0
        %v3225 = vadd.f32 0.0, %v3224
        %v3226 = vpop.f32.mrb[0].mxu0
        %v3227 = vadd.f32 0.0, %v3226
        %v3228 = vpop.f32.mrb[0].mxu0
        %v3229 = vadd.f32 0.0, %v3228
        %3230 = vmatprep.mubr.bf16.mxu0 %v2620
        %3231 = vmatmul.mubr.bf16.gmra.mrb[0].mxu0 %v2588
        %v3232 = vpop.f32.mrb[0].mxu0
        %v3233 = vpop.f32.mrb[0].mxu0
        %v3234 = vpop.f32.mrb[0].mxu0
        %v3235 = vadd.f32 0.0, %v3234
        %v3236 = vpop.f32.mrb[0].mxu0
        %3237 = vmatprep.mubr.bf16.mxu0 %v2621
        %3238 = vmatmul.mubr.bf16.gmra.mrb[0].mxu0 %v2589
        %v3239 = vpop.f32.mrb[0].mxu0
        %v3240 = vadd.f32 0.0, %v3239
        %v3241 = vpop.f32.mrb[0].mxu0
        %v3242 = vadd.f32 0.0, %v3241
        %v3243 = vpop.f32.mrb[0].mxu0
        %v3244 = vadd.f32 0.0, %v3243
        %v3245 = vpop.f32.mrb[0].mxu0
        %v3246 = vadd.f32 0.0, %v3245
        %3247 = vmatprep.mubr.bf16.mxu0 %v2622
        %3248 = vmatmul.mubr.bf16.gmra.mrb[0].mxu0 %v2590
        %v3249 = vpop.f32.mrb[0].mxu0
        %v3250 = vpop.f32.mrb[0].mxu0
        %v3251 = vpop.f32.mrb[0].mxu0
        %v3252 = vadd.f32 0.0, %v3251
        %v3253 = vpop.f32.mrb[0].mxu0
        %3254 = vmatprep.mubr.bf16.mxu0 %v2623
        %3255 = vmatmul.mubr.bf16.gmra.mrb[0].mxu0 %v2591
        %v3256 = vpop.f32.mrb[0].mxu0
        %v3257 = vadd.f32 0.0, %v3256
        %v3258 = vpop.f32.mrb[0].mxu0
        %v3259 = vadd.f32 0.0, %v3258
        %v3260 = vpop.f32.mrb[0].mxu0
        %v3261 = vadd.f32 0.0, %v3260
        %v3262 = vpop.f32.mrb[0].mxu0
        %v3263 = vadd.f32 0.0, %v3262
        %3264 = vmatprep.mubr.bf16.mxu0 %v2624
        %3265 = vmatmul.mubr.bf16.gmra.mrb[0].mxu0 %v2592
        %v3266 = vpop.f32.mrb[0].mxu0
        %v3267 = vpop.f32.mrb[0].mxu0
        %v3268 = vpop.f32.mrb[0].mxu0
        %v3269 = vadd.f32 0.0, %v3268
        %v3270 = vpop.f32.mrb[0].mxu0
        %3271 = vmatprep.mubr.bf16.mxu0 %v2625
        %3272 = vmatmul.mubr.bf16.gmra.mrb[0].mxu0 %v2593
        %v3273 = vpop.f32.mrb[0].mxu0
        %v3274 = vadd.f32 0.0, %v3273
        %v3275 = vpop.f32.mrb[0].mxu0
        %v3276 = vadd.f32 0.0, %v3275
        %v3277 = vpop.f32.mrb[0].mxu0
        %v3278 = vadd.f32 0.0, %v3277
        %v3279 = vpop.f32.mrb[0].mxu0
        %v3280 = vadd.f32 0.0, %v3279
        %3281 = vmatprep.mubr.bf16.mxu0 %v2626
        %3282 = vmatmul.mubr.bf16.gmra.mrb[0].mxu0 %v2594
        %v3283 = vpop.f32.mrb[0].mxu0
        %v3284 = vpop.f32.mrb[0].mxu0
        %v3285 = vpop.f32.mrb[0].mxu0
        %v3286 = vadd.f32 0.0, %v3285
        %v3287 = vpop.f32.mrb[0].mxu0
        %3288 = vmatprep.mubr.bf16.mxu0 %v2627
        %3289 = vmatmul.mubr.bf16.gmra.mrb[0].mxu0 %v2595
        %v3290 = vpop.f32.mrb[0].mxu0
        %v3291 = vadd.f32 0.0, %v3290
        %v3292 = vpop.f32.mrb[0].mxu0
        %v3293 = vadd.f32 0.0, %v3292
        %v3294 = vpop.f32.mrb[0].mxu0
        %v3295 = vadd.f32 0.0, %v3294
        %v3296 = vpop.f32.mrb[0].mxu0
        %v3297 = vadd.f32 0.0, %v3296
        %3298 = vmatprep.mubr.bf16.mxu0 %v2628
        %3299 = vmatmul.mubr.bf16.gmra.mrb[0].mxu0 %v2596
        %v3300 = vpop.f32.mrb[0].mxu0
        %v3301 = vpop.f32.mrb[0].mxu0
        %v3302 = vpop.f32.mrb[0].mxu0
        %v3303 = vadd.f32 0.0, %v3302
        %v3304 = vpop.f32.mrb[0].mxu0
        %3305 = vmatprep.mubr.bf16.mxu0 %v2629
        %3306 = vmatmul.mubr.bf16.gmra.mrb[0].mxu0 %v2597
        %v3307 = vpop.f32.mrb[0].mxu0
        %v3308 = vadd.f32 0.0, %v3307
        %v3309 = vpop.f32.mrb[0].mxu0
        %v3310 = vadd.f32 0.0, %v3309
        %v3311 = vpop.f32.mrb[0].mxu0
        %v3312 = vadd.f32 0.0, %v3311
        %v3313 = vpop.f32.mrb[0].mxu0
        %v3314 = vadd.f32 0.0, %v3313
        %3315 = vmatprep.mubr.bf16.mxu0 %v2630
        %3316 = vmatmul.mubr.bf16.gmra.mrb[0].mxu0 %v2598
        %v3317 = vpop.f32.mrb[0].mxu0
        %v3318 = vpop.f32.mrb[0].mxu0
        %v3319 = vpop.f32.mrb[0].mxu0
        %v3320 = vadd.f32 0.0, %v3319
        %v3321 = vpop.f32.mrb[0].mxu0
        %3322 = vmatprep.mubr.bf16.mxu0 %v2631
        %3323 = vmatmul.mubr.bf16.gmra.mrb[0].mxu0 %v2599
        %v3324 = vpop.f32.mrb[0].mxu0
        %v3325 = vadd.f32 0.0, %v3324
        %v3326 = vpop.f32.mrb[0].mxu0
        %v3327 = vadd.f32 0.0, %v3326
        %v3328 = vpop.f32.mrb[0].mxu0
        %v3329 = vadd.f32 0.0, %v3328
        %v3330 = vpop.f32.mrb[0].mxu0
        %v3331 = vadd.f32 0.0, %v3330
        %3332 = vmatprep.mubr.bf16.mxu0 %v2632
        %3333 = vmatmul.mubr.bf16.gmra.mrb[0].mxu0 %v2600
        %v3334 = vpop.f32.mrb[0].mxu0
        %v3335 = vpop.f32.mrb[0].mxu0
        %v3336 = vpop.f32.mrb[0].mxu0
        %v3337 = vadd.f32 0.0, %v3336
        %v3338 = vpop.f32.mrb[0].mxu0
        %3339 = vmatprep.mubr.bf16.mxu0 %v2633
        %3340 = vmatmul.mubr.bf16.gmra.mrb[0].mxu0 %v2601
        %v3341 = vpop.f32.mrb[0].mxu0
        %v3342 = vadd.f32 0.0, %v3341
        %v3343 = vpop.f32.mrb[0].mxu0
        %v3344 = vadd.f32 0.0, %v3343
        %v3345 = vpop.f32.mrb[0].mxu0
        %v3346 = vadd.f32 0.0, %v3345
        %v3347 = vpop.f32.mrb[0].mxu0
        %v3348 = vadd.f32 0.0, %v3347
        %3349 = vmatprep.mubr.bf16.mxu0 %v2634
        %3350 = vmatmul.mubr.bf16.gmra.mrb[0].mxu0 %v2602
        %v3351 = vpop.f32.mrb[0].mxu0
        %v3352 = vpop.f32.mrb[0].mxu0
        %v3353 = vpop.f32.mrb[0].mxu0
        %v3354 = vadd.f32 0.0, %v3353
        %v3355 = vpop.f32.mrb[0].mxu0
        %3356 = vdwg.mxu0
        %3357 = vmatprep.subr.bf16.mxu0 %v2957
        %3358 = vmatpush1.bf16.msra.mxu0 %v2956
        %3359 = vmatprep.subr.bf16.mxu0 %v2960
        %3360 = vmatpush1.bf16.msra.mxu0 %v2959
        %3361 = vmatprep.subr.bf16.mxu0 %v2963
        %3362 = vmatpush1.bf16.msra.mxu0 %v2962
        %3363 = vmatprep.subr.bf16.mxu0 %v2966
        %3364 = vmatpush1.bf16.msra.mxu0 %v2965
        %3365 = vmatprep.subr.bf16.mxu0 %v2969
        %3366 = vmatpush1.bf16.msra.mxu0 %v2968
        %3367 = vmatprep.subr.bf16.mxu0 %v2972
        %3368 = vmatpush1.bf16.msra.mxu0 %v2971
        %3369 = vmatprep.subr.bf16.mxu0 %v2975
        %3370 = vmatpush1.bf16.msra.mxu0 %v2974
        %3371 = vmatprep.subr.bf16.mxu0 %v2978
        %3372 = vmatpush1.bf16.msra.mxu0 %v2977
        %3373 = vmatprep.subr.bf16.mxu0 0
        %3374 = vmatpush1.bf16.msra.mxu0 0
        %3375 = vmatprep.subr.bf16.mxu0 0
        %3376 = vmatpush1.bf16.msra.mxu0 0
        %3377 = vmatprep.subr.bf16.mxu0 0
        %3378 = vmatpush1.bf16.msra.mxu0 0
        %3379 = vmatprep.subr.bf16.mxu0 0
        %3380 = vmatpush1.bf16.msra.mxu0 0
        %3381 = vmatprep.subr.bf16.mxu0 0
        %3382 = vmatpush1.bf16.msra.mxu0 0
        %3383 = vmatprep.subr.bf16.mxu0 0
        %3384 = vmatpush1.bf16.msra.mxu0 0
        %3385 = vmatprep.subr.bf16.mxu0 0
        %3386 = vmatpush1.bf16.msra.mxu0 0
        %3387 = vmatprep.subr.bf16.mxu0 0
        %3388 = vmatpush1.bf16.msra.mxu0 0
        %3389 = vmatprep.mubr.bf16.mxu0 0
        %3390 = vmatmul.mubr.bf16.gmra.mrb[0].mxu0 %v2636
        %v3391 = vpop.f32.mrb[0].mxu0
        %v3392 = vadd.f32 %v3087, %v3391
        %v3393 = vpop.f32.mrb[0].mxu0
        %v3394 = vadd.f32 %v3089, %v3393
        %v3395 = vpop.f32.mrb[0].mxu0
        %v3396 = vadd.f32 %v3091, %v3395
        %v3397 = vpop.f32.mrb[0].mxu0
        %v3398 = vadd.f32 %v3093, %v3397
        %3399 = vmatprep.mubr.bf16.mxu0 0
        %3400 = vmatmul.mubr.bf16.gmra.mrb[0].mxu0 %v2637
        %v3401 = vpop.f32.mrb[0].mxu0
        %v3402 = vpop.f32.mrb[0].mxu0
        %v3403 = vpop.f32.mrb[0].mxu0
        %v3404 = vadd.f32 %v3099, %v3403
        %v3405 = vpop.f32.mrb[0].mxu0
        %3406 = vmatprep.mubr.bf16.mxu0 0
        %3407 = vmatmul.mubr.bf16.gmra.mrb[0].mxu0 %v2638
        %v3408 = vpop.f32.mrb[0].mxu0
        %v3409 = vadd.f32 %v3104, %v3408
        %v3410 = vpop.f32.mrb[0].mxu0
        %v3411 = vadd.f32 %v3106, %v3410
        %v3412 = vpop.f32.mrb[0].mxu0
        %v3413 = vadd.f32 %v3108, %v3412
        %v3414 = vpop.f32.mrb[0].mxu0
        %v3415 = vadd.f32 %v3110, %v3414
        %3416 = vmatprep.mubr.bf16.mxu0 0
        %3417 = vmatmul.mubr.bf16.gmra.mrb[0].mxu0 %v2639
        %v3418 = vpop.f32.mrb[0].mxu0
        %v3419 = vpop.f32.mrb[0].mxu0
        %v3420 = vpop.f32.mrb[0].mxu0
        %v3421 = vadd.f32 %v3116, %v3420
        %v3422 = vpop.f32.mrb[0].mxu0
        %3423 = vmatprep.mubr.bf16.mxu0 0
        %3424 = vmatmul.mubr.bf16.gmra.mrb[0].mxu0 %v2640
        %v3425 = vpop.f32.mrb[0].mxu0
        %v3426 = vadd.f32 %v3121, %v3425
        %v3427 = vpop.f32.mrb[0].mxu0
        %v3428 = vadd.f32 %v3123, %v3427
        %v3429 = vpop.f32.mrb[0].mxu0
        %v3430 = vadd.f32 %v3125, %v3429
        %v3431 = vpop.f32.mrb[0].mxu0
        %v3432 = vadd.f32 %v3127, %v3431
        %3433 = vmatprep.mubr.bf16.mxu0 0
        %3434 = vmatmul.mubr.bf16.gmra.mrb[0].mxu0 %v2641
        %v3435 = vpop.f32.mrb[0].mxu0
        %v3436 = vpop.f32.mrb[0].mxu0
        %v3437 = vpop.f32.mrb[0].mxu0
        %v3438 = vadd.f32 %v3133, %v3437
        %v3439 = vpop.f32.mrb[0].mxu0
        %3440 = vmatprep.mubr.bf16.mxu0 0
        %3441 = vmatmul.mubr.bf16.gmra.mrb[0].mxu0 %v2642
        %v3442 = vpop.f32.mrb[0].mxu0
        %v3443 = vadd.f32 %v3138, %v3442
        %v3444 = vpop.f32.mrb[0].mxu0
        %v3445 = vadd.f32 %v3140, %v3444
        %v3446 = vpop.f32.mrb[0].mxu0
        %v3447 = vadd.f32 %v3142, %v3446
        %v3448 = vpop.f32.mrb[0].mxu0
        %v3449 = vadd.f32 %v3144, %v3448
        %3450 = vmatprep.mubr.bf16.mxu0 0
        %3451 = vmatmul.mubr.bf16.gmra.mrb[0].mxu0 %v2643
        %v3452 = vpop.f32.mrb[0].mxu0
        %v3453 = vpop.f32.mrb[0].mxu0
        %v3454 = vpop.f32.mrb[0].mxu0
        %v3455 = vadd.f32 %v3150, %v3454
        %v3456 = vpop.f32.mrb[0].mxu0
        %3457 = vmatprep.mubr.bf16.mxu0 0
        %3458 = vmatmul.mubr.bf16.gmra.mrb[0].mxu0 %v2644
        %v3459 = vpop.f32.mrb[0].mxu0
        %v3460 = vadd.f32 %v3155, %v3459
        %v3461 = vpop.f32.mrb[0].mxu0
        %v3462 = vadd.f32 %v3157, %v3461
        %v3463 = vpop.f32.mrb[0].mxu0
        %v3464 = vadd.f32 %v3159, %v3463
        %v3465 = vpop.f32.mrb[0].mxu0
        %v3466 = vadd.f32 %v3161, %v3465
        %3467 = vmatprep.mubr.bf16.mxu0 0
        %3468 = vmatmul.mubr.bf16.gmra.mrb[0].mxu0 %v2645
        %v3469 = vpop.f32.mrb[0].mxu0
        %v3470 = vpop.f32.mrb[0].mxu0
        %v3471 = vpop.f32.mrb[0].mxu0
        %v3472 = vadd.f32 %v3167, %v3471
        %v3473 = vpop.f32.mrb[0].mxu0
        %3474 = vmatprep.mubr.bf16.mxu0 0
        %3475 = vmatmul.mubr.bf16.gmra.mrb[0].mxu0 %v2646
        %v3476 = vpop.f32.mrb[0].mxu0
        %v3477 = vadd.f32 %v3172, %v3476
        %v3478 = vpop.f32.mrb[0].mxu0
        %v3479 = vadd.f32 %v3174, %v3478
        %v3480 = vpop.f32.mrb[0].mxu0
        %v3481 = vadd.f32 %v3176, %v3480
        %v3482 = vpop.f32.mrb[0].mxu0
        %v3483 = vadd.f32 %v3178, %v3482
        %3484 = vmatprep.mubr.bf16.mxu0 0
        %3485 = vmatmul.mubr.bf16.gmra.mrb[0].mxu0 %v2647
        %v3486 = vpop.f32.mrb[0].mxu0
        %v3487 = vpop.f32.mrb[0].mxu0
        %v3488 = vpop.f32.mrb[0].mxu0
        %v3489 = vadd.f32 %v3184, %v3488
        %v3490 = vpop.f32.mrb[0].mxu0
        %3491 = vmatprep.mubr.bf16.mxu0 0
        %3492 = vmatmul.mubr.bf16.gmra.mrb[0].mxu0 %v2648
        %v3493 = vpop.f32.mrb[0].mxu0
        %v3494 = vadd.f32 %v3189, %v3493
        %v3495 = vpop.f32.mrb[0].mxu0
        %v3496 = vadd.f32 %v3191, %v3495
        %v3497 = vpop.f32.mrb[0].mxu0
        %v3498 = vadd.f32 %v3193, %v3497
        %v3499 = vpop.f32.mrb[0].mxu0
        %v3500 = vadd.f32 %v3195, %v3499
        %3501 = vmatprep.mubr.bf16.mxu0 0
        %3502 = vmatmul.mubr.bf16.gmra.mrb[0].mxu0 %v2649
        %v3503 = vpop.f32.mrb[0].mxu0
        %v3504 = vpop.f32.mrb[0].mxu0
        %v3505 = vpop.f32.mrb[0].mxu0
        %v3506 = vadd.f32 %v3201, %v3505
        %v3507 = vpop.f32.mrb[0].mxu0
        %3508 = vmatprep.mubr.bf16.mxu0 0
        %3509 = vmatmul.mubr.bf16.gmra.mrb[0].mxu0 %v2650
        %v3510 = vpop.f32.mrb[0].mxu0
        %v3511 = vadd.f32 %v3206, %v3510
        %v3512 = vpop.f32.mrb[0].mxu0
        %v3513 = vadd.f32 %v3208, %v3512
        %v3514 = vpop.f32.mrb[0].mxu0
        %v3515 = vadd.f32 %v3210, %v3514
        %v3516 = vpop.f32.mrb[0].mxu0
        %v3517 = vadd.f32 %v3212, %v3516
        %3518 = vmatprep.mubr.bf16.mxu0 0
        %3519 = vmatmul.mubr.bf16.gmra.mrb[0].mxu0 %v2651
        %v3520 = vpop.f32.mrb[0].mxu0
        %v3521 = vpop.f32.mrb[0].mxu0
        %v3522 = vpop.f32.mrb[0].mxu0
        %v3523 = vadd.f32 %v3218, %v3522
        %v3524 = vpop.f32.mrb[0].mxu0
        %3525 = vmatprep.mubr.bf16.mxu0 0
        %3526 = vmatmul.mubr.bf16.gmra.mrb[0].mxu0 %v2652
        %v3527 = vpop.f32.mrb[0].mxu0
        %v3528 = vadd.f32 %v3223, %v3527
        %v3529 = vpop.f32.mrb[0].mxu0
        %v3530 = vadd.f32 %v3225, %v3529
        %v3531 = vpop.f32.mrb[0].mxu0
        %v3532 = vadd.f32 %v3227, %v3531
        %v3533 = vpop.f32.mrb[0].mxu0
        %v3534 = vadd.f32 %v3229, %v3533
        %3535 = vmatprep.mubr.bf16.mxu0 0
        %3536 = vmatmul.mubr.bf16.gmra.mrb[0].mxu0 %v2653
        %v3537 = vpop.f32.mrb[0].mxu0
        %v3538 = vpop.f32.mrb[0].mxu0
        %v3539 = vpop.f32.mrb[0].mxu0
        %v3540 = vadd.f32 %v3235, %v3539
        %v3541 = vpop.f32.mrb[0].mxu0
        %3542 = vmatprep.mubr.bf16.mxu0 0
        %3543 = vmatmul.mubr.bf16.gmra.mrb[0].mxu0 %v2654
        %v3544 = vpop.f32.mrb[0].mxu0
        %v3545 = vadd.f32 %v3240, %v3544
        %v3546 = vpop.f32.mrb[0].mxu0
        %v3547 = vadd.f32 %v3242, %v3546
        %v3548 = vpop.f32.mrb[0].mxu0
        %v3549 = vadd.f32 %v3244, %v3548
        %v3550 = vpop.f32.mrb[0].mxu0
        %v3551 = vadd.f32 %v3246, %v3550
        %3552 = vmatprep.mubr.bf16.mxu0 0
        %3553 = vmatmul.mubr.bf16.gmra.mrb[0].mxu0 %v2655
        %v3554 = vpop.f32.mrb[0].mxu0
        %v3555 = vpop.f32.mrb[0].mxu0
        %v3556 = vpop.f32.mrb[0].mxu0
        %v3557 = vadd.f32 %v3252, %v3556
        %v3558 = vpop.f32.mrb[0].mxu0
        %3559 = vmatprep.mubr.bf16.mxu0 0
        %3560 = vmatmul.mubr.bf16.gmra.mrb[0].mxu0 %v2656
        %v3561 = vpop.f32.mrb[0].mxu0
        %v3562 = vadd.f32 %v3257, %v3561
        %v3563 = vpop.f32.mrb[0].mxu0
        %v3564 = vadd.f32 %v3259, %v3563
        %v3565 = vpop.f32.mrb[0].mxu0
        %v3566 = vadd.f32 %v3261, %v3565
        %v3567 = vpop.f32.mrb[0].mxu0
        %v3568 = vadd.f32 %v3263, %v3567
        %3569 = vmatprep.mubr.bf16.mxu0 0
        %3570 = vmatmul.mubr.bf16.gmra.mrb[0].mxu0 %v2657
        %v3571 = vpop.f32.mrb[0].mxu0
        %v3572 = vpop.f32.mrb[0].mxu0
        %v3573 = vpop.f32.mrb[0].mxu0
        %v3574 = vadd.f32 %v3269, %v3573
        %v3575 = vpop.f32.mrb[0].mxu0
        %3576 = vmatprep.mubr.bf16.mxu0 0
        %3577 = vmatmul.mubr.bf16.gmra.mrb[0].mxu0 %v2658
        %v3578 = vpop.f32.mrb[0].mxu0
        %v3579 = vadd.f32 %v3274, %v3578
        %v3580 = vpop.f32.mrb[0].mxu0
        %v3581 = vadd.f32 %v3276, %v3580
        %v3582 = vpop.f32.mrb[0].mxu0
        %v3583 = vadd.f32 %v3278, %v3582
        %v3584 = vpop.f32.mrb[0].mxu0
        %v3585 = vadd.f32 %v3280, %v3584
        %3586 = vmatprep.mubr.bf16.mxu0 0
        %3587 = vmatmul.mubr.bf16.gmra.mrb[0].mxu0 %v2659
        %v3588 = vpop.f32.mrb[0].mxu0
        %v3589 = vpop.f32.mrb[0].mxu0
        %v3590 = vpop.f32.mrb[0].mxu0
        %v3591 = vadd.f32 %v3286, %v3590
        %v3592 = vpop.f32.mrb[0].mxu0
        %3593 = vmatprep.mubr.bf16.mxu0 0
        %3594 = vmatmul.mubr.bf16.gmra.mrb[0].mxu0 %v2660
        %v3595 = vpop.f32.mrb[0].mxu0
        %v3596 = vadd.f32 %v3291, %v3595
        %v3597 = vpop.f32.mrb[0].mxu0
        %v3598 = vadd.f32 %v3293, %v3597
        %v3599 = vpop.f32.mrb[0].mxu0
        %v3600 = vadd.f32 %v3295, %v3599
        %v3601 = vpop.f32.mrb[0].mxu0
        %v3602 = vadd.f32 %v3297, %v3601
        %3603 = vmatprep.mubr.bf16.mxu0 0
        %3604 = vmatmul.mubr.bf16.gmra.mrb[0].mxu0 %v2661
        %v3605 = vpop.f32.mrb[0].mxu0
        %v3606 = vpop.f32.mrb[0].mxu0
        %v3607 = vpop.f32.mrb[0].mxu0
        %v3608 = vadd.f32 %v3303, %v3607
        %v3609 = vpop.f32.mrb[0].mxu0
        %3610 = vmatprep.mubr.bf16.mxu0 0
        %3611 = vmatmul.mubr.bf16.gmra.mrb[0].mxu0 %v2662
        %v3612 = vpop.f32.mrb[0].mxu0
        %v3613 = vadd.f32 %v3308, %v3612
        %v3614 = vpop.f32.mrb[0].mxu0
        %v3615 = vadd.f32 %v3310, %v3614
        %v3616 = vpop.f32.mrb[0].mxu0
        %v3617 = vadd.f32 %v3312, %v3616
        %v3618 = vpop.f32.mrb[0].mxu0
        %v3619 = vadd.f32 %v3314, %v3618
        %3620 = vmatprep.mubr.bf16.mxu0 0
        %3621 = vmatmul.mubr.bf16.gmra.mrb[0].mxu0 %v2663
        %v3622 = vpop.f32.mrb[0].mxu0
        %v3623 = vpop.f32.mrb[0].mxu0
        %v3624 = vpop.f32.mrb[0].mxu0
        %v3625 = vadd.f32 %v3320, %v3624
        %v3626 = vpop.f32.mrb[0].mxu0
        %3627 = vmatprep.mubr.bf16.mxu0 0
        %3628 = vmatmul.mubr.bf16.gmra.mrb[0].mxu0 %v2664
        %v3629 = vpop.f32.mrb[0].mxu0
        %v3630 = vadd.f32 %v3325, %v3629
        %v3631 = vpop.f32.mrb[0].mxu0
        %v3632 = vadd.f32 %v3327, %v3631
        %v3633 = vpop.f32.mrb[0].mxu0
        %v3634 = vadd.f32 %v3329, %v3633
        %v3635 = vpop.f32.mrb[0].mxu0
        %v3636 = vadd.f32 %v3331, %v3635
        %3637 = vmatprep.mubr.bf16.mxu0 0
        %3638 = vmatmul.mubr.bf16.gmra.mrb[0].mxu0 %v2665
        %v3639 = vpop.f32.mrb[0].mxu0
        %v3640 = vpop.f32.mrb[0].mxu0
        %v3641 = vpop.f32.mrb[0].mxu0
        %v3642 = vadd.f32 %v3337, %v3641
        %v3643 = vpop.f32.mrb[0].mxu0
        %3644 = vmatprep.mubr.bf16.mxu0 0
        %3645 = vmatmul.mubr.bf16.gmra.mrb[0].mxu0 %v2666
        %v3646 = vpop.f32.mrb[0].mxu0
        %v3647 = vadd.f32 %v3342, %v3646
        %v3648 = vpop.f32.mrb[0].mxu0
        %v3649 = vadd.f32 %v3344, %v3648
        %v3650 = vpop.f32.mrb[0].mxu0
        %v3651 = vadd.f32 %v3346, %v3650
        %v3652 = vpop.f32.mrb[0].mxu0
        %v3653 = vadd.f32 %v3348, %v3652
        %3654 = vmatprep.mubr.bf16.mxu0 0
        %3655 = vmatmul.mubr.bf16.gmra.mrb[0].mxu0 %v2667
        %v3656 = vpop.f32.mrb[0].mxu0
        %v3657 = vpop.f32.mrb[0].mxu0
        %v3658 = vpop.f32.mrb[0].mxu0
        %v3659 = vadd.f32 %v3354, %v3658
        %v3660 = vpop.f32.mrb[0].mxu0
        %3661 = vdwg.mxu0
        %3662 = vmatprep.subr.bf16.mxu0 0
        %3663 = vmatpush1.bf16.msra.mxu0 %v2910
        %3664 = vmatprep.subr.bf16.mxu0 0
        %3665 = vmatpush1.bf16.msra.mxu0 %v2913
        %3666 = vmatprep.subr.bf16.mxu0 0
        %3667 = vmatpush1.bf16.msra.mxu0 %v2916
        %3668 = vmatprep.subr.bf16.mxu0 0
        %3669 = vmatpush1.bf16.msra.mxu0 %v2919
        %3670 = vmatprep.subr.bf16.mxu0 0
        %3671 = vmatpush1.bf16.msra.mxu0 %v2922
        %3672 = vmatprep.subr.bf16.mxu0 0
        %3673 = vmatpush1.bf16.msra.mxu0 %v2925
        %3674 = vmatprep.subr.bf16.mxu0 0
        %3675 = vmatpush1.bf16.msra.mxu0 %v2928
        %3676 = vmatprep.subr.bf16.mxu0 0
        %3677 = vmatpush1.bf16.msra.mxu0 %v2931
        %3678 = vmatprep.subr.bf16.mxu0 0
        %3679 = vmatpush1.bf16.msra.mxu0 %v2934
        %3680 = vmatprep.subr.bf16.mxu0 0
        %3681 = vmatpush1.bf16.msra.mxu0 %v2937
        %3682 = vmatprep.subr.bf16.mxu0 0
        %3683 = vmatpush1.bf16.msra.mxu0 %v2940
        %3684 = vmatprep.subr.bf16.mxu0 0
        %3685 = vmatpush1.bf16.msra.mxu0 %v2943
        %3686 = vmatprep.subr.bf16.mxu0 0
        %3687 = vmatpush1.bf16.msra.mxu0 %v2946
        %3688 = vmatprep.subr.bf16.mxu0 0
        %3689 = vmatpush1.bf16.msra.mxu0 %v2949
        %3690 = vmatprep.subr.bf16.mxu0 0
        %3691 = vmatpush1.bf16.msra.mxu0 %v2952
        %3692 = vmatprep.subr.bf16.mxu0 0
        %3693 = vmatpush1.bf16.msra.mxu0 %v2955
        %3694 = vmatprep.mubr.bf16.mxu0 %v2603
        %3695 = vmatmul.mubr.bf16.gmra.mrb[0].mxu0 %v2571
        %v3696 = vpop.f32.mrb[0].mxu0
        %v3697 = vadd.f32 0.0, %v3696
        %v3698 = vpop.f32.mrb[0].mxu0
        %v3699 = vpop.f32.mrb[0].mxu0
        %v3700 = vadd.f32 0.0, %v3699
        %v3701 = vpop.f32.mrb[0].mxu0
        %3702 = vmatprep.mubr.bf16.mxu0 %v2604
        %3703 = vmatmul.mubr.bf16.gmra.mrb[0].mxu0 %v2572
        %v3704 = vpop.f32.mrb[0].mxu0
        %v3705 = vadd.f32 0.0, %v3704
        %v3706 = vpop.f32.mrb[0].mxu0
        %v3707 = vpop.f32.mrb[0].mxu0
        %v3708 = vpop.f32.mrb[0].mxu0
        %3709 = vmatprep.mubr.bf16.mxu0 %v2605
        %3710 = vmatmul.mubr.bf16.gmra.mrb[0].mxu0 %v2573
        %v3711 = vpop.f32.mrb[0].mxu0
        %v3712 = vadd.f32 0.0, %v3711
        %v3713 = vpop.f32.mrb[0].mxu0
        %v3714 = vpop.f32.mrb[0].mxu0
        %v3715 = vadd.f32 0.0, %v3714
        %v3716 = vpop.f32.mrb[0].mxu0
        %3717 = vmatprep.mubr.bf16.mxu0 %v2606
        %3718 = vmatmul.mubr.bf16.gmra.mrb[0].mxu0 %v2574
        %v3719 = vpop.f32.mrb[0].mxu0
        %v3720 = vadd.f32 0.0, %v3719
        %v3721 = vpop.f32.mrb[0].mxu0
        %v3722 = vpop.f32.mrb[0].mxu0
        %v3723 = vpop.f32.mrb[0].mxu0
        %3724 = vmatprep.mubr.bf16.mxu0 %v2607
        %3725 = vmatmul.mubr.bf16.gmra.mrb[0].mxu0 %v2575
        %v3726 = vpop.f32.mrb[0].mxu0
        %v3727 = vadd.f32 0.0, %v3726
        %v3728 = vpop.f32.mrb[0].mxu0
        %v3729 = vpop.f32.mrb[0].mxu0
        %v3730 = vadd.f32 0.0, %v3729
        %v3731 = vpop.f32.mrb[0].mxu0
        %3732 = vmatprep.mubr.bf16.mxu0 %v2608
        %3733 = vmatmul.mubr.bf16.gmra.mrb[0].mxu0 %v2576
        %v3734 = vpop.f32.mrb[0].mxu0
        %v3735 = vadd.f32 0.0, %v3734
        %v3736 = vpop.f32.mrb[0].mxu0
        %v3737 = vpop.f32.mrb[0].mxu0
        %v3738 = vpop.f32.mrb[0].mxu0
        %3739 = vmatprep.mubr.bf16.mxu0 %v2609
        %3740 = vmatmul.mubr.bf16.gmra.mrb[0].mxu0 %v2577
        %v3741 = vpop.f32.mrb[0].mxu0
        %v3742 = vadd.f32 0.0, %v3741
        %v3743 = vpop.f32.mrb[0].mxu0
        %v3744 = vpop.f32.mrb[0].mxu0
        %v3745 = vadd.f32 0.0, %v3744
        %v3746 = vpop.f32.mrb[0].mxu0
        %3747 = vmatprep.mubr.bf16.mxu0 %v2610
        %3748 = vmatmul.mubr.bf16.gmra.mrb[0].mxu0 %v2578
        %v3749 = vpop.f32.mrb[0].mxu0
        %v3750 = vadd.f32 0.0, %v3749
        %v3751 = vpop.f32.mrb[0].mxu0
        %v3752 = vpop.f32.mrb[0].mxu0
        %v3753 = vpop.f32.mrb[0].mxu0
        %3754 = vmatprep.mubr.bf16.mxu0 %v2611
        %3755 = vmatmul.mubr.bf16.gmra.mrb[0].mxu0 %v2579
        %v3756 = vpop.f32.mrb[0].mxu0
        %v3757 = vadd.f32 0.0, %v3756
        %v3758 = vpop.f32.mrb[0].mxu0
        %v3759 = vpop.f32.mrb[0].mxu0
        %v3760 = vadd.f32 0.0, %v3759
        %v3761 = vpop.f32.mrb[0].mxu0
        %3762 = vmatprep.mubr.bf16.mxu0 %v2612
        %3763 = vmatmul.mubr.bf16.gmra.mrb[0].mxu0 %v2580
        %v3764 = vpop.f32.mrb[0].mxu0
        %v3765 = vadd.f32 0.0, %v3764
        %v3766 = vpop.f32.mrb[0].mxu0
        %v3767 = vpop.f32.mrb[0].mxu0
        %v3768 = vpop.f32.mrb[0].mxu0
        %3769 = vmatprep.mubr.bf16.mxu0 %v2613
        %3770 = vmatmul.mubr.bf16.gmra.mrb[0].mxu0 %v2581
        %v3771 = vpop.f32.mrb[0].mxu0
        %v3772 = vadd.f32 0.0, %v3771
        %v3773 = vpop.f32.mrb[0].mxu0
        %v3774 = vpop.f32.mrb[0].mxu0
        %v3775 = vadd.f32 0.0, %v3774
        %v3776 = vpop.f32.mrb[0].mxu0
        %3777 = vmatprep.mubr.bf16.mxu0 %v2614
        %3778 = vmatmul.mubr.bf16.gmra.mrb[0].mxu0 %v2582
        %v3779 = vpop.f32.mrb[0].mxu0
        %v3780 = vadd.f32 0.0, %v3779
        %v3781 = vpop.f32.mrb[0].mxu0
        %v3782 = vpop.f32.mrb[0].mxu0
        %v3783 = vpop.f32.mrb[0].mxu0
        %3784 = vmatprep.mubr.bf16.mxu0 %v2615
        %3785 = vmatmul.mubr.bf16.gmra.mrb[0].mxu0 %v2583
        %v3786 = vpop.f32.mrb[0].mxu0
        %v3787 = vadd.f32 0.0, %v3786
        %v3788 = vpop.f32.mrb[0].mxu0
        %v3789 = vpop.f32.mrb[0].mxu0
        %v3790 = vadd.f32 0.0, %v3789
        %v3791 = vpop.f32.mrb[0].mxu0
        %3792 = vmatprep.mubr.bf16.mxu0 %v2616
        %3793 = vmatmul.mubr.bf16.gmra.mrb[0].mxu0 %v2584
        %v3794 = vpop.f32.mrb[0].mxu0
        %v3795 = vadd.f32 0.0, %v3794
        %v3796 = vpop.f32.mrb[0].mxu0
        %v3797 = vpop.f32.mrb[0].mxu0
        %v3798 = vpop.f32.mrb[0].mxu0
        %3799 = vmatprep.mubr.bf16.mxu0 %v2617
        %3800 = vmatmul.mubr.bf16.gmra.mrb[0].mxu0 %v2585
        %v3801 = vpop.f32.mrb[0].mxu0
        %v3802 = vadd.f32 0.0, %v3801
        %v3803 = vpop.f32.mrb[0].mxu0
        %v3804 = vpop.f32.mrb[0].mxu0
        %v3805 = vadd.f32 0.0, %v3804
        %v3806 = vpop.f32.mrb[0].mxu0
        %3807 = vmatprep.mubr.bf16.mxu0 %v2618
        %3808 = vmatmul.mubr.bf16.gmra.mrb[0].mxu0 %v2586
        %v3809 = vpop.f32.mrb[0].mxu0
        %v3810 = vadd.f32 0.0, %v3809
        %v3811 = vpop.f32.mrb[0].mxu0
        %v3812 = vpop.f32.mrb[0].mxu0
        %v3813 = vpop.f32.mrb[0].mxu0
        %3814 = vmatprep.mubr.bf16.mxu0 %v2619
        %3815 = vmatmul.mubr.bf16.gmra.mrb[0].mxu0 %v2587
        %v3816 = vpop.f32.mrb[0].mxu0
        %v3817 = vadd.f32 0.0, %v3816
        %v3818 = vpop.f32.mrb[0].mxu0
        %v3819 = vpop.f32.mrb[0].mxu0
        %v3820 = vadd.f32 0.0, %v3819
        %v3821 = vpop.f32.mrb[0].mxu0
        %3822 = vmatprep.mubr.bf16.mxu0 %v2620
        %3823 = vmatmul.mubr.bf16.gmra.mrb[0].mxu0 %v2588
        %v3824 = vpop.f32.mrb[0].mxu0
        %v3825 = vadd.f32 0.0, %v3824
        %v3826 = vpop.f32.mrb[0].mxu0
        %v3827 = vpop.f32.mrb[0].mxu0
        %v3828 = vpop.f32.mrb[0].mxu0
        %3829 = vmatprep.mubr.bf16.mxu0 %v2621
        %3830 = vmatmul.mubr.bf16.gmra.mrb[0].mxu0 %v2589
        %v3831 = vpop.f32.mrb[0].mxu0
        %v3832 = vadd.f32 0.0, %v3831
        %v3833 = vpop.f32.mrb[0].mxu0
        %v3834 = vpop.f32.mrb[0].mxu0
        %v3835 = vadd.f32 0.0, %v3834
        %v3836 = vpop.f32.mrb[0].mxu0
        %3837 = vmatprep.mubr.bf16.mxu0 %v2622
        %3838 = vmatmul.mubr.bf16.gmra.mrb[0].mxu0 %v2590
        %v3839 = vpop.f32.mrb[0].mxu0
        %v3840 = vadd.f32 0.0, %v3839
        %v3841 = vpop.f32.mrb[0].mxu0
        %v3842 = vpop.f32.mrb[0].mxu0
        %v3843 = vpop.f32.mrb[0].mxu0
        %3844 = vmatprep.mubr.bf16.mxu0 %v2623
        %3845 = vmatmul.mubr.bf16.gmra.mrb[0].mxu0 %v2591
        %v3846 = vpop.f32.mrb[0].mxu0
        %v3847 = vadd.f32 0.0, %v3846
        %v3848 = vpop.f32.mrb[0].mxu0
        %v3849 = vpop.f32.mrb[0].mxu0
        %v3850 = vadd.f32 0.0, %v3849
        %v3851 = vpop.f32.mrb[0].mxu0
        %3852 = vmatprep.mubr.bf16.mxu0 %v2624
        %3853 = vmatmul.mubr.bf16.gmra.mrb[0].mxu0 %v2592
        %v3854 = vpop.f32.mrb[0].mxu0
        %v3855 = vadd.f32 0.0, %v3854
        %v3856 = vpop.f32.mrb[0].mxu0
        %v3857 = vpop.f32.mrb[0].mxu0
        %v3858 = vpop.f32.mrb[0].mxu0
        %3859 = vmatprep.mubr.bf16.mxu0 %v2625
        %3860 = vmatmul.mubr.bf16.gmra.mrb[0].mxu0 %v2593
        %v3861 = vpop.f32.mrb[0].mxu0
        %v3862 = vadd.f32 0.0, %v3861
        %v3863 = vpop.f32.mrb[0].mxu0
        %v3864 = vpop.f32.mrb[0].mxu0
        %v3865 = vadd.f32 0.0, %v3864
        %v3866 = vpop.f32.mrb[0].mxu0
        %3867 = vmatprep.mubr.bf16.mxu0 %v2626
        %3868 = vmatmul.mubr.bf16.gmra.mrb[0].mxu0 %v2594
        %v3869 = vpop.f32.mrb[0].mxu0
        %v3870 = vadd.f32 0.0, %v3869
        %v3871 = vpop.f32.mrb[0].mxu0
        %v3872 = vpop.f32.mrb[0].mxu0
        %v3873 = vpop.f32.mrb[0].mxu0
        %3874 = vmatprep.mubr.bf16.mxu0 %v2627
        %3875 = vmatmul.mubr.bf16.gmra.mrb[0].mxu0 %v2595
        %v3876 = vpop.f32.mrb[0].mxu0
        %v3877 = vadd.f32 0.0, %v3876
        %v3878 = vpop.f32.mrb[0].mxu0
        %v3879 = vpop.f32.mrb[0].mxu0
        %v3880 = vadd.f32 0.0, %v3879
        %v3881 = vpop.f32.mrb[0].mxu0
        %3882 = vmatprep.mubr.bf16.mxu0 %v2628
        %3883 = vmatmul.mubr.bf16.gmra.mrb[0].mxu0 %v2596
        %v3884 = vpop.f32.mrb[0].mxu0
        %v3885 = vadd.f32 0.0, %v3884
        %v3886 = vpop.f32.mrb[0].mxu0
        %v3887 = vpop.f32.mrb[0].mxu0
        %v3888 = vpop.f32.mrb[0].mxu0
        %3889 = vmatprep.mubr.bf16.mxu0 %v2629
        %3890 = vmatmul.mubr.bf16.gmra.mrb[0].mxu0 %v2597
        %v3891 = vpop.f32.mrb[0].mxu0
        %v3892 = vadd.f32 0.0, %v3891
        %v3893 = vpop.f32.mrb[0].mxu0
        %v3894 = vpop.f32.mrb[0].mxu0
        %v3895 = vadd.f32 0.0, %v3894
        %v3896 = vpop.f32.mrb[0].mxu0
        %3897 = vmatprep.mubr.bf16.mxu0 %v2630
        %3898 = vmatmul.mubr.bf16.gmra.mrb[0].mxu0 %v2598
        %v3899 = vpop.f32.mrb[0].mxu0
        %v3900 = vadd.f32 0.0, %v3899
        %v3901 = vpop.f32.mrb[0].mxu0
        %v3902 = vpop.f32.mrb[0].mxu0
        %v3903 = vpop.f32.mrb[0].mxu0
        %3904 = vmatprep.mubr.bf16.mxu0 %v2631
        %3905 = vmatmul.mubr.bf16.gmra.mrb[0].mxu0 %v2599
        %v3906 = vpop.f32.mrb[0].mxu0
        %v3907 = vadd.f32 0.0, %v3906
        %v3908 = vpop.f32.mrb[0].mxu0
        %v3909 = vpop.f32.mrb[0].mxu0
        %v3910 = vadd.f32 0.0, %v3909
        %v3911 = vpop.f32.mrb[0].mxu0
        %3912 = vmatprep.mubr.bf16.mxu0 %v2632
        %3913 = vmatmul.mubr.bf16.gmra.mrb[0].mxu0 %v2600
        %v3914 = vpop.f32.mrb[0].mxu0
        %v3915 = vadd.f32 0.0, %v3914
        %v3916 = vpop.f32.mrb[0].mxu0
        %v3917 = vpop.f32.mrb[0].mxu0
        %v3918 = vpop.f32.mrb[0].mxu0
        %3919 = vmatprep.mubr.bf16.mxu0 %v2633
        %3920 = vmatmul.mubr.bf16.gmra.mrb[0].mxu0 %v2601
        %v3921 = vpop.f32.mrb[0].mxu0
        %v3922 = vadd.f32 0.0, %v3921
        %v3923 = vpop.f32.mrb[0].mxu0
        %v3924 = vpop.f32.mrb[0].mxu0
        %v3925 = vadd.f32 0.0, %v3924
        %v3926 = vpop.f32.mrb[0].mxu0
        %3927 = vmatprep.mubr.bf16.mxu0 %v2634
        %3928 = vmatmul.mubr.bf16.gmra.mrb[0].mxu0 %v2602
        %v3929 = vpop.f32.mrb[0].mxu0
        %v3930 = vadd.f32 0.0, %v3929
        %v3931 = vpop.f32.mrb[0].mxu0
        %v3932 = vpop.f32.mrb[0].mxu0
        %v3933 = vpop.f32.mrb[0].mxu0
        %3934 = vdwg.mxu0
        %3935 = vmatprep.subr.bf16.mxu0 0
        %3936 = vmatpush1.bf16.msra.mxu0 %v2958
        %3937 = vmatprep.subr.bf16.mxu0 0
        %3938 = vmatpush1.bf16.msra.mxu0 %v2961
        %3939 = vmatprep.subr.bf16.mxu0 0
        %3940 = vmatpush1.bf16.msra.mxu0 %v2964
        %3941 = vmatprep.subr.bf16.mxu0 0
        %3942 = vmatpush1.bf16.msra.mxu0 %v2967
        %3943 = vmatprep.subr.bf16.mxu0 0
        %3944 = vmatpush1.bf16.msra.mxu0 %v2970
        %3945 = vmatprep.subr.bf16.mxu0 0
        %3946 = vmatpush1.bf16.msra.mxu0 %v2973
        %3947 = vmatprep.subr.bf16.mxu0 0
        %3948 = vmatpush1.bf16.msra.mxu0 %v2976
        %3949 = vmatprep.subr.bf16.mxu0 0
        %3950 = vmatpush1.bf16.msra.mxu0 %v2979
        %3951 = vmatprep.subr.bf16.mxu0 0
        %3952 = vmatpush1.bf16.msra.mxu0 0
        %3953 = vmatprep.subr.bf16.mxu0 0
        %3954 = vmatpush1.bf16.msra.mxu0 0
        %3955 = vmatprep.subr.bf16.mxu0 0
        %3956 = vmatpush1.bf16.msra.mxu0 0
        %3957 = vmatprep.subr.bf16.mxu0 0
        %3958 = vmatpush1.bf16.msra.mxu0 0
        %3959 = vmatprep.subr.bf16.mxu0 0
        %3960 = vmatpush1.bf16.msra.mxu0 0
        %3961 = vmatprep.subr.bf16.mxu0 0
        %3962 = vmatpush1.bf16.msra.mxu0 0
        %3963 = vmatprep.subr.bf16.mxu0 0
        %3964 = vmatpush1.bf16.msra.mxu0 0
        %3965 = vmatprep.subr.bf16.mxu0 0
        %3966 = vmatpush1.bf16.msra.mxu0 0
        %3967 = vmatprep.mubr.bf16.mxu0 0
        %3968 = vmatmul.mubr.bf16.gmra.mrb[0].mxu0 %v2636
        %v3969 = vpop.f32.mrb[0].mxu0
        %v3970 = vadd.f32 %v3697, %v3969
        %v3971 = vpop.f32.mrb[0].mxu0
        %v3972 = vpop.f32.mrb[0].mxu0
        %v3973 = vadd.f32 %v3700, %v3972
        %v3974 = vpop.f32.mrb[0].mxu0
        %3975 = vmatprep.mubr.bf16.mxu0 0
        %3976 = vmatmul.mubr.bf16.gmra.mrb[0].mxu0 %v2637
        %v3977 = vpop.f32.mrb[0].mxu0
        %v3978 = vadd.f32 %v3705, %v3977
        %v3979 = vpop.f32.mrb[0].mxu0
        %v3980 = vpop.f32.mrb[0].mxu0
        %v3981 = vpop.f32.mrb[0].mxu0
        %3982 = vmatprep.mubr.bf16.mxu0 0
        %3983 = vmatmul.mubr.bf16.gmra.mrb[0].mxu0 %v2638
        %v3984 = vpop.f32.mrb[0].mxu0
        %v3985 = vadd.f32 %v3712, %v3984
        %v3986 = vpop.f32.mrb[0].mxu0
        %v3987 = vpop.f32.mrb[0].mxu0
        %v3988 = vadd.f32 %v3715, %v3987
        %v3989 = vpop.f32.mrb[0].mxu0
        %3990 = vmatprep.mubr.bf16.mxu0 0
        %3991 = vmatmul.mubr.bf16.gmra.mrb[0].mxu0 %v2639
        %v3992 = vpop.f32.mrb[0].mxu0
        %v3993 = vadd.f32 %v3720, %v3992
        %v3994 = vpop.f32.mrb[0].mxu0
        %v3995 = vpop.f32.mrb[0].mxu0
        %v3996 = vpop.f32.mrb[0].mxu0
        %3997 = vmatprep.mubr.bf16.mxu0 0
        %3998 = vmatmul.mubr.bf16.gmra.mrb[0].mxu0 %v2640
        %v3999 = vpop.f32.mrb[0].mxu0
        %v4000 = vadd.f32 %v3727, %v3999
        %v4001 = vpop.f32.mrb[0].mxu0
        %v4002 = vpop.f32.mrb[0].mxu0
        %v4003 = vadd.f32 %v3730, %v4002
        %v4004 = vpop.f32.mrb[0].mxu0
        %4005 = vmatprep.mubr.bf16.mxu0 0
        %4006 = vmatmul.mubr.bf16.gmra.mrb[0].mxu0 %v2641
        %v4007 = vpop.f32.mrb[0].mxu0
        %v4008 = vadd.f32 %v3735, %v4007
        %v4009 = vpop.f32.mrb[0].mxu0
        %v4010 = vpop.f32.mrb[0].mxu0
        %v4011 = vpop.f32.mrb[0].mxu0
        %4012 = vmatprep.mubr.bf16.mxu0 0
        %4013 = vmatmul.mubr.bf16.gmra.mrb[0].mxu0 %v2642
        %v4014 = vpop.f32.mrb[0].mxu0
        %v4015 = vadd.f32 %v3742, %v4014
        %v4016 = vpop.f32.mrb[0].mxu0
        %v4017 = vpop.f32.mrb[0].mxu0
        %v4018 = vadd.f32 %v3745, %v4017
        %v4019 = vpop.f32.mrb[0].mxu0
        %4020 = vmatprep.mubr.bf16.mxu0 0
        %4021 = vmatmul.mubr.bf16.gmra.mrb[0].mxu0 %v2643
        %v4022 = vpop.f32.mrb[0].mxu0
        %v4023 = vadd.f32 %v3750, %v4022
        %v4024 = vpop.f32.mrb[0].mxu0
        %v4025 = vpop.f32.mrb[0].mxu0
        %v4026 = vpop.f32.mrb[0].mxu0
        %4027 = vmatprep.mubr.bf16.mxu0 0
        %4028 = vmatmul.mubr.bf16.gmra.mrb[0].mxu0 %v2644
        %v4029 = vpop.f32.mrb[0].mxu0
        %v4030 = vadd.f32 %v3757, %v4029
        %v4031 = vpop.f32.mrb[0].mxu0
        %v4032 = vpop.f32.mrb[0].mxu0
        %v4033 = vadd.f32 %v3760, %v4032
        %v4034 = vpop.f32.mrb[0].mxu0
        %4035 = vmatprep.mubr.bf16.mxu0 0
        %4036 = vmatmul.mubr.bf16.gmra.mrb[0].mxu0 %v2645
        %v4037 = vpop.f32.mrb[0].mxu0
        %v4038 = vadd.f32 %v3765, %v4037
        %v4039 = vpop.f32.mrb[0].mxu0
        %v4040 = vpop.f32.mrb[0].mxu0
        %v4041 = vpop.f32.mrb[0].mxu0
        %4042 = vmatprep.mubr.bf16.mxu0 0
        %4043 = vmatmul.mubr.bf16.gmra.mrb[0].mxu0 %v2646
        %v4044 = vpop.f32.mrb[0].mxu0
        %v4045 = vadd.f32 %v3772, %v4044
        %v4046 = vpop.f32.mrb[0].mxu0
        %v4047 = vpop.f32.mrb[0].mxu0
        %v4048 = vadd.f32 %v3775, %v4047
        %v4049 = vpop.f32.mrb[0].mxu0
        %4050 = vmatprep.mubr.bf16.mxu0 0
        %4051 = vmatmul.mubr.bf16.gmra.mrb[0].mxu0 %v2647
        %v4052 = vpop.f32.mrb[0].mxu0
        %v4053 = vadd.f32 %v3780, %v4052
        %v4054 = vpop.f32.mrb[0].mxu0
        %v4055 = vpop.f32.mrb[0].mxu0
        %v4056 = vpop.f32.mrb[0].mxu0
        %4057 = vmatprep.mubr.bf16.mxu0 0
        %4058 = vmatmul.mubr.bf16.gmra.mrb[0].mxu0 %v2648
        %v4059 = vpop.f32.mrb[0].mxu0
        %v4060 = vadd.f32 %v3787, %v4059
        %v4061 = vpop.f32.mrb[0].mxu0
        %v4062 = vpop.f32.mrb[0].mxu0
        %v4063 = vadd.f32 %v3790, %v4062
        %v4064 = vpop.f32.mrb[0].mxu0
        %4065 = vmatprep.mubr.bf16.mxu0 0
        %4066 = vmatmul.mubr.bf16.gmra.mrb[0].mxu0 %v2649
        %v4067 = vpop.f32.mrb[0].mxu0
        %v4068 = vadd.f32 %v3795, %v4067
        %v4069 = vpop.f32.mrb[0].mxu0
        %v4070 = vpop.f32.mrb[0].mxu0
        %v4071 = vpop.f32.mrb[0].mxu0
        %4072 = vmatprep.mubr.bf16.mxu0 0
        %4073 = vmatmul.mubr.bf16.gmra.mrb[0].mxu0 %v2650
        %v4074 = vpop.f32.mrb[0].mxu0
        %v4075 = vadd.f32 %v3802, %v4074
        %v4076 = vpop.f32.mrb[0].mxu0
        %v4077 = vpop.f32.mrb[0].mxu0
        %v4078 = vadd.f32 %v3805, %v4077
        %v4079 = vpop.f32.mrb[0].mxu0
        %4080 = vmatprep.mubr.bf16.mxu0 0
        %4081 = vmatmul.mubr.bf16.gmra.mrb[0].mxu0 %v2651
        %v4082 = vpop.f32.mrb[0].mxu0
        %v4083 = vadd.f32 %v3810, %v4082
        %v4084 = vpop.f32.mrb[0].mxu0
        %v4085 = vpop.f32.mrb[0].mxu0
        %v4086 = vpop.f32.mrb[0].mxu0
        %4087 = vmatprep.mubr.bf16.mxu0 0
        %4088 = vmatmul.mubr.bf16.gmra.mrb[0].mxu0 %v2652
        %v4089 = vpop.f32.mrb[0].mxu0
        %v4090 = vadd.f32 %v3817, %v4089
        %v4091 = vpop.f32.mrb[0].mxu0
        %v4092 = vpop.f32.mrb[0].mxu0
        %v4093 = vadd.f32 %v3820, %v4092
        %v4094 = vpop.f32.mrb[0].mxu0
        %4095 = vmatprep.mubr.bf16.mxu0 0
        %4096 = vmatmul.mubr.bf16.gmra.mrb[0].mxu0 %v2653
        %v4097 = vpop.f32.mrb[0].mxu0
        %v4098 = vadd.f32 %v3825, %v4097
        %v4099 = vpop.f32.mrb[0].mxu0
        %v4100 = vpop.f32.mrb[0].mxu0
        %v4101 = vpop.f32.mrb[0].mxu0
        %4102 = vmatprep.mubr.bf16.mxu0 0
        %4103 = vmatmul.mubr.bf16.gmra.mrb[0].mxu0 %v2654
        %v4104 = vpop.f32.mrb[0].mxu0
        %v4105 = vadd.f32 %v3832, %v4104
        %v4106 = vpop.f32.mrb[0].mxu0
        %v4107 = vpop.f32.mrb[0].mxu0
        %v4108 = vadd.f32 %v3835, %v4107
        %v4109 = vpop.f32.mrb[0].mxu0
        %4110 = vmatprep.mubr.bf16.mxu0 0
        %4111 = vmatmul.mubr.bf16.gmra.mrb[0].mxu0 %v2655
        %v4112 = vpop.f32.mrb[0].mxu0
        %v4113 = vadd.f32 %v3840, %v4112
        %v4114 = vpop.f32.mrb[0].mxu0
        %v4115 = vpop.f32.mrb[0].mxu0
        %v4116 = vpop.f32.mrb[0].mxu0
        %4117 = vmatprep.mubr.bf16.mxu0 0
        %4118 = vmatmul.mubr.bf16.gmra.mrb[0].mxu0 %v2656
        %v4119 = vpop.f32.mrb[0].mxu0
        %v4120 = vadd.f32 %v3847, %v4119
        %v4121 = vpop.f32.mrb[0].mxu0
        %v4122 = vpop.f32.mrb[0].mxu0
        %v4123 = vadd.f32 %v3850, %v4122
        %v4124 = vpop.f32.mrb[0].mxu0
        %4125 = vmatprep.mubr.bf16.mxu0 0
        %4126 = vmatmul.mubr.bf16.gmra.mrb[0].mxu0 %v2657
        %v4127 = vpop.f32.mrb[0].mxu0
        %v4128 = vadd.f32 %v3855, %v4127
        %v4129 = vpop.f32.mrb[0].mxu0
        %v4130 = vpop.f32.mrb[0].mxu0
        %v4131 = vpop.f32.mrb[0].mxu0
        %4132 = vmatprep.mubr.bf16.mxu0 0
        %4133 = vmatmul.mubr.bf16.gmra.mrb[0].mxu0 %v2658
        %v4134 = vpop.f32.mrb[0].mxu0
        %v4135 = vadd.f32 %v3862, %v4134
        %v4136 = vpop.f32.mrb[0].mxu0
        %v4137 = vpop.f32.mrb[0].mxu0
        %v4138 = vadd.f32 %v3865, %v4137
        %v4139 = vpop.f32.mrb[0].mxu0
        %4140 = vmatprep.mubr.bf16.mxu0 0
        %4141 = vmatmul.mubr.bf16.gmra.mrb[0].mxu0 %v2659
        %v4142 = vpop.f32.mrb[0].mxu0
        %v4143 = vadd.f32 %v3870, %v4142
        %v4144 = vpop.f32.mrb[0].mxu0
        %v4145 = vpop.f32.mrb[0].mxu0
        %v4146 = vpop.f32.mrb[0].mxu0
        %4147 = vmatprep.mubr.bf16.mxu0 0
        %4148 = vmatmul.mubr.bf16.gmra.mrb[0].mxu0 %v2660
        %v4149 = vpop.f32.mrb[0].mxu0
        %v4150 = vadd.f32 %v3877, %v4149
        %v4151 = vpop.f32.mrb[0].mxu0
        %v4152 = vpop.f32.mrb[0].mxu0
        %v4153 = vadd.f32 %v3880, %v4152
        %v4154 = vpop.f32.mrb[0].mxu0
        %4155 = vmatprep.mubr.bf16.mxu0 0
        %4156 = vmatmul.mubr.bf16.gmra.mrb[0].mxu0 %v2661
        %v4157 = vpop.f32.mrb[0].mxu0
        %v4158 = vadd.f32 %v3885, %v4157
        %v4159 = vpop.f32.mrb[0].mxu0
        %v4160 = vpop.f32.mrb[0].mxu0
        %v4161 = vpop.f32.mrb[0].mxu0
        %4162 = vmatprep.mubr.bf16.mxu0 0
        %4163 = vmatmul.mubr.bf16.gmra.mrb[0].mxu0 %v2662
        %v4164 = vpop.f32.mrb[0].mxu0
        %v4165 = vadd.f32 %v3892, %v4164
        %v4166 = vpop.f32.mrb[0].mxu0
        %v4167 = vpop.f32.mrb[0].mxu0
        %v4168 = vadd.f32 %v3895, %v4167
        %v4169 = vpop.f32.mrb[0].mxu0
        %4170 = vmatprep.mubr.bf16.mxu0 0
        %4171 = vmatmul.mubr.bf16.gmra.mrb[0].mxu0 %v2663
        %v4172 = vpop.f32.mrb[0].mxu0
        %v4173 = vadd.f32 %v3900, %v4172
        %v4174 = vpop.f32.mrb[0].mxu0
        %v4175 = vpop.f32.mrb[0].mxu0
        %v4176 = vpop.f32.mrb[0].mxu0
        %4177 = vmatprep.mubr.bf16.mxu0 0
        %4178 = vmatmul.mubr.bf16.gmra.mrb[0].mxu0 %v2664
        %v4179 = vpop.f32.mrb[0].mxu0
        %v4180 = vadd.f32 %v3907, %v4179
        %v4181 = vpop.f32.mrb[0].mxu0
        %v4182 = vpop.f32.mrb[0].mxu0
        %v4183 = vadd.f32 %v3910, %v4182
        %v4184 = vpop.f32.mrb[0].mxu0
        %4185 = vmatprep.mubr.bf16.mxu0 0
        %4186 = vmatmul.mubr.bf16.gmra.mrb[0].mxu0 %v2665
        %v4187 = vpop.f32.mrb[0].mxu0
        %v4188 = vadd.f32 %v3915, %v4187
        %v4189 = vpop.f32.mrb[0].mxu0
        %v4190 = vpop.f32.mrb[0].mxu0
        %v4191 = vpop.f32.mrb[0].mxu0
        %4192 = vmatprep.mubr.bf16.mxu0 0
        %4193 = vmatmul.mubr.bf16.gmra.mrb[0].mxu0 %v2666
        %v4194 = vpop.f32.mrb[0].mxu0
        %v4195 = vadd.f32 %v3922, %v4194
        %v4196 = vpop.f32.mrb[0].mxu0
        %v4197 = vpop.f32.mrb[0].mxu0
        %v4198 = vadd.f32 %v3925, %v4197
        %v4199 = vpop.f32.mrb[0].mxu0
        %4200 = vmatprep.mubr.bf16.mxu0 0
        %4201 = vmatmul.mubr.bf16.gmra.mrb[0].mxu0 %v2667
        %v4202 = vpop.f32.mrb[0].mxu0
        %v4203 = vadd.f32 %v3930, %v4202
        %v4204 = vpop.f32.mrb[0].mxu0
        %v4205 = vpop.f32.mrb[0].mxu0
        %v4206 = vpop.f32.mrb[0].mxu0
        %4207 = vdwg.mxu0
        %v4208 = vrot.slane %v3392, 7
        %v4209 = vrot.slane %v3396, 7
        %v4210 = vrot.slane %v3404, 7
        %v4211 = vrot.slane %v3409, 7
        %v4212 = vrot.slane %v3413, 7
        %v4213 = vrot.slane %v3421, 7
        %v4214 = vrot.slane %v3426, 7
        %v4215 = vrot.slane %v3430, 7
        %v4216 = vrot.slane %v3438, 7
        %v4217 = vrot.slane %v3443, 7
        %v4218 = vrot.slane %v3447, 7
        %v4219 = vrot.slane %v3455, 7
        %v4220 = vrot.slane %v3460, 7
        %v4221 = vrot.slane %v3464, 7
        %v4222 = vrot.slane %v3472, 7
        %v4223 = vrot.slane %v3477, 7
        %v4224 = vrot.slane %v3481, 7
        %v4225 = vrot.slane %v3489, 7
        %v4226 = vrot.slane %v3494, 7
        %v4227 = vrot.slane %v3498, 7
        %v4228 = vrot.slane %v3506, 7
        %v4229 = vrot.slane %v3511, 7
        %v4230 = vrot.slane %v3515, 7
        %v4231 = vrot.slane %v3523, 7
        %v4232 = vrot.slane %v3528, 7
        %v4233 = vrot.slane %v3532, 7
        %v4234 = vrot.slane %v3540, 7
        %v4235 = vrot.slane %v3545, 7
        %v4236 = vrot.slane %v3549, 7
        %v4237 = vrot.slane %v3557, 7
        %v4238 = vrot.slane %v3562, 7
        %v4239 = vrot.slane %v3566, 7
        %v4240 = vrot.slane %v3574, 7
        %v4241 = vrot.slane %v3579, 7
        %v4242 = vrot.slane %v3583, 7
        %v4243 = vrot.slane %v3591, 7
        %v4244 = vrot.slane %v3596, 7
        %v4245 = vrot.slane %v3600, 7
        %v4246 = vrot.slane %v3608, 7
        %v4247 = vrot.slane %v3613, 7
        %v4248 = vrot.slane %v3617, 7
        %v4249 = vrot.slane %v3625, 7
        %v4250 = vrot.slane %v3630, 7
        %v4251 = vrot.slane %v3634, 7
        %v4252 = vrot.slane %v3642, 7
        %v4253 = vrot.slane %v3647, 7
        %v4254 = vrot.slane %v3651, 7
        %v4255 = vrot.slane %v3659, 7
        %v4256 = vsel %vm2193, %v4253, %v4254
        %v4257 = vsel %vm2193, %v4252, %v4253
        %v4258 = vsel %vm2193, %v4250, %v4251
        %v4259 = vsel %vm2193, %v4249, %v4250
        %v4260 = vsel %vm2193, %v4247, %v4248
        %v4261 = vsel %vm2193, %v4246, %v4247
        %v4262 = vsel %vm2193, %v4244, %v4245
        %v4263 = vsel %vm2193, %v4243, %v4244
        %v4264 = vsel %vm2193, %v4241, %v4242
        %v4265 = vsel %vm2193, %v4240, %v4241
        %v4266 = vsel %vm2193, %v4238, %v4239
        %v4267 = vsel %vm2193, %v4237, %v4238
        %v4268 = vsel %vm2193, %v4235, %v4236
        %v4269 = vsel %vm2193, %v4234, %v4235
        %v4270 = vsel %vm2193, %v4232, %v4233
        %v4271 = vsel %vm2193, %v4231, %v4232
        %v4272 = vsel %vm2193, %v4229, %v4230
        %v4273 = vsel %vm2193, %v4228, %v4229
        %v4274 = vsel %vm2193, %v4226, %v4227
        %v4275 = vsel %vm2193, %v4225, %v4226
        %v4276 = vsel %vm2193, %v4223, %v4224
        %v4277 = vsel %vm2193, %v4222, %v4223
        %v4278 = vsel %vm2193, %v4220, %v4221
        %v4279 = vsel %vm2193, %v4219, %v4220
        %v4280 = vsel %vm2193, %v4217, %v4218
        %v4281 = vsel %vm2193, %v4216, %v4217
        %v4282 = vsel %vm2193, %v4214, %v4215
        %v4283 = vsel %vm2193, %v4213, %v4214
        %v4284 = vsel %vm2193, %v4211, %v4212
        %v4285 = vsel %vm2193, %v4210, %v4211
        %v4286 = vsel %vm2193, %v4208, %v4209
        %v4287 = vsel %vm2193, %v4255, %v4208
        %v4288 = vadd.f32 %v4287, %v3394
        %v4289 = vadd.f32 %v4286, %v3398
        %v4290 = vadd.f32 %v4285, %v3411
        %v4291 = vadd.f32 %v4284, %v3415
        %v4292 = vadd.f32 %v4283, %v3428
        %v4293 = vadd.f32 %v4282, %v3432
        %v4294 = vadd.f32 %v4281, %v3445
        %v4295 = vadd.f32 %v4280, %v3449
        %v4296 = vadd.f32 %v4279, %v3462
        %v4297 = vadd.f32 %v4278, %v3466
        %v4298 = vadd.f32 %v4277, %v3479
        %v4299 = vadd.f32 %v4276, %v3483
        %v4300 = vadd.f32 %v4275, %v3496
        %v4301 = vadd.f32 %v4274, %v3500
        %v4302 = vadd.f32 %v4273, %v3513
        %v4303 = vadd.f32 %v4272, %v3517
        %v4304 = vadd.f32 %v4271, %v3530
        %v4305 = vadd.f32 %v4270, %v3534
        %v4306 = vadd.f32 %v4269, %v3547
        %v4307 = vadd.f32 %v4268, %v3551
        %v4308 = vadd.f32 %v4267, %v3564
        %v4309 = vadd.f32 %v4266, %v3568
        %v4310 = vadd.f32 %v4265, %v3581
        %v4311 = vadd.f32 %v4264, %v3585
        %v4312 = vadd.f32 %v4263, %v3598
        %v4313 = vadd.f32 %v4262, %v3602
        %v4314 = vadd.f32 %v4261, %v3615
        %v4315 = vadd.f32 %v4260, %v3619
        %v4316 = vadd.f32 %v4259, %v3632
        %v4317 = vadd.f32 %v4258, %v3636
        %v4318 = vadd.f32 %v4257, %v3649
        %v4319 = vadd.f32 %v4256, %v3653
        %v4320 = vrot.slane %v3970, 1
        %v4321 = vrot.slane %v3973, 1
        %v4322 = vrot.slane %v3978, 1
        %v4323 = vrot.slane %v3985, 1
        %v4324 = vrot.slane %v3988, 1
        %v4325 = vrot.slane %v3993, 1
        %v4326 = vrot.slane %v4000, 1
        %v4327 = vrot.slane %v4003, 1
        %v4328 = vrot.slane %v4008, 1
        %v4329 = vrot.slane %v4015, 1
        %v4330 = vrot.slane %v4018, 1
        %v4331 = vrot.slane %v4023, 1
        %v4332 = vrot.slane %v4030, 1
        %v4333 = vrot.slane %v4033, 1
        %v4334 = vrot.slane %v4038, 1
        %v4335 = vrot.slane %v4045, 1
        %v4336 = vrot.slane %v4048, 1
        %v4337 = vrot.slane %v4053, 1
        %v4338 = vrot.slane %v4060, 1
        %v4339 = vrot.slane %v4063, 1
        %v4340 = vrot.slane %v4068, 1
        %v4341 = vrot.slane %v4075, 1
        %v4342 = vrot.slane %v4078, 1
        %v4343 = vrot.slane %v4083, 1
        %v4344 = vrot.slane %v4090, 1
        %v4345 = vrot.slane %v4093, 1
        %v4346 = vrot.slane %v4098, 1
        %v4347 = vrot.slane %v4105, 1
        %v4348 = vrot.slane %v4108, 1
        %v4349 = vrot.slane %v4113, 1
        %v4350 = vrot.slane %v4120, 1
        %v4351 = vrot.slane %v4123, 1
        %v4352 = vrot.slane %v4128, 1
        %v4353 = vrot.slane %v4135, 1
        %v4354 = vrot.slane %v4138, 1
        %v4355 = vrot.slane %v4143, 1
        %v4356 = vrot.slane %v4150, 1
        %v4357 = vrot.slane %v4153, 1
        %v4358 = vrot.slane %v4158, 1
        %v4359 = vrot.slane %v4165, 1
        %v4360 = vrot.slane %v4168, 1
        %v4361 = vrot.slane %v4173, 1
        %v4362 = vrot.slane %v4180, 1
        %v4363 = vrot.slane %v4183, 1
        %v4364 = vrot.slane %v4188, 1
        %v4365 = vrot.slane %v4195, 1
        %v4366 = vrot.slane %v4198, 1
        %v4367 = vrot.slane %v4203, 1
        %v4368 = vsel %vm2306, %v4366, %v4367
        %v4369 = vsel %vm2306, %v4365, %v4366
        %v4370 = vsel %vm2306, %v4363, %v4364
        %v4371 = vsel %vm2306, %v4362, %v4363
        %v4372 = vsel %vm2306, %v4360, %v4361
        %v4373 = vsel %vm2306, %v4359, %v4360
        %v4374 = vsel %vm2306, %v4357, %v4358
        %v4375 = vsel %vm2306, %v4356, %v4357
        %v4376 = vsel %vm2306, %v4354, %v4355
        %v4377 = vsel %vm2306, %v4353, %v4354
        %v4378 = vsel %vm2306, %v4351, %v4352
        %v4379 = vsel %vm2306, %v4350, %v4351
        %v4380 = vsel %vm2306, %v4348, %v4349
        %v4381 = vsel %vm2306, %v4347, %v4348
        %v4382 = vsel %vm2306, %v4345, %v4346
        %v4383 = vsel %vm2306, %v4344, %v4345
        %v4384 = vsel %vm2306, %v4342, %v4343
        %v4385 = vsel %vm2306, %v4341, %v4342
        %v4386 = vsel %vm2306, %v4339, %v4340
        %v4387 = vsel %vm2306, %v4338, %v4339
        %v4388 = vsel %vm2306, %v4336, %v4337
        %v4389 = vsel %vm2306, %v4335, %v4336
        %v4390 = vsel %vm2306, %v4333, %v4334
        %v4391 = vsel %vm2306, %v4332, %v4333
        %v4392 = vsel %vm2306, %v4330, %v4331
        %v4393 = vsel %vm2306, %v4329, %v4330
        %v4394 = vsel %vm2306, %v4327, %v4328
        %v4395 = vsel %vm2306, %v4326, %v4327
        %v4396 = vsel %vm2306, %v4324, %v4325
        %v4397 = vsel %vm2306, %v4323, %v4324
        %v4398 = vsel %vm2306, %v4321, %v4322
        %v4399 = vsel %vm2306, %v4320, %v4321
        %v4400 = vadd.f32 %v4288, %v4399
        %v4401 = vadd.f32 %v4289, %v4398
        %v4402 = vadd.f32 %v4290, %v4397
        %v4403 = vadd.f32 %v4291, %v4396
        %v4404 = vadd.f32 %v4292, %v4395
        %v4405 = vadd.f32 %v4293, %v4394
        %v4406 = vadd.f32 %v4294, %v4393
        %v4407 = vadd.f32 %v4295, %v4392
        %v4408 = vadd.f32 %v4296, %v4391
        %v4409 = vadd.f32 %v4297, %v4390
        %v4410 = vadd.f32 %v4298, %v4389
        %v4411 = vadd.f32 %v4299, %v4388
        %v4412 = vadd.f32 %v4300, %v4387
        %v4413 = vadd.f32 %v4301, %v4386
        %v4414 = vadd.f32 %v4302, %v4385
        %v4415 = vadd.f32 %v4303, %v4384
        %v4416 = vadd.f32 %v4304, %v4383
        %v4417 = vadd.f32 %v4305, %v4382
        %v4418 = vadd.f32 %v4306, %v4381
        %v4419 = vadd.f32 %v4307, %v4380
        %v4420 = vadd.f32 %v4308, %v4379
        %v4421 = vadd.f32 %v4309, %v4378
        %v4422 = vadd.f32 %v4310, %v4377
        %v4423 = vadd.f32 %v4311, %v4376
        %v4424 = vadd.f32 %v4312, %v4375
        %v4425 = vadd.f32 %v4313, %v4374
        %v4426 = vadd.f32 %v4314, %v4373
        %v4427 = vadd.f32 %v4315, %v4372
        %v4428 = vadd.f32 %v4316, %v4371
        %v4429 = vadd.f32 %v4317, %v4370
        %v4430 = vadd.f32 %v4318, %v4369
        %v4431 = vadd.f32 %v4319, %v4368
        %v4432 = vld [vmem:[%s4] sm:$0x1]
        %v4434 = vlaneseq
        %v4435 = vshrl.u32 %v4434, 7
        %v4436 = vsub.s32 0, %v4435
        %v4437 = vrot.slane %v4432, %v4436
        %v4439 = vadd.f32 %v4400, %v4437
        %v4440 = vadd.f32 %v4401, %v4437
        %v4441 = vadd.f32 %v4402, %v4437
        %v4442 = vadd.f32 %v4403, %v4437
        %v4443 = vadd.f32 %v4404, %v4437
        %v4444 = vadd.f32 %v4405, %v4437
        %v4445 = vadd.f32 %v4406, %v4437
        %v4446 = vadd.f32 %v4407, %v4437
        %v4447 = vadd.f32 %v4408, %v4437
        %v4448 = vadd.f32 %v4409, %v4437
        %v4449 = vadd.f32 %v4410, %v4437
        %v4450 = vadd.f32 %v4411, %v4437
        %v4451 = vadd.f32 %v4412, %v4437
        %v4452 = vadd.f32 %v4413, %v4437
        %v4453 = vadd.f32 %v4414, %v4437
        %v4454 = vadd.f32 %v4415, %v4437
        %v4455 = vadd.f32 %v4416, %v4437
        %v4456 = vadd.f32 %v4417, %v4437
        %v4457 = vadd.f32 %v4418, %v4437
        %v4458 = vadd.f32 %v4419, %v4437
        %v4459 = vadd.f32 %v4420, %v4437
        %v4460 = vadd.f32 %v4421, %v4437
        %v4461 = vadd.f32 %v4422, %v4437
        %v4462 = vadd.f32 %v4423, %v4437
        %v4463 = vadd.f32 %v4424, %v4437
        %v4464 = vadd.f32 %v4425, %v4437
        %v4465 = vadd.f32 %v4426, %v4437
        %v4466 = vadd.f32 %v4427, %v4437
        %v4467 = vadd.f32 %v4428, %v4437
        %v4468 = vadd.f32 %v4429, %v4437
        %v4469 = vadd.f32 %v4430, %v4437
        %v4470 = vadd.f32 %v4431, %v4437
        %v4471 = vld [vmem:[%s237] sm:$0xff]
        %v4472 = vld [vmem:[%s237 + $0x8] sm:$0xff]
        %v4473 = vld [vmem:[%s237 + $0x10] sm:$0xff]
        %v4474 = vld [vmem:[%s237 + $0x18] sm:$0xff]
        %v4475 = vld [vmem:[%s237 + $0x20] sm:$0xff]
        %v4476 = vld [vmem:[%s237 + $0x28] sm:$0xff]
        %v4477 = vld [vmem:[%s237 + $0x30] sm:$0xff]
        %v4478 = vld [vmem:[%s237 + $0x38] sm:$0xff]
        %v4479 = vld [vmem:[%s237 + $0x40] sm:$0xff]
        %v4480 = vld [vmem:[%s237 + $0x48] sm:$0xff]
        %v4481 = vld [vmem:[%s237 + $0x50] sm:$0xff]
        %v4482 = vld [vmem:[%s237 + $0x58] sm:$0xff]
        %v4483 = vld [vmem:[%s237 + $0x60] sm:$0xff]
        %v4484 = vld [vmem:[%s237 + $0x68] sm:$0xff]
        %v4485 = vld [vmem:[%s237 + $0x70] sm:$0xff]
        %v4486 = vld [vmem:[%s237 + $0x78] sm:$0xff]
        %v4487 = vld [vmem:[%s237 + $0x80] sm:$0xff]
        %v4488 = vld [vmem:[%s237 + $0x88] sm:$0xff]
        %v4489 = vld [vmem:[%s237 + $0x90] sm:$0xff]
        %v4490 = vld [vmem:[%s237 + $0x98] sm:$0xff]
        %v4491 = vld [vmem:[%s237 + $0xa0] sm:$0xff]
        %v4492 = vld [vmem:[%s237 + $0xa8] sm:$0xff]
        %v4493 = vld [vmem:[%s237 + $0xb0] sm:$0xff]
        %v4494 = vld [vmem:[%s237 + $0xb8] sm:$0xff]
        %v4495 = vld [vmem:[%s237 + $0xc0] sm:$0xff]
        %v4496 = vld [vmem:[%s237 + $0xc8] sm:$0xff]
        %v4497 = vld [vmem:[%s237 + $0xd0] sm:$0xff]
        %v4498 = vld [vmem:[%s237 + $0xd8] sm:$0xff]
        %v4499 = vld [vmem:[%s237 + $0xe0] sm:$0xff]
        %v4500 = vld [vmem:[%s237 + $0xe8] sm:$0xff]
        %v4501 = vld [vmem:[%s237 + $0xf0] sm:$0xff]
        %v4502 = vld [vmem:[%s237 + $0xf8] sm:$0xff]
        %v4503 = vadd.f32 %v4439, %v4471
        %v4504 = vadd.f32 %v4440, %v4472
        %v4505 = vadd.f32 %v4441, %v4473
        %v4506 = vadd.f32 %v4442, %v4474
        %v4507 = vadd.f32 %v4443, %v4475
        %v4508 = vadd.f32 %v4444, %v4476
        %v4509 = vadd.f32 %v4445, %v4477
        %v4510 = vadd.f32 %v4446, %v4478
        %v4511 = vadd.f32 %v4447, %v4479
        %v4512 = vadd.f32 %v4448, %v4480
        %v4513 = vadd.f32 %v4449, %v4481
        %v4514 = vadd.f32 %v4450, %v4482
        %v4515 = vadd.f32 %v4451, %v4483
        %v4516 = vadd.f32 %v4452, %v4484
        %v4517 = vadd.f32 %v4453, %v4485
        %v4518 = vadd.f32 %v4454, %v4486
        %v4519 = vadd.f32 %v4455, %v4487
        %v4520 = vadd.f32 %v4456, %v4488
        %v4521 = vadd.f32 %v4457, %v4489
        %v4522 = vadd.f32 %v4458, %v4490
        %v4523 = vadd.f32 %v4459, %v4491
        %v4524 = vadd.f32 %v4460, %v4492
        %v4525 = vadd.f32 %v4461, %v4493
        %v4526 = vadd.f32 %v4462, %v4494
        %v4527 = vadd.f32 %v4463, %v4495
        %v4528 = vadd.f32 %v4464, %v4496
        %v4529 = vadd.f32 %v4465, %v4497
        %v4530 = vadd.f32 %v4466, %v4498
        %v4531 = vadd.f32 %v4467, %v4499
        %v4532 = vadd.f32 %v4468, %v4500
        %v4533 = vadd.f32 %v4469, %v4501
        %v4534 = vadd.f32 %v4470, %v4502
        %v4535 = vmax.f32 %v4503, 0.0
        %v4536 = vmax.f32 %v4504, 0.0
        %v4537 = vmax.f32 %v4505, 0.0
        %v4538 = vmax.f32 %v4506, 0.0
        %v4539 = vmax.f32 %v4507, 0.0
        %v4540 = vmax.f32 %v4508, 0.0
        %v4541 = vmax.f32 %v4509, 0.0
        %v4542 = vmax.f32 %v4510, 0.0
        %v4543 = vmax.f32 %v4511, 0.0
        %v4544 = vmax.f32 %v4512, 0.0
        %v4545 = vmax.f32 %v4513, 0.0
        %v4546 = vmax.f32 %v4514, 0.0
        %v4547 = vmax.f32 %v4515, 0.0
        %v4548 = vmax.f32 %v4516, 0.0
        %v4549 = vmax.f32 %v4517, 0.0
        %v4550 = vmax.f32 %v4518, 0.0
        %v4551 = vmax.f32 %v4519, 0.0
        %v4552 = vmax.f32 %v4520, 0.0
        %v4553 = vmax.f32 %v4521, 0.0
        %v4554 = vmax.f32 %v4522, 0.0
        %v4555 = vmax.f32 %v4523, 0.0
        %v4556 = vmax.f32 %v4524, 0.0
        %v4557 = vmax.f32 %v4525, 0.0
        %v4558 = vmax.f32 %v4526, 0.0
        %v4559 = vmax.f32 %v4527, 0.0
        %v4560 = vmax.f32 %v4528, 0.0
        %v4561 = vmax.f32 %v4529, 0.0
        %v4562 = vmax.f32 %v4530, 0.0
        %v4563 = vmax.f32 %v4531, 0.0
        %v4564 = vmax.f32 %v4532, 0.0
        %v4565 = vmax.f32 %v4533, 0.0
        %v4566 = vmax.f32 %v4534, 0.0
        %4567 = vst [vmem:[%s271] sm:$0xff] %v4535
        %4568 = vst [vmem:[%s271 + $0x8] sm:$0xff] %v4536
        %4569 = vst [vmem:[%s271 + $0x10] sm:$0xff] %v4537
        %4570 = vst [vmem:[%s271 + $0x18] sm:$0xff] %v4538
        %4571 = vst [vmem:[%s271 + $0x20] sm:$0xff] %v4539
        %4572 = vst [vmem:[%s271 + $0x28] sm:$0xff] %v4540
        %4573 = vst [vmem:[%s271 + $0x30] sm:$0xff] %v4541
        %4574 = vst [vmem:[%s271 + $0x38] sm:$0xff] %v4542
        %4575 = vst [vmem:[%s271 + $0x40] sm:$0xff] %v4543
        %4576 = vst [vmem:[%s271 + $0x48] sm:$0xff] %v4544
        %4577 = vst [vmem:[%s271 + $0x50] sm:$0xff] %v4545
        %4578 = vst [vmem:[%s271 + $0x58] sm:$0xff] %v4546
        %4579 = vst [vmem:[%s271 + $0x60] sm:$0xff] %v4547
        %4580 = vst [vmem:[%s271 + $0x68] sm:$0xff] %v4548
        %4581 = vst [vmem:[%s271 + $0x70] sm:$0xff] %v4549
        %4582 = vst [vmem:[%s271 + $0x78] sm:$0xff] %v4550
        %4583 = vst [vmem:[%s271 + $0x80] sm:$0xff] %v4551
        %4584 = vst [vmem:[%s271 + $0x88] sm:$0xff] %v4552
        %4585 = vst [vmem:[%s271 + $0x90] sm:$0xff] %v4553
        %4586 = vst [vmem:[%s271 + $0x98] sm:$0xff] %v4554
        %4587 = vst [vmem:[%s271 + $0xa0] sm:$0xff] %v4555
        %4588 = vst [vmem:[%s271 + $0xa8] sm:$0xff] %v4556
        %4589 = vst [vmem:[%s271 + $0xb0] sm:$0xff] %v4557
        %4590 = vst [vmem:[%s271 + $0xb8] sm:$0xff] %v4558
        %4591 = vst [vmem:[%s271 + $0xc0] sm:$0xff] %v4559
        %4592 = vst [vmem:[%s271 + $0xc8] sm:$0xff] %v4560
        %4593 = vst [vmem:[%s271 + $0xd0] sm:$0xff] %v4561
        %4594 = vst [vmem:[%s271 + $0xd8] sm:$0xff] %v4562
        %4595 = vst [vmem:[%s271 + $0xe0] sm:$0xff] %v4563
        %4596 = vst [vmem:[%s271 + $0xe8] sm:$0xff] %v4564
        %4597 = vst [vmem:[%s271 + $0xf0] sm:$0xff] %v4565
        %4598 = vst [vmem:[%s271 + $0xf8] sm:$0xff] %v4566
        %s4599 = sand.u32 %s141, 1
        %s4600 = scalar_lea.sflag [#allocation6], %s4599
        %s4601 = sand.u32 %s141, 1
        %s4602 = smul.addr %s4601, 256
        %s4603 = scalar_lea.vmem [#allocation10], %s4602
        // Predicated region
        $region53: #{tpu_custom_call.1} parent=39 // pred_check
          %p4604 = pneg %p151
        $region54: #{tpu_custom_call.1} parent=39 // pred_check_branch
          %4606 = sbr.rel (%p4604) target = $region56
        $region55: #{tpu_custom_call.1} parent=39 // pred_region
          %s4608 = ssub.s32 4096, 4096
          %4609 = vsyncadd %s4600, %s4608
          %s4610 = smul.addr %s23, 32
          %s4611 = smul.addr %s4610, 128
          %s4612 = scalar_lea.hbm %s5, %s4611
          %s4613 = sshll.u32 %s4603, 4
          %s4614 = int_to_ptr.vmem [resolvable:$true] %s4613
          %4619 = dma.vmem_to_hbm [thread:$0]  %s4614, 4096, %s4612, %s4600, 128, 128, 8
        $region56: #{tpu_custom_call.1} parent=39 // pred_fallthru
          _
      $region40: #{tpu_custom_call.1} parent=5 // pred_fallthru
        _
      %p4620 = scmp.le.s32.totalorder 2, %s18
      // Predicated region
      $region57: #{tpu_custom_call.1} parent=5 // pred_check
        %p4621 = pneg %p4620
      $region58: #{tpu_custom_call.1} parent=5 // pred_check_branch
        %4623 = sbr.rel (%p4621) target = $region60
      $region59: #{tpu_custom_call.1} parent=5 // pred_region
        %s4624 = ssub.s32 %s18, 2
        // Predicated region
        $region61: #{tpu_custom_call.1} parent=59 // pred_check
          %p4625 = pneg %p157
        $region62: #{tpu_custom_call.1} parent=59 // pred_check_branch
          %4627 = sbr.rel (%p4625) target = $region64
        $region63: #{tpu_custom_call.1} parent=59 // pred_region
          %s4628 = sand.u32 %s142, 1
          %s4629 = scalar_lea.sflag [#allocation6], %s4628
          %s4630 = sand.u32 %s142, 1
          %s4631 = smul.addr %s4630, 256
          %s4632 = scalar_lea.vmem [#allocation10], %s4631
          %4633 = dma.done %s4629, 4096
        $region64: #{tpu_custom_call.1} parent=59 // pred_fallthru
          _
      $region60: #{tpu_custom_call.1} parent=5 // pred_fallthru
        _
    $region6: #{tpu_custom_call.1} parent=1 // loop_footer
      %s22 = sadd.s32 1, %s18
    $region7: #{tpu_custom_call.1} parent=1 // loop_footer_branch
      %17 = sbr.rel target = $region3
    $region8: #{tpu_custom_call.1} parent=1 // loop_exit
      _
    %4634 = vsyncpa [#allocation5], 1
    %s4635 = scalar_lea.sflag [#allocation5], 1
    %4636 = vsyncpa %s4635, 1
    %4637 = vsyncpa [#allocation8], 1
    %4638 = vsyncpa [#allocation6], 1
    %s4639 = scalar_lea.sflag [#allocation6], 1
    %4640 = vsyncpa %s4639, 1

</llo_original>
